<compile_context>
chip_gen: v5e
topology: v5e:2x2
jax: 0.10.0
libtpu: 0.0.40
codegen_flags: <defaults>
</compile_context>

<pallas_src>
import jax
import jax.numpy as jnp
from jax import lax
from jax.experimental import pallas as pl
from jax.experimental.pallas import tpu as pltpu

S = 8            # sequence length (stand-in for truncation max_length=450)
D = 128          # hidden size
F = 256          # FFN intermediate size
V = 256          # vocab size
NUM_LAYERS = 2
MASK_TOKEN_ID = 7
EPS = 1e-5


def _layernorm(x, g, b):
    mu = jnp.mean(x, axis=-1, keepdims=True)
    var = jnp.mean((x - mu) ** 2, axis=-1, keepdims=True)
    return (x - mu) * lax.rsqrt(var + EPS) * g + b


def _bf16(x):
    return x.astype(jnp.bfloat16)


# ------------------------- fused encoder + MLM-head kernel -------------------------
def fused_llm_kernel(ids_ref, mask_idx_ref,                      # scalar prefetch (SMEM)
                     word_emb, pos_emb,                          # embeddings
                     wq, bq, wk, bk, wv, bv, wo, bo,             # per-layer attention
                     ln1_g, ln1_b, ln2_g, ln2_b,                 # per-layer layernorms
                     w1, b1, w2, b2,                             # per-layer FFN
                     fln_g, fln_b, wd, bd, hln_g, hln_b,         # MLM head
                     wdec, bdec,
                     o_ref, x_scratch):
    l = pl.program_id(0)

    # ---- embedding gather + positional add (first grid step only) ----
    @pl.when(l == 0)
    def _():
        for i in range(S):                                       # S=8, fully unrolled
            tok = ids_ref[i]
            row = word_emb[pl.ds(tok, 1), :]                     # (1, D) word embedding
            x_scratch[pl.ds(i, 1), :] = row + pos_emb[pl.ds(i, 1), :]

    x = x_scratch[...]                                           # (S, D) f32, resident

    # ---- self-attention (pre-LN, single head; 1/sqrt(D) folded into wq) ----
    # TODO(synk): no padding/attention mask — demo inputs have no pad tokens.
    h = _bf16(_layernorm(x, ln1_g[0], ln1_b[0]))
    q = jnp.dot(h, wq[0], preferred_element_type=jnp.float32) + bq[0]
    k = jnp.dot(h, wk[0], preferred_element_type=jnp.float32) + bk[0]
    v = jnp.dot(h, wv[0], preferred_element_type=jnp.float32) + bv[0]
    scores = lax.dot_general(_bf16(q), _bf16(k),
                             dimension_numbers=(((1,), (1,)), ((), ())),
                             preferred_element_type=jnp.float32)  # (S, S), no transpose
    scores = scores - jnp.max(scores, axis=-1, keepdims=True)
    p = jnp.exp(scores)
    p = p * pl.reciprocal(jnp.sum(p, axis=-1, keepdims=True), approx=True)
    attn = jnp.dot(_bf16(p), _bf16(v), preferred_element_type=jnp.float32)
    attn = jnp.dot(_bf16(attn), wo[0], preferred_element_type=jnp.float32) + bo[0]
    x = x + attn

    # ---- FFN (pre-LN) ----
    h2 = _bf16(_layernorm(x, ln2_g[0], ln2_b[0]))
    f = jnp.dot(h2, w1[0], preferred_element_type=jnp.float32) + b1[0]
    f = jax.nn.gelu(f, approximate=True)
    f = jnp.dot(_bf16(f), w2[0], preferred_element_type=jnp.float32) + b2[0]
    x_scratch[...] = x + f                                       # carry to next layer

    # ---- MLM head on the [MASK] row (last grid step only) ----
    @pl.when(l == pl.num_programs(0) - 1)
    def _():
        idx = mask_idx_ref[0]
        row = x_scratch[pl.ds(idx, 1), :]                        # (1, D) hidden at [MASK]
        hh = _layernorm(row, fln_g[...], fln_b[...])
        hh = jnp.dot(_bf16(hh), wd[...], preferred_element_type=jnp.float32) + bd[...]
        hh = jax.nn.gelu(hh, approximate=True)
        hh = _layernorm(hh, hln_g[...], hln_b[...])
        o_ref[...] = jnp.dot(_bf16(hh), wdec[...],
                             preferred_element_type=jnp.float32) + bdec[...]


# --------------------------------- parameters -----------------------------------
def init_params(key):
    keys = iter(jax.random.split(key, 16))

    def dense(shape, scale=0.02, dtype=jnp.bfloat16):
        return (scale * jax.random.normal(next(keys), shape, jnp.float32)).astype(dtype)

    L = NUM_LAYERS
    zeros = lambda shp: jnp.zeros(shp, jnp.float32)
    ones = lambda shp: jnp.ones(shp, jnp.float32)

    layers = (
        dense((L, D, D), scale=0.02 / (D ** 0.5)),   # wq  (attention 1/sqrt(D) folded in)
        zeros((L, 1, D)),                            # bq  (scale folded; zero anyway)
        dense((L, D, D)), zeros((L, 1, D)),          # wk, bk
        dense((L, D, D)), zeros((L, 1, D)),          # wv, bv
        dense((L, D, D)), zeros((L, 1, D)),          # wo, bo
        ones((L, 1, D)), zeros((L, 1, D)),           # ln1 gamma / beta
        ones((L, 1, D)), zeros((L, 1, D)),           # ln2 gamma / beta
        dense((L, D, F)), zeros((L, 1, F)),          # ffn w1, b1
        dense((L, F, D)), zeros((L, 1, D)),          # ffn w2, b2
    )
    head = (
        ones((1, D)), zeros((1, D)),                 # final LN
        dense((D, D)), zeros((1, D)),                # head dense
        ones((1, D)), zeros((1, D)),                 # head LN
        dense((D, V)), zeros((1, V)),                # decoder
    )
    return {
        'word_emb': dense((V, D), dtype=jnp.float32),
        'pos_emb': dense((S, D), dtype=jnp.float32),
        'layers': layers,
        'head': head,
    }


# ----------------------------------- forward ------------------------------------
@jax.jit
def llm_forward(params, input_ids):
    # TODO(synk): HF AutoTokenizer (string -> ids) has no Pallas equivalent; the
    # caller supplies int32 token ids directly (one of which is MASK_TOKEN_ID).
    input_ids = input_ids.astype(jnp.int32)
    # first occurrence of [MASK] == `list(input_ids).index(mask_token_id)` in the ref
    mask_idx = jnp.argmax(input_ids == MASK_TOKEN_ID).astype(jnp.int32)[None]

    def cmap(nd):                                    # constant block (loaded once)
        return lambda l, ids, mi: (0,) * nd

    def lmap(nd):                                    # layer-indexed stacked block
        return lambda l, ids, mi: (l,) + (0,) * (nd - 1)

    layer_block_shapes = [(D, D), (1, D), (D, D), (1, D), (D, D), (1, D), (D, D), (1, D),
                          (1, D), (1, D), (1, D), (1, D),
                          (D, F), (1, F), (F, D), (1, D)]
    head_block_shapes = [(1, D), (1, D), (D, D), (1, D), (1, D), (1, D), (D, V), (1, V)]

    in_specs = ([pl.BlockSpec((V, D), cmap(2)),                      # word_emb
                 pl.BlockSpec((S, D), cmap(2))]                      # pos_emb
                + [pl.BlockSpec((1,) + s, lmap(3)) for s in layer_block_shapes]
                + [pl.BlockSpec(s, cmap(2)) for s in head_block_shapes])

    logits = pl.pallas_call(
        fused_llm_kernel,
        out_shape=jax.ShapeDtypeStruct((1, V), jnp.float32),
        grid_spec=pltpu.PrefetchScalarGridSpec(
            num_scalar_prefetch=2,
            grid=(NUM_LAYERS,),
            in_specs=in_specs,
            out_specs=pl.BlockSpec((1, V), cmap(2)),
            scratch_shapes=[pltpu.VMEM((S, D), jnp.float32)]),
        compiler_params=pltpu.CompilerParams(
            dimension_semantics=("arbitrary",)),      # layer axis carries a dependency
    )(input_ids, mask_idx,
      params['word_emb'], params['pos_emb'],
      *params['layers'], *params['head'])
    return logits[0]                                               # (V,)


if __name__ == "__main__":
    key = jax.random.PRNGKey(0)
    pkey, ikey = jax.random.split(key)
    params = init_params(pkey)

    # Draw ids from [MASK_TOKEN_ID + 1, V) so the planted [MASK] at position 3 is
    # the unique occurrence (mirrors `.index(mask_token)` semantics unambiguously).
    input_ids = jax.random.randint(ikey, (S,), MASK_TOKEN_ID + 1, V, dtype=jnp.int32)
    input_ids = input_ids.at[3].set(MASK_TOKEN_ID)

    out = llm_forward(params, input_ids)
    jax.block_until_ready(out)
    assert out.shape == (V,) and out.dtype == jnp.float32
    assert bool(jnp.all(jnp.isfinite(out)))
    print("KERNEL_OK")
</pallas_src>

<mosaic_0001>
module attributes {stable_mosaic.version = 11 : i64} {
  func.func @fused_llm_kernel(%arg0: i32, %arg1: memref<8xi32, #tpu.memory_space<smem>>, %arg2: memref<1xi32, #tpu.memory_space<smem>>, %arg3: memref<256x128xf32, #tpu.memory_space<vmem>>, %arg4: memref<8x128xf32, #tpu.memory_space<vmem>>, %arg5: memref<1x128x128xbf16, #tpu.memory_space<vmem>>, %arg6: memref<1x1x128xf32, #tpu.memory_space<vmem>>, %arg7: memref<1x128x128xbf16, #tpu.memory_space<vmem>>, %arg8: memref<1x1x128xf32, #tpu.memory_space<vmem>>, %arg9: memref<1x128x128xbf16, #tpu.memory_space<vmem>>, %arg10: memref<1x1x128xf32, #tpu.memory_space<vmem>>, %arg11: memref<1x128x128xbf16, #tpu.memory_space<vmem>>, %arg12: memref<1x1x128xf32, #tpu.memory_space<vmem>>, %arg13: memref<1x1x128xf32, #tpu.memory_space<vmem>>, %arg14: memref<1x1x128xf32, #tpu.memory_space<vmem>>, %arg15: memref<1x1x128xf32, #tpu.memory_space<vmem>>, %arg16: memref<1x1x128xf32, #tpu.memory_space<vmem>>, %arg17: memref<1x128x256xbf16, #tpu.memory_space<vmem>>, %arg18: memref<1x1x256xf32, #tpu.memory_space<vmem>>, %arg19: memref<1x256x128xbf16, #tpu.memory_space<vmem>>, %arg20: memref<1x1x128xf32, #tpu.memory_space<vmem>>, %arg21: memref<1x128xf32, #tpu.memory_space<vmem>>, %arg22: memref<1x128xf32, #tpu.memory_space<vmem>>, %arg23: memref<128x128xbf16, #tpu.memory_space<vmem>>, %arg24: memref<1x128xf32, #tpu.memory_space<vmem>>, %arg25: memref<1x128xf32, #tpu.memory_space<vmem>>, %arg26: memref<1x128xf32, #tpu.memory_space<vmem>>, %arg27: memref<128x256xbf16, #tpu.memory_space<vmem>>, %arg28: memref<1x256xf32, #tpu.memory_space<vmem>>, %arg29: memref<1x256xf32, #tpu.memory_space<vmem>>, %arg30: memref<8x128xf32, #tpu.memory_space<vmem>>) attributes {dimension_semantics = [#tpu.dimension_semantics<arbitrary>], iteration_bounds = array<i64: 2>, scalar_prefetch = 2 : i64, scratch_operands = 1 : i64, tpu.core_type = #tpu.core_type<tc>, window_params = [{pipeline_mode = #tpu.pipeline_mode<synchronous>, transform_indices = @transform_0, window_bounds = array<i64: 256, 128>}, {pipeline_mode = #tpu.pipeline_mode<synchronous>, transform_indices = @transform_1, window_bounds = array<i64: 8, 128>}, {transform_indices = @transform_2, window_bounds = array<i64: 1, 128, 128>}, {transform_indices = @transform_3, window_bounds = array<i64: 1, 1, 128>}, {transform_indices = @transform_4, window_bounds = array<i64: 1, 128, 128>}, {transform_indices = @transform_5, window_bounds = array<i64: 1, 1, 128>}, {transform_indices = @transform_6, window_bounds = array<i64: 1, 128, 128>}, {transform_indices = @transform_7, window_bounds = array<i64: 1, 1, 128>}, {transform_indices = @transform_8, window_bounds = array<i64: 1, 128, 128>}, {transform_indices = @transform_9, window_bounds = array<i64: 1, 1, 128>}, {transform_indices = @transform_10, window_bounds = array<i64: 1, 1, 128>}, {transform_indices = @transform_11, window_bounds = array<i64: 1, 1, 128>}, {transform_indices = @transform_12, window_bounds = array<i64: 1, 1, 128>}, {transform_indices = @transform_13, window_bounds = array<i64: 1, 1, 128>}, {transform_indices = @transform_14, window_bounds = array<i64: 1, 128, 256>}, {transform_indices = @transform_15, window_bounds = array<i64: 1, 1, 256>}, {transform_indices = @transform_16, window_bounds = array<i64: 1, 256, 128>}, {transform_indices = @transform_17, window_bounds = array<i64: 1, 1, 128>}, {pipeline_mode = #tpu.pipeline_mode<synchronous>, transform_indices = @transform_18, window_bounds = array<i64: 1, 128>}, {pipeline_mode = #tpu.pipeline_mode<synchronous>, transform_indices = @transform_19, window_bounds = array<i64: 1, 128>}, {pipeline_mode = #tpu.pipeline_mode<synchronous>, transform_indices = @transform_20, window_bounds = array<i64: 128, 128>}, {pipeline_mode = #tpu.pipeline_mode<synchronous>, transform_indices = @transform_21, window_bounds = array<i64: 1, 128>}, {pipeline_mode = #tpu.pipeline_mode<synchronous>, transform_indices = @transform_22, window_bounds = array<i64: 1, 128>}, {pipeline_mode = #tpu.pipeline_mode<synchronous>, transform_indices = @transform_23, window_bounds = array<i64: 1, 128>}, {pipeline_mode = #tpu.pipeline_mode<synchronous>, transform_indices = @transform_24, window_bounds = array<i64: 128, 256>}, {pipeline_mode = #tpu.pipeline_mode<synchronous>, transform_indices = @transform_25, window_bounds = array<i64: 1, 256>}, {pipeline_mode = #tpu.pipeline_mode<synchronous>, transform_indices = @transform_26, window_bounds = array<i64: 1, 256>}]} {
    %c0_i32 = arith.constant 0 : i32
    %0 = arith.cmpi eq, %arg0, %c0_i32 : i32
    %1 = arith.extui %0 : i1 to i32
    %c0_i32_0 = arith.constant 0 : i32
    %2 = arith.cmpi ne, %1, %c0_i32_0 : i32
    scf.if %2 {
      %c0_76 = arith.constant 0 : index
      %137 = memref.load %arg1[%c0_76] : memref<8xi32, #tpu.memory_space<smem>>
      %138 = arith.index_cast %137 : i32 to index
      %c0_77 = arith.constant 0 : index
      %139 = vector.load %arg3[%138, %c0_77] : memref<256x128xf32, #tpu.memory_space<vmem>>, vector<1x128xf32>
      %c0_78 = arith.constant 0 : index
      %c0_79 = arith.constant 0 : index
      %140 = vector.load %arg4[%c0_78, %c0_79] : memref<8x128xf32, #tpu.memory_space<vmem>>, vector<1x128xf32>
      %141 = arith.addf %139, %140 : vector<1x128xf32>
      %c0_80 = arith.constant 0 : index
      %c0_81 = arith.constant 0 : index
      %142 = vector.load %arg30[%c0_80, %c0_81] : memref<8x128xf32, #tpu.memory_space<vmem>>, vector<1x128xf32>
      tpu.vector_store %arg30[%c0_80, %c0_81], %141 {strides = array<i32>} : memref<8x128xf32, #tpu.memory_space<vmem>>, vector<1x128xf32>,
      %c1 = arith.constant 1 : index
      %143 = memref.load %arg1[%c1] : memref<8xi32, #tpu.memory_space<smem>>
      %144 = arith.index_cast %143 : i32 to index
      %c0_82 = arith.constant 0 : index
      %145 = vector.load %arg3[%144, %c0_82] : memref<256x128xf32, #tpu.memory_space<vmem>>, vector<1x128xf32>
      %c1_83 = arith.constant 1 : index
      %c0_84 = arith.constant 0 : index
      %146 = vector.load %arg4[%c1_83, %c0_84] : memref<8x128xf32, #tpu.memory_space<vmem>>, vector<1x128xf32>
      %147 = arith.addf %145, %146 : vector<1x128xf32>
      %c1_85 = arith.constant 1 : index
      %c0_86 = arith.constant 0 : index
      %148 = vector.load %arg30[%c1_85, %c0_86] : memref<8x128xf32, #tpu.memory_space<vmem>>, vector<1x128xf32>
      tpu.vector_store %arg30[%c1_85, %c0_86], %147 {strides = array<i32>} : memref<8x128xf32, #tpu.memory_space<vmem>>, vector<1x128xf32>,
      %c2 = arith.constant 2 : index
      %149 = memref.load %arg1[%c2] : memref<8xi32, #tpu.memory_space<smem>>
      %150 = arith.index_cast %149 : i32 to index
      %c0_87 = arith.constant 0 : index
      %151 = vector.load %arg3[%150, %c0_87] : memref<256x128xf32, #tpu.memory_space<vmem>>, vector<1x128xf32>
      %c2_88 = arith.constant 2 : index
      %c0_89 = arith.constant 0 : index
      %152 = vector.load %arg4[%c2_88, %c0_89] : memref<8x128xf32, #tpu.memory_space<vmem>>, vector<1x128xf32>
      %153 = arith.addf %151, %152 : vector<1x128xf32>
      %c2_90 = arith.constant 2 : index
      %c0_91 = arith.constant 0 : index
      %154 = vector.load %arg30[%c2_90, %c0_91] : memref<8x128xf32, #tpu.memory_space<vmem>>, vector<1x128xf32>
      tpu.vector_store %arg30[%c2_90, %c0_91], %153 {strides = array<i32>} : memref<8x128xf32, #tpu.memory_space<vmem>>, vector<1x128xf32>,
      %c3 = arith.constant 3 : index
      %155 = memref.load %arg1[%c3] : memref<8xi32, #tpu.memory_space<smem>>
      %156 = arith.index_cast %155 : i32 to index
      %c0_92 = arith.constant 0 : index
      %157 = vector.load %arg3[%156, %c0_92] : memref<256x128xf32, #tpu.memory_space<vmem>>, vector<1x128xf32>
      %c3_93 = arith.constant 3 : index
      %c0_94 = arith.constant 0 : index
      %158 = vector.load %arg4[%c3_93, %c0_94] : memref<8x128xf32, #tpu.memory_space<vmem>>, vector<1x128xf32>
      %159 = arith.addf %157, %158 : vector<1x128xf32>
      %c3_95 = arith.constant 3 : index
      %c0_96 = arith.constant 0 : index
      %160 = vector.load %arg30[%c3_95, %c0_96] : memref<8x128xf32, #tpu.memory_space<vmem>>, vector<1x128xf32>
      tpu.vector_store %arg30[%c3_95, %c0_96], %159 {strides = array<i32>} : memref<8x128xf32, #tpu.memory_space<vmem>>, vector<1x128xf32>,
      %c4 = arith.constant 4 : index
      %161 = memref.load %arg1[%c4] : memref<8xi32, #tpu.memory_space<smem>>
      %162 = arith.index_cast %161 : i32 to index
      %c0_97 = arith.constant 0 : index
      %163 = vector.load %arg3[%162, %c0_97] : memref<256x128xf32, #tpu.memory_space<vmem>>, vector<1x128xf32>
      %c4_98 = arith.constant 4 : index
      %c0_99 = arith.constant 0 : index
      %164 = vector.load %arg4[%c4_98, %c0_99] : memref<8x128xf32, #tpu.memory_space<vmem>>, vector<1x128xf32>
      %165 = arith.addf %163, %164 : vector<1x128xf32>
      %c4_100 = arith.constant 4 : index
      %c0_101 = arith.constant 0 : index
      %166 = vector.load %arg30[%c4_100, %c0_101] : memref<8x128xf32, #tpu.memory_space<vmem>>, vector<1x128xf32>
      tpu.vector_store %arg30[%c4_100, %c0_101], %165 {strides = array<i32>} : memref<8x128xf32, #tpu.memory_space<vmem>>, vector<1x128xf32>,
      %c5 = arith.constant 5 : index
      %167 = memref.load %arg1[%c5] : memref<8xi32, #tpu.memory_space<smem>>
      %168 = arith.index_cast %167 : i32 to index
      %c0_102 = arith.constant 0 : index
      %169 = vector.load %arg3[%168, %c0_102] : memref<256x128xf32, #tpu.memory_space<vmem>>, vector<1x128xf32>
      %c5_103 = arith.constant 5 : index
      %c0_104 = arith.constant 0 : index
      %170 = vector.load %arg4[%c5_103, %c0_104] : memref<8x128xf32, #tpu.memory_space<vmem>>, vector<1x128xf32>
      %171 = arith.addf %169, %170 : vector<1x128xf32>
      %c5_105 = arith.constant 5 : index
      %c0_106 = arith.constant 0 : index
      %172 = vector.load %arg30[%c5_105, %c0_106] : memref<8x128xf32, #tpu.memory_space<vmem>>, vector<1x128xf32>
      tpu.vector_store %arg30[%c5_105, %c0_106], %171 {strides = array<i32>} : memref<8x128xf32, #tpu.memory_space<vmem>>, vector<1x128xf32>,
      %c6 = arith.constant 6 : index
      %173 = memref.load %arg1[%c6] : memref<8xi32, #tpu.memory_space<smem>>
      %174 = arith.index_cast %173 : i32 to index
      %c0_107 = arith.constant 0 : index
      %175 = vector.load %arg3[%174, %c0_107] : memref<256x128xf32, #tpu.memory_space<vmem>>, vector<1x128xf32>
      %c6_108 = arith.constant 6 : index
      %c0_109 = arith.constant 0 : index
      %176 = vector.load %arg4[%c6_108, %c0_109] : memref<8x128xf32, #tpu.memory_space<vmem>>, vector<1x128xf32>
      %177 = arith.addf %175, %176 : vector<1x128xf32>
      %c6_110 = arith.constant 6 : index
      %c0_111 = arith.constant 0 : index
      %178 = vector.load %arg30[%c6_110, %c0_111] : memref<8x128xf32, #tpu.memory_space<vmem>>, vector<1x128xf32>
      tpu.vector_store %arg30[%c6_110, %c0_111], %177 {strides = array<i32>} : memref<8x128xf32, #tpu.memory_space<vmem>>, vector<1x128xf32>,
      %c7 = arith.constant 7 : index
      %179 = memref.load %arg1[%c7] : memref<8xi32, #tpu.memory_space<smem>>
      %180 = arith.index_cast %179 : i32 to index
      %c0_112 = arith.constant 0 : index
      %181 = vector.load %arg3[%180, %c0_112] : memref<256x128xf32, #tpu.memory_space<vmem>>, vector<1x128xf32>
      %c7_113 = arith.constant 7 : index
      %c0_114 = arith.constant 0 : index
      %182 = vector.load %arg4[%c7_113, %c0_114] : memref<8x128xf32, #tpu.memory_space<vmem>>, vector<1x128xf32>
      %183 = arith.addf %181, %182 : vector<1x128xf32>
      %c7_115 = arith.constant 7 : index
      %c0_116 = arith.constant 0 : index
      %184 = vector.load %arg30[%c7_115, %c0_116] : memref<8x128xf32, #tpu.memory_space<vmem>>, vector<1x128xf32>
      tpu.vector_store %arg30[%c7_115, %c0_116], %183 {strides = array<i32>} : memref<8x128xf32, #tpu.memory_space<vmem>>, vector<1x128xf32>,
    } else {
    }
    %c0 = arith.constant 0 : index
    %c0_1 = arith.constant 0 : index
    %3 = vector.load %arg30[%c0, %c0_1] : memref<8x128xf32, #tpu.memory_space<vmem>>, vector<8x128xf32>
    %c0_2 = arith.constant 0 : index
    %c0_3 = arith.constant 0 : index
    %c0_4 = arith.constant 0 : index
    %4 = vector.load %arg13[%c0_2, %c0_3, %c0_4] : memref<1x1x128xf32, #tpu.memory_space<vmem>>, vector<1x1x128xf32>
    %5 = vector.shape_cast %4 : vector<1x1x128xf32> to vector<1x128xf32>
    %c0_5 = arith.constant 0 : index
    %c0_6 = arith.constant 0 : index
    %c0_7 = arith.constant 0 : index
    %6 = vector.load %arg14[%c0_5, %c0_6, %c0_7] : memref<1x1x128xf32, #tpu.memory_space<vmem>>, vector<1x1x128xf32>
    %7 = vector.shape_cast %6 : vector<1x1x128xf32> to vector<1x128xf32>
    %cst = arith.constant dense<0.000000e+00> : vector<8xf32>
    %8 = vector.multi_reduction <add>, %3, %cst [1] : vector<8x128xf32> to vector<8xf32>
    %9 = vector.shape_cast %8 : vector<8xf32> to vector<8x1xf32>
    %cst_8 = arith.constant 1.280000e+02 : f32
    %10 = vector.broadcast %cst_8 : f32 to vector<8x1xf32>
    %11 = arith.divf %9, %10 : vector<8x1xf32>
    %12 = vector.broadcast %11 : vector<8x1xf32> to vector<8x128xf32>
    %13 = arith.subf %3, %12 : vector<8x128xf32>
    %14 = arith.mulf %13, %13 : vector<8x128xf32>
    %cst_9 = arith.constant dense<0.000000e+00> : vector<8xf32>
    %15 = vector.multi_reduction <add>, %14, %cst_9 [1] : vector<8x128xf32> to vector<8xf32>
    %16 = vector.shape_cast %15 : vector<8xf32> to vector<8x1xf32>
    %cst_10 = arith.constant 1.280000e+02 : f32
    %17 = vector.broadcast %cst_10 : f32 to vector<8x1xf32>
    %18 = arith.divf %16, %17 : vector<8x1xf32>
    %19 = vector.broadcast %11 : vector<8x1xf32> to vector<8x128xf32>
    %20 = arith.subf %3, %19 : vector<8x128xf32>
    %cst_11 = arith.constant 9.99999974E-6 : f32
    %21 = vector.broadcast %cst_11 : f32 to vector<8x1xf32>
    %22 = arith.addf %18, %21 : vector<8x1xf32>
    %23 = math.rsqrt %22 : vector<8x1xf32>
    %24 = vector.broadcast %23 : vector<8x1xf32> to vector<8x128xf32>
    %25 = arith.mulf %20, %24 : vector<8x128xf32>
    %26 = vector.broadcast %5 : vector<1x128xf32> to vector<8x128xf32>
    %27 = arith.mulf %25, %26 : vector<8x128xf32>
    %28 = vector.broadcast %7 : vector<1x128xf32> to vector<8x128xf32>
    %29 = arith.addf %27, %28 : vector<8x128xf32>
    %30 = arith.truncf %29 : vector<8x128xf32> to vector<8x128xbf16>
    %c0_12 = arith.constant 0 : index
    %c0_13 = arith.constant 0 : index
    %c0_14 = arith.constant 0 : index
    %31 = vector.load %arg5[%c0_12, %c0_13, %c0_14] : memref<1x128x128xbf16, #tpu.memory_space<vmem>>, vector<1x128x128xbf16>
    %32 = vector.shape_cast %31 : vector<1x128x128xbf16> to vector<128x128xbf16>
    %cst_15 = arith.constant dense<0.000000e+00> : vector<8x128xf32>
    %33 = tpu.matmul %30, %32, %cst_15 {dimension_numbers = #tpu.dot_dimension_numbers<[1], [0], [0], [1], [0, 0, 1, 1], [], []>} : vector<8x128xbf16>, vector<128x128xbf16>, vector<8x128xf32> -> vector<8x128xf32>
    %c0_16 = arith.constant 0 : index
    %c0_17 = arith.constant 0 : index
    %c0_18 = arith.constant 0 : index
    %34 = vector.load %arg6[%c0_16, %c0_17, %c0_18] : memref<1x1x128xf32, #tpu.memory_space<vmem>>, vector<1x1x128xf32>
    %35 = vector.shape_cast %34 : vector<1x1x128xf32> to vector<1x128xf32>
    %36 = vector.broadcast %35 : vector<1x128xf32> to vector<8x128xf32>
    %37 = arith.addf %33, %36 : vector<8x128xf32>
    %c0_19 = arith.constant 0 : index
    %c0_20 = arith.constant 0 : index
    %c0_21 = arith.constant 0 : index
    %38 = vector.load %arg7[%c0_19, %c0_20, %c0_21] : memref<1x128x128xbf16, #tpu.memory_space<vmem>>, vector<1x128x128xbf16>
    %39 = vector.shape_cast %38 : vector<1x128x128xbf16> to vector<128x128xbf16>
    %cst_22 = arith.constant dense<0.000000e+00> : vector<8x128xf32>
    %40 = tpu.matmul %30, %39, %cst_22 {dimension_numbers = #tpu.dot_dimension_numbers<[1], [0], [0], [1], [0, 0, 1, 1], [], []>} : vector<8x128xbf16>, vector<128x128xbf16>, vector<8x128xf32> -> vector<8x128xf32>
    %c0_23 = arith.constant 0 : index
    %c0_24 = arith.constant 0 : index
    %c0_25 = arith.constant 0 : index
    %41 = vector.load %arg8[%c0_23, %c0_24, %c0_25] : memref<1x1x128xf32, #tpu.memory_space<vmem>>, vector<1x1x128xf32>
    %42 = vector.shape_cast %41 : vector<1x1x128xf32> to vector<1x128xf32>
    %43 = vector.broadcast %42 : vector<1x128xf32> to vector<8x128xf32>
    %44 = arith.addf %40, %43 : vector<8x128xf32>
    %c0_26 = arith.constant 0 : index
    %c0_27 = arith.constant 0 : index
    %c0_28 = arith.constant 0 : index
    %45 = vector.load %arg9[%c0_26, %c0_27, %c0_28] : memref<1x128x128xbf16, #tpu.memory_space<vmem>>, vector<1x128x128xbf16>
    %46 = vector.shape_cast %45 : vector<1x128x128xbf16> to vector<128x128xbf16>
    %cst_29 = arith.constant dense<0.000000e+00> : vector<8x128xf32>
    %47 = tpu.matmul %30, %46, %cst_29 {dimension_numbers = #tpu.dot_dimension_numbers<[1], [0], [0], [1], [0, 0, 1, 1], [], []>} : vector<8x128xbf16>, vector<128x128xbf16>, vector<8x128xf32> -> vector<8x128xf32>
    %c0_30 = arith.constant 0 : index
    %c0_31 = arith.constant 0 : index
    %c0_32 = arith.constant 0 : index
    %48 = vector.load %arg10[%c0_30, %c0_31, %c0_32] : memref<1x1x128xf32, #tpu.memory_space<vmem>>, vector<1x1x128xf32>
    %49 = vector.shape_cast %48 : vector<1x1x128xf32> to vector<1x128xf32>
    %50 = vector.broadcast %49 : vector<1x128xf32> to vector<8x128xf32>
    %51 = arith.addf %47, %50 : vector<8x128xf32>
    %52 = arith.truncf %37 : vector<8x128xf32> to vector<8x128xbf16>
    %53 = arith.truncf %44 : vector<8x128xf32> to vector<8x128xbf16>
    %cst_33 = arith.constant dense<0.000000e+00> : vector<8x8xf32>
    %54 = tpu.matmul %52, %53, %cst_33 {dimension_numbers = #tpu.dot_dimension_numbers<[1], [1], [0], [0], [0, 0, 1, 0], [], []>} : vector<8x128xbf16>, vector<8x128xbf16>, vector<8x8xf32> -> vector<8x8xf32>
    %cst_34 = arith.constant dense<0xFF800000> : vector<8xf32>
    %55 = vector.multi_reduction <maximumf>, %54, %cst_34 [1] : vector<8x8xf32> to vector<8xf32>
    %56 = vector.shape_cast %55 : vector<8xf32> to vector<8x1xf32>
    %57 = vector.broadcast %56 : vector<8x1xf32> to vector<8x8xf32>
    %58 = arith.subf %54, %57 : vector<8x8xf32>
    %59 = math.exp %58 : vector<8x8xf32>
    %cst_35 = arith.constant dense<0.000000e+00> : vector<8xf32>
    %60 = vector.multi_reduction <add>, %59, %cst_35 [1] : vector<8x8xf32> to vector<8xf32>
    %61 = vector.shape_cast %60 : vector<8xf32> to vector<8x1xf32>
    %62 = tpu.reciprocal %61 {approx = true} : vector<8x1xf32> -> vector<8x1xf32>
    %63 = vector.broadcast %62 : vector<8x1xf32> to vector<8x8xf32>
    %64 = arith.mulf %59, %63 : vector<8x8xf32>
    %65 = arith.truncf %64 : vector<8x8xf32> to vector<8x8xbf16>
    %66 = arith.truncf %51 : vector<8x128xf32> to vector<8x128xbf16>
    %cst_36 = arith.constant dense<0.000000e+00> : vector<8x128xf32>
    %67 = tpu.matmul %65, %66, %cst_36 {dimension_numbers = #tpu.dot_dimension_numbers<[1], [0], [0], [1], [0, 0, 1, 1], [], []>} : vector<8x8xbf16>, vector<8x128xbf16>, vector<8x128xf32> -> vector<8x128xf32>
    %68 = arith.truncf %67 : vector<8x128xf32> to vector<8x128xbf16>
    %c0_37 = arith.constant 0 : index
    %c0_38 = arith.constant 0 : index
    %c0_39 = arith.constant 0 : index
    %69 = vector.load %arg11[%c0_37, %c0_38, %c0_39] : memref<1x128x128xbf16, #tpu.memory_space<vmem>>, vector<1x128x128xbf16>
    %70 = vector.shape_cast %69 : vector<1x128x128xbf16> to vector<128x128xbf16>
    %cst_40 = arith.constant dense<0.000000e+00> : vector<8x128xf32>
    %71 = tpu.matmul %68, %70, %cst_40 {dimension_numbers = #tpu.dot_dimension_numbers<[1], [0], [0], [1], [0, 0, 1, 1], [], []>} : vector<8x128xbf16>, vector<128x128xbf16>, vector<8x128xf32> -> vector<8x128xf32>
    %c0_41 = arith.constant 0 : index
    %c0_42 = arith.constant 0 : index
    %c0_43 = arith.constant 0 : index
    %72 = vector.load %arg12[%c0_41, %c0_42, %c0_43] : memref<1x1x128xf32, #tpu.memory_space<vmem>>, vector<1x1x128xf32>
    %73 = vector.shape_cast %72 : vector<1x1x128xf32> to vector<1x128xf32>
    %74 = vector.broadcast %73 : vector<1x128xf32> to vector<8x128xf32>
    %75 = arith.addf %71, %74 : vector<8x128xf32>
    %76 = arith.addf %3, %75 : vector<8x128xf32>
    %c0_44 = arith.constant 0 : index
    %c0_45 = arith.constant 0 : index
    %c0_46 = arith.constant 0 : index
    %77 = vector.load %arg15[%c0_44, %c0_45, %c0_46] : memref<1x1x128xf32, #tpu.memory_space<vmem>>, vector<1x1x128xf32>
    %78 = vector.shape_cast %77 : vector<1x1x128xf32> to vector<1x128xf32>
    %c0_47 = arith.constant 0 : index
    %c0_48 = arith.constant 0 : index
    %c0_49 = arith.constant 0 : index
    %79 = vector.load %arg16[%c0_47, %c0_48, %c0_49] : memref<1x1x128xf32, #tpu.memory_space<vmem>>, vector<1x1x128xf32>
    %80 = vector.shape_cast %79 : vector<1x1x128xf32> to vector<1x128xf32>
    %cst_50 = arith.constant dense<0.000000e+00> : vector<8xf32>
    %81 = vector.multi_reduction <add>, %76, %cst_50 [1] : vector<8x128xf32> to vector<8xf32>
    %82 = vector.shape_cast %81 : vector<8xf32> to vector<8x1xf32>
    %cst_51 = arith.constant 1.280000e+02 : f32
    %83 = vector.broadcast %cst_51 : f32 to vector<8x1xf32>
    %84 = arith.divf %82, %83 : vector<8x1xf32>
    %85 = vector.broadcast %84 : vector<8x1xf32> to vector<8x128xf32>
    %86 = arith.subf %76, %85 : vector<8x128xf32>
    %87 = arith.mulf %86, %86 : vector<8x128xf32>
    %cst_52 = arith.constant dense<0.000000e+00> : vector<8xf32>
    %88 = vector.multi_reduction <add>, %87, %cst_52 [1] : vector<8x128xf32> to vector<8xf32>
    %89 = vector.shape_cast %88 : vector<8xf32> to vector<8x1xf32>
    %cst_53 = arith.constant 1.280000e+02 : f32
    %90 = vector.broadcast %cst_53 : f32 to vector<8x1xf32>
    %91 = arith.divf %89, %90 : vector<8x1xf32>
    %92 = vector.broadcast %84 : vector<8x1xf32> to vector<8x128xf32>
    %93 = arith.subf %76, %92 : vector<8x128xf32>
    %cst_54 = arith.constant 9.99999974E-6 : f32
    %94 = vector.broadcast %cst_54 : f32 to vector<8x1xf32>
    %95 = arith.addf %91, %94 : vector<8x1xf32>
    %96 = math.rsqrt %95 : vector<8x1xf32>
    %97 = vector.broadcast %96 : vector<8x1xf32> to vector<8x128xf32>
    %98 = arith.mulf %93, %97 : vector<8x128xf32>
    %99 = vector.broadcast %78 : vector<1x128xf32> to vector<8x128xf32>
    %100 = arith.mulf %98, %99 : vector<8x128xf32>
    %101 = vector.broadcast %80 : vector<1x128xf32> to vector<8x128xf32>
    %102 = arith.addf %100, %101 : vector<8x128xf32>
    %103 = arith.truncf %102 : vector<8x128xf32> to vector<8x128xbf16>
    %c0_55 = arith.constant 0 : index
    %c0_56 = arith.constant 0 : index
    %c0_57 = arith.constant 0 : index
    %104 = vector.load %arg17[%c0_55, %c0_56, %c0_57] : memref<1x128x256xbf16, #tpu.memory_space<vmem>>, vector<1x128x256xbf16>
    %105 = vector.shape_cast %104 : vector<1x128x256xbf16> to vector<128x256xbf16>
    %cst_58 = arith.constant dense<0.000000e+00> : vector<8x256xf32>
    %106 = tpu.matmul %103, %105, %cst_58 {dimension_numbers = #tpu.dot_dimension_numbers<[1], [0], [0], [1], [0, 0, 1, 1], [], []>} : vector<8x128xbf16>, vector<128x256xbf16>, vector<8x256xf32> -> vector<8x256xf32>
    %c0_59 = arith.constant 0 : index
    %c0_60 = arith.constant 0 : index
    %c0_61 = arith.constant 0 : index
    %107 = vector.load %arg18[%c0_59, %c0_60, %c0_61] : memref<1x1x256xf32, #tpu.memory_space<vmem>>, vector<1x1x256xf32>
    %108 = vector.shape_cast %107 : vector<1x1x256xf32> to vector<1x256xf32>
    %109 = vector.broadcast %108 : vector<1x256xf32> to vector<8x256xf32>
    %110 = arith.addf %106, %109 : vector<8x256xf32>
    %111 = arith.mulf %110, %110 : vector<8x256xf32>
    %112 = arith.mulf %110, %111 : vector<8x256xf32>
    %cst_62 = arith.constant 4.471500e-02 : f32
    %113 = vector.broadcast %cst_62 : f32 to vector<8x256xf32>
    %114 = arith.mulf %113, %112 : vector<8x256xf32>
    %115 = arith.addf %110, %114 : vector<8x256xf32>
    %cst_63 = arith.constant 0.797884583 : f32
    %116 = vector.broadcast %cst_63 : f32 to vector<8x256xf32>
    %117 = arith.mulf %116, %115 : vector<8x256xf32>
    %118 = math.tanh %117 : vector<8x256xf32>
    %cst_64 = arith.constant 1.000000e+00 : f32
    %119 = vector.broadcast %cst_64 : f32 to vector<8x256xf32>
    %120 = arith.addf %119, %118 : vector<8x256xf32>
    %cst_65 = arith.constant 5.000000e-01 : f32
    %121 = vector.broadcast %cst_65 : f32 to vector<8x256xf32>
    %122 = arith.mulf %121, %120 : vector<8x256xf32>
    %123 = arith.mulf %110, %122 : vector<8x256xf32>
    %124 = arith.truncf %123 : vector<8x256xf32> to vector<8x256xbf16>
    %c0_66 = arith.constant 0 : index
    %c0_67 = arith.constant 0 : index
    %c0_68 = arith.constant 0 : index
    %125 = vector.load %arg19[%c0_66, %c0_67, %c0_68] : memref<1x256x128xbf16, #tpu.memory_space<vmem>>, vector<1x256x128xbf16>
    %126 = vector.shape_cast %125 : vector<1x256x128xbf16> to vector<256x128xbf16>
    %cst_69 = arith.constant dense<0.000000e+00> : vector<8x128xf32>
    %127 = tpu.matmul %124, %126, %cst_69 {dimension_numbers = #tpu.dot_dimension_numbers<[1], [0], [0], [1], [0, 0, 1, 1], [], []>} : vector<8x256xbf16>, vector<256x128xbf16>, vector<8x128xf32> -> vector<8x128xf32>
    %c0_70 = arith.constant 0 : index
    %c0_71 = arith.constant 0 : index
    %c0_72 = arith.constant 0 : index
    %128 = vector.load %arg20[%c0_70, %c0_71, %c0_72] : memref<1x1x128xf32, #tpu.memory_space<vmem>>, vector<1x1x128xf32>
    %129 = vector.shape_cast %128 : vector<1x1x128xf32> to vector<1x128xf32>
    %130 = vector.broadcast %129 : vector<1x128xf32> to vector<8x128xf32>
    %131 = arith.addf %127, %130 : vector<8x128xf32>
    %132 = arith.addf %76, %131 : vector<8x128xf32>
    %c0_73 = arith.constant 0 : index
    %c0_74 = arith.constant 0 : index
    %133 = vector.load %arg30[%c0_73, %c0_74] : memref<8x128xf32, #tpu.memory_space<vmem>>, vector<8x128xf32>
    tpu.vector_store %arg30[%c0_73, %c0_74], %132 {strides = array<i32>} : memref<8x128xf32, #tpu.memory_space<vmem>>, vector<8x128xf32>,
    %c1_i32 = arith.constant 1 : i32
    %134 = arith.cmpi eq, %arg0, %c1_i32 : i32
    %135 = arith.extui %134 : i1 to i32
    %c0_i32_75 = arith.constant 0 : i32
    %136 = arith.cmpi ne, %135, %c0_i32_75 : i32
    scf.if %136 {
      %c0_76 = arith.constant 0 : index
      %137 = memref.load %arg2[%c0_76] : memref<1xi32, #tpu.memory_space<smem>>
      %138 = arith.index_cast %137 : i32 to index
      %c0_77 = arith.constant 0 : index
      %139 = vector.load %arg30[%138, %c0_77] : memref<8x128xf32, #tpu.memory_space<vmem>>, vector<1x128xf32>
      %c0_78 = arith.constant 0 : index
      %c0_79 = arith.constant 0 : index
      %140 = vector.load %arg21[%c0_78, %c0_79] : memref<1x128xf32, #tpu.memory_space<vmem>>, vector<1x128xf32>
      %c0_80 = arith.constant 0 : index
      %c0_81 = arith.constant 0 : index
      %141 = vector.load %arg22[%c0_80, %c0_81] : memref<1x128xf32, #tpu.memory_space<vmem>>, vector<1x128xf32>
      %cst_82 = arith.constant dense<0.000000e+00> : vector<1xf32>
      %142 = vector.multi_reduction <add>, %139, %cst_82 [1] : vector<1x128xf32> to vector<1xf32>
      %143 = vector.shape_cast %142 : vector<1xf32> to vector<1x1xf32>
      %cst_83 = arith.constant 1.280000e+02 : f32
      %144 = vector.broadcast %cst_83 : f32 to vector<1x1xf32>
      %145 = arith.divf %143, %144 : vector<1x1xf32>
      %146 = vector.broadcast %145 : vector<1x1xf32> to vector<1x128xf32>
      %147 = arith.subf %139, %146 : vector<1x128xf32>
      %148 = arith.mulf %147, %147 : vector<1x128xf32>
      %cst_84 = arith.constant dense<0.000000e+00> : vector<1xf32>
      %149 = vector.multi_reduction <add>, %148, %cst_84 [1] : vector<1x128xf32> to vector<1xf32>
      %150 = vector.shape_cast %149 : vector<1xf32> to vector<1x1xf32>
      %cst_85 = arith.constant 1.280000e+02 : f32
      %151 = vector.broadcast %cst_85 : f32 to vector<1x1xf32>
      %152 = arith.divf %150, %151 : vector<1x1xf32>
      %153 = vector.broadcast %145 : vector<1x1xf32> to vector<1x128xf32>
      %154 = arith.subf %139, %153 : vector<1x128xf32>
      %cst_86 = arith.constant 9.99999974E-6 : f32
      %155 = vector.broadcast %cst_86 : f32 to vector<1x1xf32>
      %156 = arith.addf %152, %155 : vector<1x1xf32>
      %157 = math.rsqrt %156 : vector<1x1xf32>
      %158 = vector.broadcast %157 : vector<1x1xf32> to vector<1x128xf32>
      %159 = arith.mulf %154, %158 : vector<1x128xf32>
      %160 = arith.mulf %159, %140 : vector<1x128xf32>
      %161 = arith.addf %160, %141 : vector<1x128xf32>
      %162 = arith.truncf %161 : vector<1x128xf32> to vector<1x128xbf16>
      %c0_87 = arith.constant 0 : index
      %c0_88 = arith.constant 0 : index
      %163 = vector.load %arg23[%c0_87, %c0_88] : memref<128x128xbf16, #tpu.memory_space<vmem>>, vector<128x128xbf16>
      %cst_89 = arith.constant dense<0.000000e+00> : vector<1x128xf32>
      %164 = tpu.matmul %162, %163, %cst_89 {dimension_numbers = #tpu.dot_dimension_numbers<[1], [0], [0], [1], [0, 0, 1, 1], [], []>} : vector<1x128xbf16>, vector<128x128xbf16>, vector<1x128xf32> -> vector<1x128xf32>
      %c0_90 = arith.constant 0 : index
      %c0_91 = arith.constant 0 : index
      %165 = vector.load %arg24[%c0_90, %c0_91] : memref<1x128xf32, #tpu.memory_space<vmem>>, vector<1x128xf32>
      %166 = arith.addf %164, %165 : vector<1x128xf32>
      %167 = arith.mulf %166, %166 : vector<1x128xf32>
      %168 = arith.mulf %166, %167 : vector<1x128xf32>
      %cst_92 = arith.constant 4.471500e-02 : f32
      %169 = vector.broadcast %cst_92 : f32 to vector<1x128xf32>
      %170 = arith.mulf %169, %168 : vector<1x128xf32>
      %171 = arith.addf %166, %170 : vector<1x128xf32>
      %cst_93 = arith.constant 0.797884583 : f32
      %172 = vector.broadcast %cst_93 : f32 to vector<1x128xf32>
      %173 = arith.mulf %172, %171 : vector<1x128xf32>
      %174 = math.tanh %173 : vector<1x128xf32>
      %cst_94 = arith.constant 1.000000e+00 : f32
      %175 = vector.broadcast %cst_94 : f32 to vector<1x128xf32>
      %176 = arith.addf %175, %174 : vector<1x128xf32>
      %cst_95 = arith.constant 5.000000e-01 : f32
      %177 = vector.broadcast %cst_95 : f32 to vector<1x128xf32>
      %178 = arith.mulf %177, %176 : vector<1x128xf32>
      %179 = arith.mulf %166, %178 : vector<1x128xf32>
      %c0_96 = arith.constant 0 : index
      %c0_97 = arith.constant 0 : index
      %180 = vector.load %arg25[%c0_96, %c0_97] : memref<1x128xf32, #tpu.memory_space<vmem>>, vector<1x128xf32>
      %c0_98 = arith.constant 0 : index
      %c0_99 = arith.constant 0 : index
      %181 = vector.load %arg26[%c0_98, %c0_99] : memref<1x128xf32, #tpu.memory_space<vmem>>, vector<1x128xf32>
      %cst_100 = arith.constant dense<0.000000e+00> : vector<1xf32>
      %182 = vector.multi_reduction <add>, %179, %cst_100 [1] : vector<1x128xf32> to vector<1xf32>
      %183 = vector.shape_cast %182 : vector<1xf32> to vector<1x1xf32>
      %cst_101 = arith.constant 1.280000e+02 : f32
      %184 = vector.broadcast %cst_101 : f32 to vector<1x1xf32>
      %185 = arith.divf %183, %184 : vector<1x1xf32>
      %186 = vector.broadcast %185 : vector<1x1xf32> to vector<1x128xf32>
      %187 = arith.subf %179, %186 : vector<1x128xf32>
      %188 = arith.mulf %187, %187 : vector<1x128xf32>
      %cst_102 = arith.constant dense<0.000000e+00> : vector<1xf32>
      %189 = vector.multi_reduction <add>, %188, %cst_102 [1] : vector<1x128xf32> to vector<1xf32>
      %190 = vector.shape_cast %189 : vector<1xf32> to vector<1x1xf32>
      %cst_103 = arith.constant 1.280000e+02 : f32
      %191 = vector.broadcast %cst_103 : f32 to vector<1x1xf32>
      %192 = arith.divf %190, %191 : vector<1x1xf32>
      %193 = vector.broadcast %185 : vector<1x1xf32> to vector<1x128xf32>
      %194 = arith.subf %179, %193 : vector<1x128xf32>
      %cst_104 = arith.constant 9.99999974E-6 : f32
      %195 = vector.broadcast %cst_104 : f32 to vector<1x1xf32>
      %196 = arith.addf %192, %195 : vector<1x1xf32>
      %197 = math.rsqrt %196 : vector<1x1xf32>
      %198 = vector.broadcast %197 : vector<1x1xf32> to vector<1x128xf32>
      %199 = arith.mulf %194, %198 : vector<1x128xf32>
      %200 = arith.mulf %199, %180 : vector<1x128xf32>
      %201 = arith.addf %200, %181 : vector<1x128xf32>
      %202 = arith.truncf %201 : vector<1x128xf32> to vector<1x128xbf16>
      %c0_105 = arith.constant 0 : index
      %c0_106 = arith.constant 0 : index
      %203 = vector.load %arg27[%c0_105, %c0_106] : memref<128x256xbf16, #tpu.memory_space<vmem>>, vector<128x256xbf16>
      %cst_107 = arith.constant dense<0.000000e+00> : vector<1x256xf32>
      %204 = tpu.matmul %202, %203, %cst_107 {dimension_numbers = #tpu.dot_dimension_numbers<[1], [0], [0], [1], [0, 0, 1, 1], [], []>} : vector<1x128xbf16>, vector<128x256xbf16>, vector<1x256xf32> -> vector<1x256xf32>
      %c0_108 = arith.constant 0 : index
      %c0_109 = arith.constant 0 : index
      %205 = vector.load %arg28[%c0_108, %c0_109] : memref<1x256xf32, #tpu.memory_space<vmem>>, vector<1x256xf32>
      %206 = arith.addf %204, %205 : vector<1x256xf32>
      %c0_110 = arith.constant 0 : index
      %c0_111 = arith.constant 0 : index
      %207 = vector.load %arg29[%c0_110, %c0_111] : memref<1x256xf32, #tpu.memory_space<vmem>>, vector<1x256xf32>
      tpu.vector_store %arg29[%c0_110, %c0_111], %206 {strides = array<i32>} : memref<1x256xf32, #tpu.memory_space<vmem>>, vector<1x256xf32>,
    } else {
    }
    return
  }
  func.func @transform_0(%arg0: i32, %arg1: memref<8xi32, #tpu.memory_space<smem>>, %arg2: memref<1xi32, #tpu.memory_space<smem>>) -> (i32, i32) {
    %c0_i32 = arith.constant 0 : i32
    %c0_i32_0 = arith.constant 0 : i32
    %c0_i32_1 = arith.constant 0 : i32
    return %c0_i32, %c0_i32_0 : i32, i32
  }
  func.func @transform_1(%arg0: i32, %arg1: memref<8xi32, #tpu.memory_space<smem>>, %arg2: memref<1xi32, #tpu.memory_space<smem>>) -> (i32, i32) {
    %c0_i32 = arith.constant 0 : i32
    %c0_i32_0 = arith.constant 0 : i32
    %c0_i32_1 = arith.constant 0 : i32
    return %c0_i32, %c0_i32_0 : i32, i32
  }
  func.func @transform_2(%arg0: i32, %arg1: memref<8xi32, #tpu.memory_space<smem>>, %arg2: memref<1xi32, #tpu.memory_space<smem>>) -> (i32, i32, i32) {
    %c0_i32 = arith.constant 0 : i32
    %c0_i32_0 = arith.constant 0 : i32
    %c0_i32_1 = arith.constant 0 : i32
    return %arg0, %c0_i32, %c0_i32_0 : i32, i32, i32
  }
  func.func @transform_3(%arg0: i32, %arg1: memref<8xi32, #tpu.memory_space<smem>>, %arg2: memref<1xi32, #tpu.memory_space<smem>>) -> (i32, i32, i32) {
    %c0_i32 = arith.constant 0 : i32
    %c0_i32_0 = arith.constant 0 : i32
    %c0_i32_1 = arith.constant 0 : i32
    return %arg0, %c0_i32, %c0_i32_0 : i32, i32, i32
  }
  func.func @transform_4(%arg0: i32, %arg1: memref<8xi32, #tpu.memory_space<smem>>, %arg2: memref<1xi32, #tpu.memory_space<smem>>) -> (i32, i32, i32) {
    %c0_i32 = arith.constant 0 : i32
    %c0_i32_0 = arith.constant 0 : i32
    %c0_i32_1 = arith.constant 0 : i32
    return %arg0, %c0_i32, %c0_i32_0 : i32, i32, i32
  }
  func.func @transform_5(%arg0: i32, %arg1: memref<8xi32, #tpu.memory_space<smem>>, %arg2: memref<1xi32, #tpu.memory_space<smem>>) -> (i32, i32, i32) {
    %c0_i32 = arith.constant 0 : i32
    %c0_i32_0 = arith.constant 0 : i32
    %c0_i32_1 = arith.constant 0 : i32
    return %arg0, %c0_i32, %c0_i32_0 : i32, i32, i32
  }
  func.func @transform_6(%arg0: i32, %arg1: memref<8xi32, #tpu.memory_space<smem>>, %arg2: memref<1xi32, #tpu.memory_space<smem>>) -> (i32, i32, i32) {
    %c0_i32 = arith.constant 0 : i32
    %c0_i32_0 = arith.constant 0 : i32
    %c0_i32_1 = arith.constant 0 : i32
    return %arg0, %c0_i32, %c0_i32_0 : i32, i32, i32
  }
  func.func @transform_7(%arg0: i32, %arg1: memref<8xi32, #tpu.memory_space<smem>>, %arg2: memref<1xi32, #tpu.memory_space<smem>>) -> (i32, i32, i32) {
    %c0_i32 = arith.constant 0 : i32
    %c0_i32_0 = arith.constant 0 : i32
    %c0_i32_1 = arith.constant 0 : i32
    return %arg0, %c0_i32, %c0_i32_0 : i32, i32, i32
  }
  func.func @transform_8(%arg0: i32, %arg1: memref<8xi32, #tpu.memory_space<smem>>, %arg2: memref<1xi32, #tpu.memory_space<smem>>) -> (i32, i32, i32) {
    %c0_i32 = arith.constant 0 : i32
    %c0_i32_0 = arith.constant 0 : i32
    %c0_i32_1 = arith.constant 0 : i32
    return %arg0, %c0_i32, %c0_i32_0 : i32, i32, i32
  }
  func.func @transform_9(%arg0: i32, %arg1: memref<8xi32, #tpu.memory_space<smem>>, %arg2: memref<1xi32, #tpu.memory_space<smem>>) -> (i32, i32, i32) {
    %c0_i32 = arith.constant 0 : i32
    %c0_i32_0 = arith.constant 0 : i32
    %c0_i32_1 = arith.constant 0 : i32
    return %arg0, %c0_i32, %c0_i32_0 : i32, i32, i32
  }
  func.func @transform_10(%arg0: i32, %arg1: memref<8xi32, #tpu.memory_space<smem>>, %arg2: memref<1xi32, #tpu.memory_space<smem>>) -> (i32, i32, i32) {
    %c0_i32 = arith.constant 0 : i32
    %c0_i32_0 = arith.constant 0 : i32
    %c0_i32_1 = arith.constant 0 : i32
    return %arg0, %c0_i32, %c0_i32_0 : i32, i32, i32
  }
  func.func @transform_11(%arg0: i32, %arg1: memref<8xi32, #tpu.memory_space<smem>>, %arg2: memref<1xi32, #tpu.memory_space<smem>>) -> (i32, i32, i32) {
    %c0_i32 = arith.constant 0 : i32
    %c0_i32_0 = arith.constant 0 : i32
    %c0_i32_1 = arith.constant 0 : i32
    return %arg0, %c0_i32, %c0_i32_0 : i32, i32, i32
  }
  func.func @transform_12(%arg0: i32, %arg1: memref<8xi32, #tpu.memory_space<smem>>, %arg2: memref<1xi32, #tpu.memory_space<smem>>) -> (i32, i32, i32) {
    %c0_i32 = arith.constant 0 : i32
    %c0_i32_0 = arith.constant 0 : i32
    %c0_i32_1 = arith.constant 0 : i32
    return %arg0, %c0_i32, %c0_i32_0 : i32, i32, i32
  }
  func.func @transform_13(%arg0: i32, %arg1: memref<8xi32, #tpu.memory_space<smem>>, %arg2: memref<1xi32, #tpu.memory_space<smem>>) -> (i32, i32, i32) {
    %c0_i32 = arith.constant 0 : i32
    %c0_i32_0 = arith.constant 0 : i32
    %c0_i32_1 = arith.constant 0 : i32
    return %arg0, %c0_i32, %c0_i32_0 : i32, i32, i32
  }
  func.func @transform_14(%arg0: i32, %arg1: memref<8xi32, #tpu.memory_space<smem>>, %arg2: memref<1xi32, #tpu.memory_space<smem>>) -> (i32, i32, i32) {
    %c0_i32 = arith.constant 0 : i32
    %c0_i32_0 = arith.constant 0 : i32
    %c0_i32_1 = arith.constant 0 : i32
    return %arg0, %c0_i32, %c0_i32_0 : i32, i32, i32
  }
  func.func @transform_15(%arg0: i32, %arg1: memref<8xi32, #tpu.memory_space<smem>>, %arg2: memref<1xi32, #tpu.memory_space<smem>>) -> (i32, i32, i32) {
    %c0_i32 = arith.constant 0 : i32
    %c0_i32_0 = arith.constant 0 : i32
    %c0_i32_1 = arith.constant 0 : i32
    return %arg0, %c0_i32, %c0_i32_0 : i32, i32, i32
  }
  func.func @transform_16(%arg0: i32, %arg1: memref<8xi32, #tpu.memory_space<smem>>, %arg2: memref<1xi32, #tpu.memory_space<smem>>) -> (i32, i32, i32) {
    %c0_i32 = arith.constant 0 : i32
    %c0_i32_0 = arith.constant 0 : i32
    %c0_i32_1 = arith.constant 0 : i32
    return %arg0, %c0_i32, %c0_i32_0 : i32, i32, i32
  }
  func.func @transform_17(%arg0: i32, %arg1: memref<8xi32, #tpu.memory_space<smem>>, %arg2: memref<1xi32, #tpu.memory_space<smem>>) -> (i32, i32, i32) {
    %c0_i32 = arith.constant 0 : i32
    %c0_i32_0 = arith.constant 0 : i32
    %c0_i32_1 = arith.constant 0 : i32
    return %arg0, %c0_i32, %c0_i32_0 : i32, i32, i32
  }
  func.func @transform_18(%arg0: i32, %arg1: memref<8xi32, #tpu.memory_space<smem>>, %arg2: memref<1xi32, #tpu.memory_space<smem>>) -> (i32, i32) {
    %c0_i32 = arith.constant 0 : i32
    %c0_i32_0 = arith.constant 0 : i32
    %c0_i32_1 = arith.constant 0 : i32
    return %c0_i32, %c0_i32_0 : i32, i32
  }
  func.func @transform_19(%arg0: i32, %arg1: memref<8xi32, #tpu.memory_space<smem>>, %arg2: memref<1xi32, #tpu.memory_space<smem>>) -> (i32, i32) {
    %c0_i32 = arith.constant 0 : i32
    %c0_i32_0 = arith.constant 0 : i32
    %c0_i32_1 = arith.constant 0 : i32
    return %c0_i32, %c0_i32_0 : i32, i32
  }
  func.func @transform_20(%arg0: i32, %arg1: memref<8xi32, #tpu.memory_space<smem>>, %arg2: memref<1xi32, #tpu.memory_space<smem>>) -> (i32, i32) {
    %c0_i32 = arith.constant 0 : i32
    %c0_i32_0 = arith.constant 0 : i32
    %c0_i32_1 = arith.constant 0 : i32
    return %c0_i32, %c0_i32_0 : i32, i32
  }
  func.func @transform_21(%arg0: i32, %arg1: memref<8xi32, #tpu.memory_space<smem>>, %arg2: memref<1xi32, #tpu.memory_space<smem>>) -> (i32, i32) {
    %c0_i32 = arith.constant 0 : i32
    %c0_i32_0 = arith.constant 0 : i32
    %c0_i32_1 = arith.constant 0 : i32
    return %c0_i32, %c0_i32_0 : i32, i32
  }
  func.func @transform_22(%arg0: i32, %arg1: memref<8xi32, #tpu.memory_space<smem>>, %arg2: memref<1xi32, #tpu.memory_space<smem>>) -> (i32, i32) {
    %c0_i32 = arith.constant 0 : i32
    %c0_i32_0 = arith.constant 0 : i32
    %c0_i32_1 = arith.constant 0 : i32
    return %c0_i32, %c0_i32_0 : i32, i32
  }
  func.func @transform_23(%arg0: i32, %arg1: memref<8xi32, #tpu.memory_space<smem>>, %arg2: memref<1xi32, #tpu.memory_space<smem>>) -> (i32, i32) {
    %c0_i32 = arith.constant 0 : i32
    %c0_i32_0 = arith.constant 0 : i32
    %c0_i32_1 = arith.constant 0 : i32
    return %c0_i32, %c0_i32_0 : i32, i32
  }
  func.func @transform_24(%arg0: i32, %arg1: memref<8xi32, #tpu.memory_space<smem>>, %arg2: memref<1xi32, #tpu.memory_space<smem>>) -> (i32, i32) {
    %c0_i32 = arith.constant 0 : i32
    %c0_i32_0 = arith.constant 0 : i32
    %c0_i32_1 = arith.constant 0 : i32
    return %c0_i32, %c0_i32_0 : i32, i32
  }
  func.func @transform_25(%arg0: i32, %arg1: memref<8xi32, #tpu.memory_space<smem>>, %arg2: memref<1xi32, #tpu.memory_space<smem>>) -> (i32, i32) {
    %c0_i32 = arith.constant 0 : i32
    %c0_i32_0 = arith.constant 0 : i32
    %c0_i32_1 = arith.constant 0 : i32
    return %c0_i32, %c0_i32_0 : i32, i32
  }
  func.func @transform_26(%arg0: i32, %arg1: memref<8xi32, #tpu.memory_space<smem>>, %arg2: memref<1xi32, #tpu.memory_space<smem>>) -> (i32, i32) {
    %c0_i32 = arith.constant 0 : i32
    %c0_i32_0 = arith.constant 0 : i32
    %c0_i32_1 = arith.constant 0 : i32
    return %c0_i32, %c0_i32_0 : i32, i32
  }
}

</mosaic_0001>

<llo_original>
// kernel: llm_forward.1
$region0: #{llm_forward.1}
  #allocation0 [shape = 'u32[]', space=smem, size = 0x4, offset = 0x4, fixed_abs, tag = 'smem constant byte address 0x4 - core index']
  #allocation1 [shape = 'u32[72,128]{1,0:T(1,128)}', space=vmem, size = 0x9000, scoped, tag = 'internal scratch']
  #allocation2 [shape = 'f32[8,128]{1,0:T(8,128)}', space=vmem, size = 0x1000, scoped, tag = 'scratch operand']
  #allocation3 [shape = 's32[1]{0}', space=sflag, size = 0x4, scoped, tag = 'scoped memory for llm_forward.1']
  #allocation4 [shape = 'u8[512]{0}', space=smem, size = 0x200, scoped, tag = 'prefetched SMEM operand 0']
  #allocation5 [shape = 's32[1]{0:T(128)S(6)}', space=smem, size = 0x200, scoped, tag = 'prefetched SMEM operand 1']
  %s0 = inlined_call_operand.vmem [shape: s32[8], index: 0, kind: input, shape index: {}]
  %s1 = inlined_call_operand.<no memory space> [shape: s32[1], index: 1, kind: input, shape index: {}]
  %s2 = inlined_call_operand.hbm [shape: f32[256,128], index: 2, kind: input, shape index: {}]
  %s3 = inlined_call_operand.vmem [shape: f32[8,128], index: 3, kind: input, shape index: {}]
  %s4 = inlined_call_operand.hbm [shape: bf16[2,128,128], index: 4, kind: input, shape index: {}]
  %s5 = inlined_call_operand.vmem [shape: f32[2,1,128], index: 5, kind: input, shape index: {}]
  %s6 = inlined_call_operand.hbm [shape: bf16[2,128,128], index: 6, kind: input, shape index: {}]
  %s7 = inlined_call_operand.hbm [shape: f32[2,1,128], index: 7, kind: input, shape index: {}]
  %s8 = inlined_call_operand.hbm [shape: bf16[2,128,128], index: 8, kind: input, shape index: {}]
  %s9 = inlined_call_operand.hbm [shape: f32[2,1,128], index: 9, kind: input, shape index: {}]
  %s10 = inlined_call_operand.hbm [shape: bf16[2,128,128], index: 10, kind: input, shape index: {}]
  %s11 = inlined_call_operand.vmem [shape: f32[2,1,128], index: 11, kind: input, shape index: {}]
  %s12 = inlined_call_operand.vmem [shape: f32[2,1,128], index: 12, kind: input, shape index: {}]
  %s13 = inlined_call_operand.hbm [shape: f32[2,1,128], index: 13, kind: input, shape index: {}]
  %s14 = inlined_call_operand.vmem [shape: f32[2,1,128], index: 14, kind: input, shape index: {}]
  %s15 = inlined_call_operand.hbm [shape: f32[2,1,128], index: 15, kind: input, shape index: {}]
  %s16 = inlined_call_operand.hbm [shape: bf16[2,128,256], index: 16, kind: input, shape index: {}]
  %s17 = inlined_call_operand.vmem [shape: f32[2,1,256], index: 17, kind: input, shape index: {}]
  %s18 = inlined_call_operand.hbm [shape: bf16[2,256,128], index: 18, kind: input, shape index: {}]
  %s19 = inlined_call_operand.vmem [shape: f32[2,1,128], index: 19, kind: input, shape index: {}]
  %s20 = inlined_call_operand.vmem [shape: f32[1,128], index: 20, kind: input, shape index: {}]
  %s21 = inlined_call_operand.hbm [shape: f32[1,128], index: 21, kind: input, shape index: {}]
  %s22 = inlined_call_operand.hbm [shape: bf16[128,128], index: 22, kind: input, shape index: {}]
  %s23 = inlined_call_operand.hbm [shape: f32[1,128], index: 23, kind: input, shape index: {}]
  %s24 = inlined_call_operand.hbm [shape: f32[1,128], index: 24, kind: input, shape index: {}]
  %s25 = inlined_call_operand.hbm [shape: f32[1,128], index: 25, kind: input, shape index: {}]
  %s26 = inlined_call_operand.hbm [shape: bf16[128,256], index: 26, kind: input, shape index: {}]
  %s27 = inlined_call_operand.hbm [shape: f32[1,256], index: 27, kind: input, shape index: {}]
  %s28 = inlined_call_operand.hbm [shape: f32[1,256], index: 28, kind: output, shape index: {}]
  %s29 = sld [smem:[#allocation0]]
  $region217: #{llm_forward.1} parent=0
    _
  %s31 = ssub.s32 1, %s29
  %s32 = scalar_select 0, %s31, %s29
  %s34 = sshll.u32 %s0, 4
  %s35 = int_to_ptr.vmem [resolvable:$true] %s34
  %37 = dma.vmem_to_smem %s35, 16, [#allocation4], [#allocation3]
  %38 = sst [smem:[#allocation5]] %s1
  %40 = dma.done [#allocation3], 16
  %41 = sfence
  $region1: #{llm_forward.1} parent=0
    #allocation6 [shape = 'u8[131072]{0}', space=vmem, size = 0x20000, scoped, tag = 'input window, operand 2, single buffered']
    #allocation7 [shape = 's32[2]{0}', space=sflag, size = 0x8, scoped, tag = 'scoped memory for llm_forward.1']
    #allocation8 [shape = 's32[2]{0}', space=sflag, size = 0x8, scoped, tag = 'scoped memory for llm_forward.1']
    #allocation9 [shape = 'u8[65536]{0}', space=vmem, size = 0x10000, scoped, tag = 'input window, operand 4']
    #allocation10 [shape = 's32[2]{0}', space=sflag, size = 0x8, scoped, tag = 'scoped memory for llm_forward.1']
    #allocation11 [shape = 'u8[65536]{0}', space=vmem, size = 0x10000, scoped, tag = 'input window, operand 6']
    #allocation12 [shape = 'u8[1024]{0}', space=vmem, size = 0x400, scoped, tag = 'input window, operand 7']
    #allocation13 [shape = 's32[2]{0}', space=sflag, size = 0x8, scoped, tag = 'scoped memory for llm_forward.1']
    #allocation14 [shape = 'u8[65536]{0}', space=vmem, size = 0x10000, scoped, tag = 'input window, operand 8']
    #allocation15 [shape = 'u8[1024]{0}', space=vmem, size = 0x400, scoped, tag = 'input window, operand 9']
    #allocation16 [shape = 's32[2]{0}', space=sflag, size = 0x8, scoped, tag = 'scoped memory for llm_forward.1']
    #allocation17 [shape = 'u8[65536]{0}', space=vmem, size = 0x10000, scoped, tag = 'input window, operand 10']
    #allocation18 [shape = 'u8[1024]{0}', space=vmem, size = 0x400, scoped, tag = 'input window, operand 13']
    #allocation19 [shape = 's32[2]{0}', space=sflag, size = 0x8, scoped, tag = 'scoped memory for llm_forward.1']
    #allocation20 [shape = 'u8[1024]{0}', space=vmem, size = 0x400, scoped, tag = 'input window, operand 15']
    #allocation21 [shape = 'u8[131072]{0}', space=vmem, size = 0x20000, scoped, tag = 'input window, operand 16']
    #allocation22 [shape = 's32[2]{0}', space=sflag, size = 0x8, scoped, tag = 'scoped memory for llm_forward.1']
    #allocation23 [shape = 'u8[131072]{0}', space=vmem, size = 0x20000, scoped, tag = 'input window, operand 18']
    #allocation24 [shape = 'u8[512]{0}', space=vmem, size = 0x400, scoped, tag = 'input window, operand 21, single buffered']
    #allocation25 [shape = 's32[1]{0}', space=sflag, size = 0x4, scoped, tag = 'scoped memory for llm_forward.1']
    #allocation26 [shape = 'u8[32768]{0}', space=vmem, size = 0x8000, scoped, tag = 'input window, operand 22, single buffered']
    #allocation27 [shape = 'u8[512]{0}', space=vmem, size = 0x400, scoped, tag = 'input window, operand 23, single buffered']
    #allocation28 [shape = 's32[1]{0}', space=sflag, size = 0x4, scoped, tag = 'scoped memory for llm_forward.1']
    #allocation29 [shape = 'u8[512]{0}', space=vmem, size = 0x400, scoped, tag = 'input window, operand 24, single buffered']
    #allocation30 [shape = 'u8[512]{0}', space=vmem, size = 0x400, scoped, tag = 'input window, operand 25, single buffered']
    #allocation31 [shape = 's32[1]{0}', space=sflag, size = 0x4, scoped, tag = 'scoped memory for llm_forward.1']
    #allocation32 [shape = 'u8[65536]{0}', space=vmem, size = 0x10000, scoped, tag = 'input window, operand 26, single buffered']
    #allocation33 [shape = 'u8[1024]{0}', space=vmem, size = 0x400, scoped, tag = 'input window, operand 27, single buffered']
    #allocation34 [shape = 's32[1]{0}', space=sflag, size = 0x4, scoped, tag = 'scoped memory for llm_forward.1']
    #allocation35 [shape = 'u8[1024]{0}', space=vmem, size = 0x400, scoped, tag = 'output window, operand 0, single buffered']
    %42 = vsyncpa [#allocation7], 0
    %43 = vsyncpa [#allocation10], 0
    %s44 = scalar_lea.sflag [#allocation10], 1
    %45 = vsyncpa %s44, 0
    %46 = vsyncpa [#allocation13], 0
    %s47 = scalar_lea.sflag [#allocation13], 1
    %48 = vsyncpa %s47, 0
    %49 = vsyncpa [#allocation16], 0
    %s50 = scalar_lea.sflag [#allocation16], 1
    %51 = vsyncpa %s50, 0
    %52 = vsyncpa [#allocation19], 0
    %s53 = scalar_lea.sflag [#allocation19], 1
    %54 = vsyncpa %s53, 0
    %55 = vsyncpa [#allocation22], 0
    %s56 = scalar_lea.sflag [#allocation22], 1
    %57 = vsyncpa %s56, 0
    %58 = vsyncpa [#allocation25], 0
    %59 = vsyncpa [#allocation28], 0
    %60 = vsyncpa [#allocation31], 0
    %61 = vsyncpa [#allocation34], 0
    %62 = vsyncpa [#allocation8], 0
    loop: start=0, step=1, limit=4
    $region2: #{llm_forward.1} parent=1 // loop_pre_header
      _
    $region3: #{llm_forward.1} parent=1 // loop_header
      %s64 = sphi 0, %s68
      %p65 = scmp.ge.s32.totalorder %s64, 4
      %s72 = sphi 0, %s72
      %s74 = sphi 0, %s72
      %s75 = sphi 0, %s74
      %s89 = sphi 0, %s75
      %s93 = sphi 0, %s93
      %s95 = sphi 0, %s93
      %s96 = sphi 0, %s95
      %s110 = sphi 0, %s96
      %s116 = sphi 0, %s118
      %s119 = sphi 0, %s116
      %s120 = sphi 0, %s119
      %s136 = sphi 0, %s120
      %s142 = sphi 0, %s144
      %s145 = sphi 0, %s142
      %s146 = sphi 0, %s145
      %s162 = sphi 0, %s146
      %s168 = sphi 0, %s170
      %s171 = sphi 0, %s168
      %s172 = sphi 0, %s171
      %s188 = sphi 0, %s172
      %s194 = sphi 0, %s196
      %s197 = sphi 0, %s194
      %s198 = sphi 0, %s197
      %s214 = sphi 0, %s198
      %s220 = sphi 0, %s222
      %s223 = sphi 0, %s220
      %s224 = sphi 0, %s223
      %s240 = sphi 0, %s224
      %s246 = sphi 0, %s248
      %s249 = sphi 0, %s246
      %s250 = sphi 0, %s249
      %s266 = sphi 0, %s250
      %s272 = sphi 0, %s274
      %s275 = sphi 0, %s272
      %s276 = sphi 0, %s275
      %s292 = sphi 0, %s276
      %s298 = sphi 0, %s300
      %s301 = sphi 0, %s298
      %s302 = sphi 0, %s301
      %s318 = sphi 0, %s302
      %s324 = sphi 0, %s326
      %s327 = sphi 0, %s324
      %s328 = sphi 0, %s327
      %s344 = sphi 0, %s328
      %s350 = sphi 0, %s352
      %s353 = sphi 0, %s350
      %s354 = sphi 0, %s353
      %s370 = sphi 0, %s354
      %s376 = sphi 0, %s378
      %s379 = sphi 0, %s376
      %s380 = sphi 0, %s379
      %s396 = sphi 0, %s380
      %s402 = sphi 0, %s404
      %s405 = sphi 0, %s402
      %s406 = sphi 0, %s405
      %s422 = sphi 0, %s406
      %s428 = sphi 0, %s430
      %s431 = sphi 0, %s428
      %s432 = sphi 0, %s431
      %s448 = sphi 0, %s432
      %s454 = sphi 0, %s456
      %s457 = sphi 0, %s454
      %s458 = sphi 0, %s457
      %s474 = sphi 0, %s458
      %s480 = sphi 0, %s482
      %s483 = sphi 0, %s480
      %s484 = sphi 0, %s483
      %s500 = sphi 0, %s484
      %s506 = sphi 0, %s508
      %s509 = sphi 0, %s506
      %s510 = sphi 0, %s509
      %s526 = sphi 0, %s510
      %s530 = sphi 0, %s530
      %s532 = sphi 0, %s530
      %s533 = sphi 0, %s532
      %s547 = sphi 0, %s533
      %s551 = sphi 0, %s551
      %s553 = sphi 0, %s551
      %s554 = sphi 0, %s553
      %s568 = sphi 0, %s554
      %s572 = sphi 0, %s572
      %s574 = sphi 0, %s572
      %s575 = sphi 0, %s574
      %s589 = sphi 0, %s575
      %s593 = sphi 0, %s593
      %s595 = sphi 0, %s593
      %s596 = sphi 0, %s595
      %s610 = sphi 0, %s596
      %s614 = sphi 0, %s614
      %s616 = sphi 0, %s614
      %s617 = sphi 0, %s616
      %s631 = sphi 0, %s617
      %s635 = sphi 0, %s635
      %s637 = sphi 0, %s635
      %s638 = sphi 0, %s637
      %s652 = sphi 0, %s638
      %s656 = sphi 0, %s656
      %s658 = sphi 0, %s656
      %s659 = sphi 0, %s658
      %s673 = sphi 0, %s659
      %s677 = sphi 0, %s677
      %s679 = sphi 0, %s677
      %s680 = sphi 0, %s679
      %s694 = sphi 0, %s680
      %s698 = sphi 0, %s698
      %s700 = sphi 0, %s698
      %s701 = sphi 0, %s700
      %s715 = sphi 0, %s701
    $region4: #{llm_forward.1} parent=1 // loop_header_branch
      %67 = sbr.rel (%p65) target = $region8
    $region5: #{llm_forward.1} parent=1 // loop_body
      %s69 = ssub.s32 %s64, 1
      %s70 = ssub.s32 %s64, 2
      %s71 = sadd.s32 %s64, 1
      %s73 = sadd.s32 %s72, 1
      %p76 = scmp.eq.s32.totalorder %s64, 1
      %p77 = scmp.ne.s32.totalorder %s72, %s74
      %p78 = scmp.eq.s32.totalorder %s64, 0
      %p79 = por %p77, %p78
      %p80 = scmp.ne.s32.totalorder %s72, %s74
      %p81 = scmp.eq.s32.totalorder %s69, 1
      %p82 = por %p80, %p81
      %p83 = scmp.ne.s32.totalorder %s74, %s75
      %p84 = scmp.eq.s32.totalorder %s69, 0
      %p85 = por %p83, %p84
      %p86 = scmp.ne.s32.totalorder %s74, %s75
      %p87 = scmp.eq.s32.totalorder %s70, 1
      %p88 = por %p86, %p87
      %p90 = scmp.ne.s32.totalorder %s75, %s89
      %p91 = scmp.eq.s32.totalorder %s70, 0
      %p92 = por %p90, %p91
      %s94 = sadd.s32 %s93, 1
      %p97 = scmp.eq.s32.totalorder %s64, 1
      %p98 = scmp.ne.s32.totalorder %s93, %s95
      %p99 = scmp.eq.s32.totalorder %s64, 0
      %p100 = por %p98, %p99
      %p101 = scmp.ne.s32.totalorder %s93, %s95
      %p102 = scmp.eq.s32.totalorder %s69, 1
      %p103 = por %p101, %p102
      %p104 = scmp.ne.s32.totalorder %s95, %s96
      %p105 = scmp.eq.s32.totalorder %s69, 0
      %p106 = por %p104, %p105
      %p107 = scmp.ne.s32.totalorder %s95, %s96
      %p108 = scmp.eq.s32.totalorder %s70, 1
      %p109 = por %p107, %p108
      %p111 = scmp.ne.s32.totalorder %s96, %s110
      %p112 = scmp.eq.s32.totalorder %s70, 0
      %p113 = por %p111, %p112
      %s114 = ssub.s32 %s64, %s71
      %p115 = scmp.eq.s32.totalorder %s114, 0
      %s117 = sadd.s32 %s116, 1
      %s118 = scalar_select %p115, %s116, %s117
      %p121 = pneg %p115
      %p122 = scmp.eq.s32.totalorder %s64, 1
      %p123 = por %p121, %p122
      %p124 = scmp.ne.s32.totalorder %s116, %s119
      %p125 = scmp.eq.s32.totalorder %s64, 0
      %p126 = por %p124, %p125
      %p127 = scmp.ne.s32.totalorder %s116, %s119
      %p128 = scmp.eq.s32.totalorder %s69, 1
      %p129 = por %p127, %p128
      %p130 = scmp.ne.s32.totalorder %s119, %s120
      %p131 = scmp.eq.s32.totalorder %s69, 0
      %p132 = por %p130, %p131
      %p133 = scmp.ne.s32.totalorder %s119, %s120
      %p134 = scmp.eq.s32.totalorder %s70, 1
      %p135 = por %p133, %p134
      %p137 = scmp.ne.s32.totalorder %s120, %s136
      %p138 = scmp.eq.s32.totalorder %s70, 0
      %p139 = por %p137, %p138
      %s140 = ssub.s32 %s64, %s71
      %p141 = scmp.eq.s32.totalorder %s140, 0
      %s143 = sadd.s32 %s142, 1
      %s144 = scalar_select %p141, %s142, %s143
      %p147 = pneg %p141
      %p148 = scmp.eq.s32.totalorder %s64, 1
      %p149 = por %p147, %p148
      %p150 = scmp.ne.s32.totalorder %s142, %s145
      %p151 = scmp.eq.s32.totalorder %s64, 0
      %p152 = por %p150, %p151
      %p153 = scmp.ne.s32.totalorder %s142, %s145
      %p154 = scmp.eq.s32.totalorder %s69, 1
      %p155 = por %p153, %p154
      %p156 = scmp.ne.s32.totalorder %s145, %s146
      %p157 = scmp.eq.s32.totalorder %s69, 0
      %p158 = por %p156, %p157
      %p159 = scmp.ne.s32.totalorder %s145, %s146
      %p160 = scmp.eq.s32.totalorder %s70, 1
      %p161 = por %p159, %p160
      %p163 = scmp.ne.s32.totalorder %s146, %s162
      %p164 = scmp.eq.s32.totalorder %s70, 0
      %p165 = por %p163, %p164
      %s166 = ssub.s32 %s64, %s71
      %p167 = scmp.eq.s32.totalorder %s166, 0
      %s169 = sadd.s32 %s168, 1
      %s170 = scalar_select %p167, %s168, %s169
      %p173 = pneg %p167
      %p174 = scmp.eq.s32.totalorder %s64, 1
      %p175 = por %p173, %p174
      %p176 = scmp.ne.s32.totalorder %s168, %s171
      %p177 = scmp.eq.s32.totalorder %s64, 0
      %p178 = por %p176, %p177
      %p179 = scmp.ne.s32.totalorder %s168, %s171
      %p180 = scmp.eq.s32.totalorder %s69, 1
      %p181 = por %p179, %p180
      %p182 = scmp.ne.s32.totalorder %s171, %s172
      %p183 = scmp.eq.s32.totalorder %s69, 0
      %p184 = por %p182, %p183
      %p185 = scmp.ne.s32.totalorder %s171, %s172
      %p186 = scmp.eq.s32.totalorder %s70, 1
      %p187 = por %p185, %p186
      %p189 = scmp.ne.s32.totalorder %s172, %s188
      %p190 = scmp.eq.s32.totalorder %s70, 0
      %p191 = por %p189, %p190
      %s192 = ssub.s32 %s64, %s71
      %p193 = scmp.eq.s32.totalorder %s192, 0
      %s195 = sadd.s32 %s194, 1
      %s196 = scalar_select %p193, %s194, %s195
      %p199 = pneg %p193
      %p200 = scmp.eq.s32.totalorder %s64, 1
      %p201 = por %p199, %p200
      %p202 = scmp.ne.s32.totalorder %s194, %s197
      %p203 = scmp.eq.s32.totalorder %s64, 0
      %p204 = por %p202, %p203
      %p205 = scmp.ne.s32.totalorder %s194, %s197
      %p206 = scmp.eq.s32.totalorder %s69, 1
      %p207 = por %p205, %p206
      %p208 = scmp.ne.s32.totalorder %s197, %s198
      %p209 = scmp.eq.s32.totalorder %s69, 0
      %p210 = por %p208, %p209
      %p211 = scmp.ne.s32.totalorder %s197, %s198
      %p212 = scmp.eq.s32.totalorder %s70, 1
      %p213 = por %p211, %p212
      %p215 = scmp.ne.s32.totalorder %s198, %s214
      %p216 = scmp.eq.s32.totalorder %s70, 0
      %p217 = por %p215, %p216
      %s218 = ssub.s32 %s64, %s71
      %p219 = scmp.eq.s32.totalorder %s218, 0
      %s221 = sadd.s32 %s220, 1
      %s222 = scalar_select %p219, %s220, %s221
      %p225 = pneg %p219
      %p226 = scmp.eq.s32.totalorder %s64, 1
      %p227 = por %p225, %p226
      %p228 = scmp.ne.s32.totalorder %s220, %s223
      %p229 = scmp.eq.s32.totalorder %s64, 0
      %p230 = por %p228, %p229
      %p231 = scmp.ne.s32.totalorder %s220, %s223
      %p232 = scmp.eq.s32.totalorder %s69, 1
      %p233 = por %p231, %p232
      %p234 = scmp.ne.s32.totalorder %s223, %s224
      %p235 = scmp.eq.s32.totalorder %s69, 0
      %p236 = por %p234, %p235
      %p237 = scmp.ne.s32.totalorder %s223, %s224
      %p238 = scmp.eq.s32.totalorder %s70, 1
      %p239 = por %p237, %p238
      %p241 = scmp.ne.s32.totalorder %s224, %s240
      %p242 = scmp.eq.s32.totalorder %s70, 0
      %p243 = por %p241, %p242
      %s244 = ssub.s32 %s64, %s71
      %p245 = scmp.eq.s32.totalorder %s244, 0
      %s247 = sadd.s32 %s246, 1
      %s248 = scalar_select %p245, %s246, %s247
      %p251 = pneg %p245
      %p252 = scmp.eq.s32.totalorder %s64, 1
      %p253 = por %p251, %p252
      %p254 = scmp.ne.s32.totalorder %s246, %s249
      %p255 = scmp.eq.s32.totalorder %s64, 0
      %p256 = por %p254, %p255
      %p257 = scmp.ne.s32.totalorder %s246, %s249
      %p258 = scmp.eq.s32.totalorder %s69, 1
      %p259 = por %p257, %p258
      %p260 = scmp.ne.s32.totalorder %s249, %s250
      %p261 = scmp.eq.s32.totalorder %s69, 0
      %p262 = por %p260, %p261
      %p263 = scmp.ne.s32.totalorder %s249, %s250
      %p264 = scmp.eq.s32.totalorder %s70, 1
      %p265 = por %p263, %p264
      %p267 = scmp.ne.s32.totalorder %s250, %s266
      %p268 = scmp.eq.s32.totalorder %s70, 0
      %p269 = por %p267, %p268
      %s270 = ssub.s32 %s64, %s71
      %p271 = scmp.eq.s32.totalorder %s270, 0
      %s273 = sadd.s32 %s272, 1
      %s274 = scalar_select %p271, %s272, %s273
      %p277 = pneg %p271
      %p278 = scmp.eq.s32.totalorder %s64, 1
      %p279 = por %p277, %p278
      %p280 = scmp.ne.s32.totalorder %s272, %s275
      %p281 = scmp.eq.s32.totalorder %s64, 0
      %p282 = por %p280, %p281
      %p283 = scmp.ne.s32.totalorder %s272, %s275
      %p284 = scmp.eq.s32.totalorder %s69, 1
      %p285 = por %p283, %p284
      %p286 = scmp.ne.s32.totalorder %s275, %s276
      %p287 = scmp.eq.s32.totalorder %s69, 0
      %p288 = por %p286, %p287
      %p289 = scmp.ne.s32.totalorder %s275, %s276
      %p290 = scmp.eq.s32.totalorder %s70, 1
      %p291 = por %p289, %p290
      %p293 = scmp.ne.s32.totalorder %s276, %s292
      %p294 = scmp.eq.s32.totalorder %s70, 0
      %p295 = por %p293, %p294
      %s296 = ssub.s32 %s64, %s71
      %p297 = scmp.eq.s32.totalorder %s296, 0
      %s299 = sadd.s32 %s298, 1
      %s300 = scalar_select %p297, %s298, %s299
      %p303 = pneg %p297
      %p304 = scmp.eq.s32.totalorder %s64, 1
      %p305 = por %p303, %p304
      %p306 = scmp.ne.s32.totalorder %s298, %s301
      %p307 = scmp.eq.s32.totalorder %s64, 0
      %p308 = por %p306, %p307
      %p309 = scmp.ne.s32.totalorder %s298, %s301
      %p310 = scmp.eq.s32.totalorder %s69, 1
      %p311 = por %p309, %p310
      %p312 = scmp.ne.s32.totalorder %s301, %s302
      %p313 = scmp.eq.s32.totalorder %s69, 0
      %p314 = por %p312, %p313
      %p315 = scmp.ne.s32.totalorder %s301, %s302
      %p316 = scmp.eq.s32.totalorder %s70, 1
      %p317 = por %p315, %p316
      %p319 = scmp.ne.s32.totalorder %s302, %s318
      %p320 = scmp.eq.s32.totalorder %s70, 0
      %p321 = por %p319, %p320
      %s322 = ssub.s32 %s64, %s71
      %p323 = scmp.eq.s32.totalorder %s322, 0
      %s325 = sadd.s32 %s324, 1
      %s326 = scalar_select %p323, %s324, %s325
      %p329 = pneg %p323
      %p330 = scmp.eq.s32.totalorder %s64, 1
      %p331 = por %p329, %p330
      %p332 = scmp.ne.s32.totalorder %s324, %s327
      %p333 = scmp.eq.s32.totalorder %s64, 0
      %p334 = por %p332, %p333
      %p335 = scmp.ne.s32.totalorder %s324, %s327
      %p336 = scmp.eq.s32.totalorder %s69, 1
      %p337 = por %p335, %p336
      %p338 = scmp.ne.s32.totalorder %s327, %s328
      %p339 = scmp.eq.s32.totalorder %s69, 0
      %p340 = por %p338, %p339
      %p341 = scmp.ne.s32.totalorder %s327, %s328
      %p342 = scmp.eq.s32.totalorder %s70, 1
      %p343 = por %p341, %p342
      %p345 = scmp.ne.s32.totalorder %s328, %s344
      %p346 = scmp.eq.s32.totalorder %s70, 0
      %p347 = por %p345, %p346
      %s348 = ssub.s32 %s64, %s71
      %p349 = scmp.eq.s32.totalorder %s348, 0
      %s351 = sadd.s32 %s350, 1
      %s352 = scalar_select %p349, %s350, %s351
      %p355 = pneg %p349
      %p356 = scmp.eq.s32.totalorder %s64, 1
      %p357 = por %p355, %p356
      %p358 = scmp.ne.s32.totalorder %s350, %s353
      %p359 = scmp.eq.s32.totalorder %s64, 0
      %p360 = por %p358, %p359
      %p361 = scmp.ne.s32.totalorder %s350, %s353
      %p362 = scmp.eq.s32.totalorder %s69, 1
      %p363 = por %p361, %p362
      %p364 = scmp.ne.s32.totalorder %s353, %s354
      %p365 = scmp.eq.s32.totalorder %s69, 0
      %p366 = por %p364, %p365
      %p367 = scmp.ne.s32.totalorder %s353, %s354
      %p368 = scmp.eq.s32.totalorder %s70, 1
      %p369 = por %p367, %p368
      %p371 = scmp.ne.s32.totalorder %s354, %s370
      %p372 = scmp.eq.s32.totalorder %s70, 0
      %p373 = por %p371, %p372
      %s374 = ssub.s32 %s64, %s71
      %p375 = scmp.eq.s32.totalorder %s374, 0
      %s377 = sadd.s32 %s376, 1
      %s378 = scalar_select %p375, %s376, %s377
      %p381 = pneg %p375
      %p382 = scmp.eq.s32.totalorder %s64, 1
      %p383 = por %p381, %p382
      %p384 = scmp.ne.s32.totalorder %s376, %s379
      %p385 = scmp.eq.s32.totalorder %s64, 0
      %p386 = por %p384, %p385
      %p387 = scmp.ne.s32.totalorder %s376, %s379
      %p388 = scmp.eq.s32.totalorder %s69, 1
      %p389 = por %p387, %p388
      %p390 = scmp.ne.s32.totalorder %s379, %s380
      %p391 = scmp.eq.s32.totalorder %s69, 0
      %p392 = por %p390, %p391
      %p393 = scmp.ne.s32.totalorder %s379, %s380
      %p394 = scmp.eq.s32.totalorder %s70, 1
      %p395 = por %p393, %p394
      %p397 = scmp.ne.s32.totalorder %s380, %s396
      %p398 = scmp.eq.s32.totalorder %s70, 0
      %p399 = por %p397, %p398
      %s400 = ssub.s32 %s64, %s71
      %p401 = scmp.eq.s32.totalorder %s400, 0
      %s403 = sadd.s32 %s402, 1
      %s404 = scalar_select %p401, %s402, %s403
      %p407 = pneg %p401
      %p408 = scmp.eq.s32.totalorder %s64, 1
      %p409 = por %p407, %p408
      %p410 = scmp.ne.s32.totalorder %s402, %s405
      %p411 = scmp.eq.s32.totalorder %s64, 0
      %p412 = por %p410, %p411
      %p413 = scmp.ne.s32.totalorder %s402, %s405
      %p414 = scmp.eq.s32.totalorder %s69, 1
      %p415 = por %p413, %p414
      %p416 = scmp.ne.s32.totalorder %s405, %s406
      %p417 = scmp.eq.s32.totalorder %s69, 0
      %p418 = por %p416, %p417
      %p419 = scmp.ne.s32.totalorder %s405, %s406
      %p420 = scmp.eq.s32.totalorder %s70, 1
      %p421 = por %p419, %p420
      %p423 = scmp.ne.s32.totalorder %s406, %s422
      %p424 = scmp.eq.s32.totalorder %s70, 0
      %p425 = por %p423, %p424
      %s426 = ssub.s32 %s64, %s71
      %p427 = scmp.eq.s32.totalorder %s426, 0
      %s429 = sadd.s32 %s428, 1
      %s430 = scalar_select %p427, %s428, %s429
      %p433 = pneg %p427
      %p434 = scmp.eq.s32.totalorder %s64, 1
      %p435 = por %p433, %p434
      %p436 = scmp.ne.s32.totalorder %s428, %s431
      %p437 = scmp.eq.s32.totalorder %s64, 0
      %p438 = por %p436, %p437
      %p439 = scmp.ne.s32.totalorder %s428, %s431
      %p440 = scmp.eq.s32.totalorder %s69, 1
      %p441 = por %p439, %p440
      %p442 = scmp.ne.s32.totalorder %s431, %s432
      %p443 = scmp.eq.s32.totalorder %s69, 0
      %p444 = por %p442, %p443
      %p445 = scmp.ne.s32.totalorder %s431, %s432
      %p446 = scmp.eq.s32.totalorder %s70, 1
      %p447 = por %p445, %p446
      %p449 = scmp.ne.s32.totalorder %s432, %s448
      %p450 = scmp.eq.s32.totalorder %s70, 0
      %p451 = por %p449, %p450
      %s452 = ssub.s32 %s64, %s71
      %p453 = scmp.eq.s32.totalorder %s452, 0
      %s455 = sadd.s32 %s454, 1
      %s456 = scalar_select %p453, %s454, %s455
      %p459 = pneg %p453
      %p460 = scmp.eq.s32.totalorder %s64, 1
      %p461 = por %p459, %p460
      %p462 = scmp.ne.s32.totalorder %s454, %s457
      %p463 = scmp.eq.s32.totalorder %s64, 0
      %p464 = por %p462, %p463
      %p465 = scmp.ne.s32.totalorder %s454, %s457
      %p466 = scmp.eq.s32.totalorder %s69, 1
      %p467 = por %p465, %p466
      %p468 = scmp.ne.s32.totalorder %s457, %s458
      %p469 = scmp.eq.s32.totalorder %s69, 0
      %p470 = por %p468, %p469
      %p471 = scmp.ne.s32.totalorder %s457, %s458
      %p472 = scmp.eq.s32.totalorder %s70, 1
      %p473 = por %p471, %p472
      %p475 = scmp.ne.s32.totalorder %s458, %s474
      %p476 = scmp.eq.s32.totalorder %s70, 0
      %p477 = por %p475, %p476
      %s478 = ssub.s32 %s64, %s71
      %p479 = scmp.eq.s32.totalorder %s478, 0
      %s481 = sadd.s32 %s480, 1
      %s482 = scalar_select %p479, %s480, %s481
      %p485 = pneg %p479
      %p486 = scmp.eq.s32.totalorder %s64, 1
      %p487 = por %p485, %p486
      %p488 = scmp.ne.s32.totalorder %s480, %s483
      %p489 = scmp.eq.s32.totalorder %s64, 0
      %p490 = por %p488, %p489
      %p491 = scmp.ne.s32.totalorder %s480, %s483
      %p492 = scmp.eq.s32.totalorder %s69, 1
      %p493 = por %p491, %p492
      %p494 = scmp.ne.s32.totalorder %s483, %s484
      %p495 = scmp.eq.s32.totalorder %s69, 0
      %p496 = por %p494, %p495
      %p497 = scmp.ne.s32.totalorder %s483, %s484
      %p498 = scmp.eq.s32.totalorder %s70, 1
      %p499 = por %p497, %p498
      %p501 = scmp.ne.s32.totalorder %s484, %s500
      %p502 = scmp.eq.s32.totalorder %s70, 0
      %p503 = por %p501, %p502
      %s504 = ssub.s32 %s64, %s71
      %p505 = scmp.eq.s32.totalorder %s504, 0
      %s507 = sadd.s32 %s506, 1
      %s508 = scalar_select %p505, %s506, %s507
      %p511 = pneg %p505
      %p512 = scmp.eq.s32.totalorder %s64, 1
      %p513 = por %p511, %p512
      %p514 = scmp.ne.s32.totalorder %s506, %s509
      %p515 = scmp.eq.s32.totalorder %s64, 0
      %p516 = por %p514, %p515
      %p517 = scmp.ne.s32.totalorder %s506, %s509
      %p518 = scmp.eq.s32.totalorder %s69, 1
      %p519 = por %p517, %p518
      %p520 = scmp.ne.s32.totalorder %s509, %s510
      %p521 = scmp.eq.s32.totalorder %s69, 0
      %p522 = por %p520, %p521
      %p523 = scmp.ne.s32.totalorder %s509, %s510
      %p524 = scmp.eq.s32.totalorder %s70, 1
      %p525 = por %p523, %p524
      %p527 = scmp.ne.s32.totalorder %s510, %s526
      %p528 = scmp.eq.s32.totalorder %s70, 0
      %p529 = por %p527, %p528
      %s531 = sadd.s32 %s530, 1
      %p534 = scmp.eq.s32.totalorder %s64, 1
      %p535 = scmp.ne.s32.totalorder %s530, %s532
      %p536 = scmp.eq.s32.totalorder %s64, 0
      %p537 = por %p535, %p536
      %p538 = scmp.ne.s32.totalorder %s530, %s532
      %p539 = scmp.eq.s32.totalorder %s69, 1
      %p540 = por %p538, %p539
      %p541 = scmp.ne.s32.totalorder %s532, %s533
      %p542 = scmp.eq.s32.totalorder %s69, 0
      %p543 = por %p541, %p542
      %p544 = scmp.ne.s32.totalorder %s532, %s533
      %p545 = scmp.eq.s32.totalorder %s70, 1
      %p546 = por %p544, %p545
      %p548 = scmp.ne.s32.totalorder %s533, %s547
      %p549 = scmp.eq.s32.totalorder %s70, 0
      %p550 = por %p548, %p549
      %s552 = sadd.s32 %s551, 1
      %p555 = scmp.eq.s32.totalorder %s64, 1
      %p556 = scmp.ne.s32.totalorder %s551, %s553
      %p557 = scmp.eq.s32.totalorder %s64, 0
      %p558 = por %p556, %p557
      %p559 = scmp.ne.s32.totalorder %s551, %s553
      %p560 = scmp.eq.s32.totalorder %s69, 1
      %p561 = por %p559, %p560
      %p562 = scmp.ne.s32.totalorder %s553, %s554
      %p563 = scmp.eq.s32.totalorder %s69, 0
      %p564 = por %p562, %p563
      %p565 = scmp.ne.s32.totalorder %s553, %s554
      %p566 = scmp.eq.s32.totalorder %s70, 1
      %p567 = por %p565, %p566
      %p569 = scmp.ne.s32.totalorder %s554, %s568
      %p570 = scmp.eq.s32.totalorder %s70, 0
      %p571 = por %p569, %p570
      %s573 = sadd.s32 %s572, 1
      %p576 = scmp.eq.s32.totalorder %s64, 1
      %p577 = scmp.ne.s32.totalorder %s572, %s574
      %p578 = scmp.eq.s32.totalorder %s64, 0
      %p579 = por %p577, %p578
      %p580 = scmp.ne.s32.totalorder %s572, %s574
      %p581 = scmp.eq.s32.totalorder %s69, 1
      %p582 = por %p580, %p581
      %p583 = scmp.ne.s32.totalorder %s574, %s575
      %p584 = scmp.eq.s32.totalorder %s69, 0
      %p585 = por %p583, %p584
      %p586 = scmp.ne.s32.totalorder %s574, %s575
      %p587 = scmp.eq.s32.totalorder %s70, 1
      %p588 = por %p586, %p587
      %p590 = scmp.ne.s32.totalorder %s575, %s589
      %p591 = scmp.eq.s32.totalorder %s70, 0
      %p592 = por %p590, %p591
      %s594 = sadd.s32 %s593, 1
      %p597 = scmp.eq.s32.totalorder %s64, 1
      %p598 = scmp.ne.s32.totalorder %s593, %s595
      %p599 = scmp.eq.s32.totalorder %s64, 0
      %p600 = por %p598, %p599
      %p601 = scmp.ne.s32.totalorder %s593, %s595
      %p602 = scmp.eq.s32.totalorder %s69, 1
      %p603 = por %p601, %p602
      %p604 = scmp.ne.s32.totalorder %s595, %s596
      %p605 = scmp.eq.s32.totalorder %s69, 0
      %p606 = por %p604, %p605
      %p607 = scmp.ne.s32.totalorder %s595, %s596
      %p608 = scmp.eq.s32.totalorder %s70, 1
      %p609 = por %p607, %p608
      %p611 = scmp.ne.s32.totalorder %s596, %s610
      %p612 = scmp.eq.s32.totalorder %s70, 0
      %p613 = por %p611, %p612
      %s615 = sadd.s32 %s614, 1
      %p618 = scmp.eq.s32.totalorder %s64, 1
      %p619 = scmp.ne.s32.totalorder %s614, %s616
      %p620 = scmp.eq.s32.totalorder %s64, 0
      %p621 = por %p619, %p620
      %p622 = scmp.ne.s32.totalorder %s614, %s616
      %p623 = scmp.eq.s32.totalorder %s69, 1
      %p624 = por %p622, %p623
      %p625 = scmp.ne.s32.totalorder %s616, %s617
      %p626 = scmp.eq.s32.totalorder %s69, 0
      %p627 = por %p625, %p626
      %p628 = scmp.ne.s32.totalorder %s616, %s617
      %p629 = scmp.eq.s32.totalorder %s70, 1
      %p630 = por %p628, %p629
      %p632 = scmp.ne.s32.totalorder %s617, %s631
      %p633 = scmp.eq.s32.totalorder %s70, 0
      %p634 = por %p632, %p633
      %s636 = sadd.s32 %s635, 1
      %p639 = scmp.eq.s32.totalorder %s64, 1
      %p640 = scmp.ne.s32.totalorder %s635, %s637
      %p641 = scmp.eq.s32.totalorder %s64, 0
      %p642 = por %p640, %p641
      %p643 = scmp.ne.s32.totalorder %s635, %s637
      %p644 = scmp.eq.s32.totalorder %s69, 1
      %p645 = por %p643, %p644
      %p646 = scmp.ne.s32.totalorder %s637, %s638
      %p647 = scmp.eq.s32.totalorder %s69, 0
      %p648 = por %p646, %p647
      %p649 = scmp.ne.s32.totalorder %s637, %s638
      %p650 = scmp.eq.s32.totalorder %s70, 1
      %p651 = por %p649, %p650
      %p653 = scmp.ne.s32.totalorder %s638, %s652
      %p654 = scmp.eq.s32.totalorder %s70, 0
      %p655 = por %p653, %p654
      %s657 = sadd.s32 %s656, 1
      %p660 = scmp.eq.s32.totalorder %s64, 1
      %p661 = scmp.ne.s32.totalorder %s656, %s658
      %p662 = scmp.eq.s32.totalorder %s64, 0
      %p663 = por %p661, %p662
      %p664 = scmp.ne.s32.totalorder %s656, %s658
      %p665 = scmp.eq.s32.totalorder %s69, 1
      %p666 = por %p664, %p665
      %p667 = scmp.ne.s32.totalorder %s658, %s659
      %p668 = scmp.eq.s32.totalorder %s69, 0
      %p669 = por %p667, %p668
      %p670 = scmp.ne.s32.totalorder %s658, %s659
      %p671 = scmp.eq.s32.totalorder %s70, 1
      %p672 = por %p670, %p671
      %p674 = scmp.ne.s32.totalorder %s659, %s673
      %p675 = scmp.eq.s32.totalorder %s70, 0
      %p676 = por %p674, %p675
      %s678 = sadd.s32 %s677, 1
      %p681 = scmp.eq.s32.totalorder %s64, 1
      %p682 = scmp.ne.s32.totalorder %s677, %s679
      %p683 = scmp.eq.s32.totalorder %s64, 0
      %p684 = por %p682, %p683
      %p685 = scmp.ne.s32.totalorder %s677, %s679
      %p686 = scmp.eq.s32.totalorder %s69, 1
      %p687 = por %p685, %p686
      %p688 = scmp.ne.s32.totalorder %s679, %s680
      %p689 = scmp.eq.s32.totalorder %s69, 0
      %p690 = por %p688, %p689
      %p691 = scmp.ne.s32.totalorder %s679, %s680
      %p692 = scmp.eq.s32.totalorder %s70, 1
      %p693 = por %p691, %p692
      %p695 = scmp.ne.s32.totalorder %s680, %s694
      %p696 = scmp.eq.s32.totalorder %s70, 0
      %p697 = por %p695, %p696
      %s699 = sadd.s32 %s698, 1
      %p702 = scmp.eq.s32.totalorder %s64, 1
      %p703 = scmp.ne.s32.totalorder %s698, %s700
      %p704 = scmp.eq.s32.totalorder %s64, 0
      %p705 = por %p703, %p704
      %p706 = scmp.ne.s32.totalorder %s698, %s700
      %p707 = scmp.eq.s32.totalorder %s69, 1
      %p708 = por %p706, %p707
      %p709 = scmp.ne.s32.totalorder %s700, %s701
      %p710 = scmp.eq.s32.totalorder %s69, 0
      %p711 = por %p709, %p710
      %p712 = scmp.ne.s32.totalorder %s700, %s701
      %p713 = scmp.eq.s32.totalorder %s70, 1
      %p714 = por %p712, %p713
      %p716 = scmp.ne.s32.totalorder %s701, %s715
      %p717 = scmp.eq.s32.totalorder %s70, 0
      %p718 = por %p716, %p717
      %p719 = scmp.le.s32.totalorder 1, %s64
      %p720 = scmp.lt.s32.totalorder %s64, 3
      %p721 = pnand %p719, %p720
      %p722 = pneg %p721
      // Predicated region
      $region9: #{llm_forward.1} parent=5 // pred_check
        _
      $region10: #{llm_forward.1} parent=5 // pred_check_branch
        %724 = sbr.rel (%p721) target = $region12
      $region11: #{llm_forward.1} parent=5 // pred_region
        %s725 = ssub.s32 %s64, 1
        // Predicated region
        $region13: #{llm_forward.1} parent=11 // pred_check
          %p726 = pneg %p85
        $region14: #{llm_forward.1} parent=11 // pred_check_branch
          %728 = sbr.rel (%p726) target = $region16
        $region15: #{llm_forward.1} parent=11 // pred_region
          %730 = vsyncadd [#allocation7], 0
          %s731 = sshll.u32 %s2, 4
          %s732 = int_to_ptr.hbm [resolvable:$true] %s731
          %s733 = sshll.u32 [#allocation6], 4
          %s734 = int_to_ptr.vmem [resolvable:$true] %s733
          %739 = dma.hbm_to_vmem [thread:$0]  %s732, 4096, %s734, [#allocation7], 128, 128, 8
        $region16: #{llm_forward.1} parent=11 // pred_fallthru
          _
        // Predicated region
        $region17: #{llm_forward.1} parent=11 // pred_check
          %p740 = pneg %p106
        $region18: #{llm_forward.1} parent=11 // pred_check_branch
          %742 = sbr.rel (%p740) target = $region20
        $region19: #{llm_forward.1} parent=11 // pred_region
          _
        $region20: #{llm_forward.1} parent=11 // pred_fallthru
          _
        // Predicated region
        $region21: #{llm_forward.1} parent=11 // pred_check
          %p743 = pneg %p543
        $region22: #{llm_forward.1} parent=11 // pred_check_branch
          %745 = sbr.rel (%p743) target = $region24
        $region23: #{llm_forward.1} parent=11 // pred_region
          _
        $region24: #{llm_forward.1} parent=11 // pred_fallthru
          _
        // Predicated region
        $region25: #{llm_forward.1} parent=11 // pred_check
          %p746 = pneg %p564
        $region26: #{llm_forward.1} parent=11 // pred_check_branch
          %748 = sbr.rel (%p746) target = $region28
        $region27: #{llm_forward.1} parent=11 // pred_region
          %750 = vsyncadd [#allocation25], 0
          %s752 = sshll.u32 %s21, 4
          %s753 = int_to_ptr.hbm [resolvable:$true] %s752
          %s754 = sshll.u32 [#allocation24], 4
          %s755 = int_to_ptr.vmem [resolvable:$true] %s754
          %757 = dma.hbm_to_vmem [thread:$0]  %s753, 16, %s755, [#allocation25]
        $region28: #{llm_forward.1} parent=11 // pred_fallthru
          _
        // Predicated region
        $region29: #{llm_forward.1} parent=11 // pred_check
          %p758 = pneg %p585
        $region30: #{llm_forward.1} parent=11 // pred_check_branch
          %760 = sbr.rel (%p758) target = $region32
        $region31: #{llm_forward.1} parent=11 // pred_region
          %762 = vsyncadd [#allocation25], 0
          %s763 = sshll.u32 %s22, 4
          %s764 = int_to_ptr.hbm [resolvable:$true] %s763
          %s765 = sshll.u32 [#allocation26], 4
          %s766 = int_to_ptr.vmem [resolvable:$true] %s765
          %771 = dma.hbm_to_vmem [thread:$0]  %s764, 1024, %s766, [#allocation25], 64, 64, 4
        $region32: #{llm_forward.1} parent=11 // pred_fallthru
          _
        // Predicated region
        $region33: #{llm_forward.1} parent=11 // pred_check
          %p772 = pneg %p606
        $region34: #{llm_forward.1} parent=11 // pred_check_branch
          %774 = sbr.rel (%p772) target = $region36
        $region35: #{llm_forward.1} parent=11 // pred_region
          %776 = vsyncadd [#allocation28], 0
          %s778 = sshll.u32 %s23, 4
          %s779 = int_to_ptr.hbm [resolvable:$true] %s778
          %s780 = sshll.u32 [#allocation27], 4
          %s781 = int_to_ptr.vmem [resolvable:$true] %s780
          %783 = dma.hbm_to_vmem [thread:$0]  %s779, 16, %s781, [#allocation28]
        $region36: #{llm_forward.1} parent=11 // pred_fallthru
          _
        // Predicated region
        $region37: #{llm_forward.1} parent=11 // pred_check
          %p784 = pneg %p627
        $region38: #{llm_forward.1} parent=11 // pred_check_branch
          %786 = sbr.rel (%p784) target = $region40
        $region39: #{llm_forward.1} parent=11 // pred_region
          %788 = vsyncadd [#allocation28], 0
          %s790 = sshll.u32 %s24, 4
          %s791 = int_to_ptr.hbm [resolvable:$true] %s790
          %s792 = sshll.u32 [#allocation29], 4
          %s793 = int_to_ptr.vmem [resolvable:$true] %s792
          %795 = dma.hbm_to_vmem [thread:$0]  %s791, 16, %s793, [#allocation28]
        $region40: #{llm_forward.1} parent=11 // pred_fallthru
          _
        // Predicated region
        $region41: #{llm_forward.1} parent=11 // pred_check
          %p796 = pneg %p648
        $region42: #{llm_forward.1} parent=11 // pred_check_branch
          %798 = sbr.rel (%p796) target = $region44
        $region43: #{llm_forward.1} parent=11 // pred_region
          %800 = vsyncadd [#allocation31], 0
          %s802 = sshll.u32 %s25, 4
          %s803 = int_to_ptr.hbm [resolvable:$true] %s802
          %s804 = sshll.u32 [#allocation30], 4
          %s805 = int_to_ptr.vmem [resolvable:$true] %s804
          %807 = dma.hbm_to_vmem [thread:$0]  %s803, 16, %s805, [#allocation31]
        $region44: #{llm_forward.1} parent=11 // pred_fallthru
          _
        // Predicated region
        $region45: #{llm_forward.1} parent=11 // pred_check
          %p808 = pneg %p669
        $region46: #{llm_forward.1} parent=11 // pred_check_branch
          %810 = sbr.rel (%p808) target = $region48
        $region47: #{llm_forward.1} parent=11 // pred_region
          %812 = vsyncadd [#allocation31], 0
          %s813 = sshll.u32 %s26, 4
          %s814 = int_to_ptr.hbm [resolvable:$true] %s813
          %s815 = sshll.u32 [#allocation32], 4
          %s816 = int_to_ptr.vmem [resolvable:$true] %s815
          %821 = dma.hbm_to_vmem [thread:$0]  %s814, 2048, %s816, [#allocation31], 128, 128, 8
        $region48: #{llm_forward.1} parent=11 // pred_fallthru
          _
        // Predicated region
        $region49: #{llm_forward.1} parent=11 // pred_check
          %p822 = pneg %p690
        $region50: #{llm_forward.1} parent=11 // pred_check_branch
          %824 = sbr.rel (%p822) target = $region52
        $region51: #{llm_forward.1} parent=11 // pred_region
          %826 = vsyncadd [#allocation34], 0
          %s828 = sshll.u32 %s27, 4
          %s829 = int_to_ptr.hbm [resolvable:$true] %s828
          %s830 = sshll.u32 [#allocation33], 4
          %s831 = int_to_ptr.vmem [resolvable:$true] %s830
          %833 = dma.hbm_to_vmem [thread:$0]  %s829, 32, %s831, [#allocation34]
        $region52: #{llm_forward.1} parent=11 // pred_fallthru
          _
      $region12: #{llm_forward.1} parent=5 // pred_fallthru
        _
      %p834 = scmp.lt.s32.totalorder %s64, 2
      // Predicated region
      $region53: #{llm_forward.1} parent=5 // pred_check
        %p835 = pneg %p834
      $region54: #{llm_forward.1} parent=5 // pred_check_branch
        %837 = sbr.rel (%p835) target = $region56
      $region55: #{llm_forward.1} parent=5 // pred_region
        // Predicated region
        $region57: #{llm_forward.1} parent=55 // pred_check
          %p838 = pneg %p126
        $region58: #{llm_forward.1} parent=55 // pred_check_branch
          %840 = sbr.rel (%p838) target = $region60
        $region59: #{llm_forward.1} parent=55 // pred_region
          %s841 = sand.u32 %s64, 1
          %s842 = scalar_lea.sflag [#allocation10], %s841
          %s843 = sand.u32 %s116, 1
          %s844 = smul.addr %s843, 64
          %s845 = scalar_lea.vmem [#allocation9], %s844
          %847 = vsyncadd %s842, 0
          %s848 = smul.addr %s64, 16
          %s849 = smul.addr %s848, 4
          %s850 = scalar_lea.hbm %s4, %s849
          %s851 = sshll.u32 %s850, 4
          %s852 = int_to_ptr.hbm [resolvable:$true] %s851
          %s853 = sshll.u32 %s845, 4
          %s854 = int_to_ptr.vmem [resolvable:$true] %s853
          %859 = dma.hbm_to_vmem [thread:$0]  %s852, 1024, %s854, %s842, 64, 64, 4
        $region60: #{llm_forward.1} parent=55 // pred_fallthru
          _
        // Predicated region
        $region61: #{llm_forward.1} parent=55 // pred_check
          %p860 = pneg %p152
        $region62: #{llm_forward.1} parent=55 // pred_check_branch
          %862 = sbr.rel (%p860) target = $region64
        $region63: #{llm_forward.1} parent=55 // pred_region
          %p863 = scmp.lt.s32.totalorder %s64, 1
          %s864 = scalar_select %p863, %s64, 1
          %s865 = scalar_lea.vmem %s5, %s864
        $region64: #{llm_forward.1} parent=55 // pred_fallthru
          _
        // Predicated region
        $region65: #{llm_forward.1} parent=55 // pred_check
          %p866 = pneg %p178
        $region66: #{llm_forward.1} parent=55 // pred_check_branch
          %868 = sbr.rel (%p866) target = $region68
        $region67: #{llm_forward.1} parent=55 // pred_region
          %s869 = sand.u32 %s64, 1
          %s870 = scalar_lea.sflag [#allocation10], %s869
          %s871 = sand.u32 %s168, 1
          %s872 = smul.addr %s871, 64
          %s873 = scalar_lea.vmem [#allocation11], %s872
          %875 = vsyncadd %s870, 0
          %s876 = smul.addr %s64, 16
          %s877 = smul.addr %s876, 4
          %s878 = scalar_lea.hbm %s6, %s877
          %s879 = sshll.u32 %s878, 4
          %s880 = int_to_ptr.hbm [resolvable:$true] %s879
          %s881 = sshll.u32 %s873, 4
          %s882 = int_to_ptr.vmem [resolvable:$true] %s881
          %887 = dma.hbm_to_vmem [thread:$0]  %s880, 1024, %s882, %s870, 64, 64, 4
        $region68: #{llm_forward.1} parent=55 // pred_fallthru
          _
        // Predicated region
        $region69: #{llm_forward.1} parent=55 // pred_check
          %p888 = pneg %p204
        $region70: #{llm_forward.1} parent=55 // pred_check_branch
          %890 = sbr.rel (%p888) target = $region72
        $region71: #{llm_forward.1} parent=55 // pred_region
          %s891 = sand.u32 %s64, 1
          %s892 = scalar_lea.sflag [#allocation13], %s891
          %s893 = sand.u32 %s194, 1
          %s894 = scalar_lea.vmem [#allocation12], %s893
          %896 = vsyncadd %s892, 0
          %s897 = scalar_lea.hbm %s7, %s64
          %s899 = sshll.u32 %s897, 4
          %s900 = int_to_ptr.hbm [resolvable:$true] %s899
          %s901 = sshll.u32 %s894, 4
          %s902 = int_to_ptr.vmem [resolvable:$true] %s901
          %904 = dma.hbm_to_vmem [thread:$0]  %s900, 16, %s902, %s892
        $region72: #{llm_forward.1} parent=55 // pred_fallthru
          _
        // Predicated region
        $region73: #{llm_forward.1} parent=55 // pred_check
          %p905 = pneg %p230
        $region74: #{llm_forward.1} parent=55 // pred_check_branch
          %907 = sbr.rel (%p905) target = $region76
        $region75: #{llm_forward.1} parent=55 // pred_region
          %s908 = sand.u32 %s64, 1
          %s909 = scalar_lea.sflag [#allocation13], %s908
          %s910 = sand.u32 %s220, 1
          %s911 = smul.addr %s910, 64
          %s912 = scalar_lea.vmem [#allocation14], %s911
          %914 = vsyncadd %s909, 0
          %s915 = smul.addr %s64, 16
          %s916 = smul.addr %s915, 4
          %s917 = scalar_lea.hbm %s8, %s916
          %s918 = sshll.u32 %s917, 4
          %s919 = int_to_ptr.hbm [resolvable:$true] %s918
          %s920 = sshll.u32 %s912, 4
          %s921 = int_to_ptr.vmem [resolvable:$true] %s920
          %926 = dma.hbm_to_vmem [thread:$0]  %s919, 1024, %s921, %s909, 64, 64, 4
        $region76: #{llm_forward.1} parent=55 // pred_fallthru
          _
        // Predicated region
        $region77: #{llm_forward.1} parent=55 // pred_check
          %p927 = pneg %p256
        $region78: #{llm_forward.1} parent=55 // pred_check_branch
          %929 = sbr.rel (%p927) target = $region80
        $region79: #{llm_forward.1} parent=55 // pred_region
          %s930 = sand.u32 %s64, 1
          %s931 = scalar_lea.sflag [#allocation16], %s930
          %s932 = sand.u32 %s246, 1
          %s933 = scalar_lea.vmem [#allocation15], %s932
          %935 = vsyncadd %s931, 0
          %s936 = scalar_lea.hbm %s9, %s64
          %s938 = sshll.u32 %s936, 4
          %s939 = int_to_ptr.hbm [resolvable:$true] %s938
          %s940 = sshll.u32 %s933, 4
          %s941 = int_to_ptr.vmem [resolvable:$true] %s940
          %943 = dma.hbm_to_vmem [thread:$0]  %s939, 16, %s941, %s931
        $region80: #{llm_forward.1} parent=55 // pred_fallthru
          _
        // Predicated region
        $region81: #{llm_forward.1} parent=55 // pred_check
          %p944 = pneg %p282
        $region82: #{llm_forward.1} parent=55 // pred_check_branch
          %946 = sbr.rel (%p944) target = $region84
        $region83: #{llm_forward.1} parent=55 // pred_region
          %s947 = sand.u32 %s64, 1
          %s948 = scalar_lea.sflag [#allocation16], %s947
          %s949 = sand.u32 %s272, 1
          %s950 = smul.addr %s949, 64
          %s951 = scalar_lea.vmem [#allocation17], %s950
          %953 = vsyncadd %s948, 0
          %s954 = smul.addr %s64, 16
          %s955 = smul.addr %s954, 4
          %s956 = scalar_lea.hbm %s10, %s955
          %s957 = sshll.u32 %s956, 4
          %s958 = int_to_ptr.hbm [resolvable:$true] %s957
          %s959 = sshll.u32 %s951, 4
          %s960 = int_to_ptr.vmem [resolvable:$true] %s959
          %965 = dma.hbm_to_vmem [thread:$0]  %s958, 1024, %s960, %s948, 64, 64, 4
        $region84: #{llm_forward.1} parent=55 // pred_fallthru
          _
        // Predicated region
        $region85: #{llm_forward.1} parent=55 // pred_check
          %p966 = pneg %p308
        $region86: #{llm_forward.1} parent=55 // pred_check_branch
          %968 = sbr.rel (%p966) target = $region88
        $region87: #{llm_forward.1} parent=55 // pred_region
          %p969 = scmp.lt.s32.totalorder %s64, 1
          %s970 = scalar_select %p969, %s64, 1
          %s971 = scalar_lea.vmem %s11, %s970
        $region88: #{llm_forward.1} parent=55 // pred_fallthru
          _
        // Predicated region
        $region89: #{llm_forward.1} parent=55 // pred_check
          %p972 = pneg %p334
        $region90: #{llm_forward.1} parent=55 // pred_check_branch
          %974 = sbr.rel (%p972) target = $region92
        $region91: #{llm_forward.1} parent=55 // pred_region
          %p975 = scmp.lt.s32.totalorder %s64, 1
          %s976 = scalar_select %p975, %s64, 1
          %s977 = scalar_lea.vmem %s12, %s976
        $region92: #{llm_forward.1} parent=55 // pred_fallthru
          _
        // Predicated region
        $region93: #{llm_forward.1} parent=55 // pred_check
          %p978 = pneg %p360
        $region94: #{llm_forward.1} parent=55 // pred_check_branch
          %980 = sbr.rel (%p978) target = $region96
        $region95: #{llm_forward.1} parent=55 // pred_region
          %s981 = sand.u32 %s64, 1
          %s982 = scalar_lea.sflag [#allocation19], %s981
          %s983 = sand.u32 %s350, 1
          %s984 = scalar_lea.vmem [#allocation18], %s983
          %986 = vsyncadd %s982, 0
          %s987 = scalar_lea.hbm %s13, %s64
          %s989 = sshll.u32 %s987, 4
          %s990 = int_to_ptr.hbm [resolvable:$true] %s989
          %s991 = sshll.u32 %s984, 4
          %s992 = int_to_ptr.vmem [resolvable:$true] %s991
          %994 = dma.hbm_to_vmem [thread:$0]  %s990, 16, %s992, %s982
        $region96: #{llm_forward.1} parent=55 // pred_fallthru
          _
        // Predicated region
        $region97: #{llm_forward.1} parent=55 // pred_check
          %p995 = pneg %p386
        $region98: #{llm_forward.1} parent=55 // pred_check_branch
          %997 = sbr.rel (%p995) target = $region100
        $region99: #{llm_forward.1} parent=55 // pred_region
          %p998 = scmp.lt.s32.totalorder %s64, 1
          %s999 = scalar_select %p998, %s64, 1
          %s1000 = scalar_lea.vmem %s14, %s999
        $region100: #{llm_forward.1} parent=55 // pred_fallthru
          _
        // Predicated region
        $region101: #{llm_forward.1} parent=55 // pred_check
          %p1001 = pneg %p412
        $region102: #{llm_forward.1} parent=55 // pred_check_branch
          %1003 = sbr.rel (%p1001) target = $region104
        $region103: #{llm_forward.1} parent=55 // pred_region
          %s1004 = sand.u32 %s64, 1
          %s1005 = scalar_lea.sflag [#allocation19], %s1004
          %s1006 = sand.u32 %s402, 1
          %s1007 = scalar_lea.vmem [#allocation20], %s1006
          %1009 = vsyncadd %s1005, 0
          %s1010 = scalar_lea.hbm %s15, %s64
          %s1012 = sshll.u32 %s1010, 4
          %s1013 = int_to_ptr.hbm [resolvable:$true] %s1012
          %s1014 = sshll.u32 %s1007, 4
          %s1015 = int_to_ptr.vmem [resolvable:$true] %s1014
          %1017 = dma.hbm_to_vmem [thread:$0]  %s1013, 16, %s1015, %s1005
        $region104: #{llm_forward.1} parent=55 // pred_fallthru
          _
        // Predicated region
        $region105: #{llm_forward.1} parent=55 // pred_check
          %p1018 = pneg %p438
        $region106: #{llm_forward.1} parent=55 // pred_check_branch
          %1020 = sbr.rel (%p1018) target = $region108
        $region107: #{llm_forward.1} parent=55 // pred_region
          %s1021 = sand.u32 %s64, 1
          %s1022 = scalar_lea.sflag [#allocation22], %s1021
          %s1023 = sand.u32 %s428, 1
          %s1024 = smul.addr %s1023, 128
          %s1025 = scalar_lea.vmem [#allocation21], %s1024
          %1027 = vsyncadd %s1022, 0
          %s1028 = smul.addr %s64, 32
          %s1029 = smul.addr %s1028, 4
          %s1030 = scalar_lea.hbm %s16, %s1029
          %s1031 = sshll.u32 %s1030, 4
          %s1032 = int_to_ptr.hbm [resolvable:$true] %s1031
          %s1033 = sshll.u32 %s1025, 4
          %s1034 = int_to_ptr.vmem [resolvable:$true] %s1033
          %1039 = dma.hbm_to_vmem [thread:$0]  %s1032, 2048, %s1034, %s1022, 128, 128, 8
        $region108: #{llm_forward.1} parent=55 // pred_fallthru
          _
        // Predicated region
        $region109: #{llm_forward.1} parent=55 // pred_check
          %p1040 = pneg %p464
        $region110: #{llm_forward.1} parent=55 // pred_check_branch
          %1042 = sbr.rel (%p1040) target = $region112
        $region111: #{llm_forward.1} parent=55 // pred_region
          %p1043 = scmp.lt.s32.totalorder %s64, 1
          %s1044 = scalar_select %p1043, %s64, 1
          %s1045 = smul.addr %s1044, 2
          %s1046 = scalar_lea.vmem %s17, %s1045
        $region112: #{llm_forward.1} parent=55 // pred_fallthru
          _
        // Predicated region
        $region113: #{llm_forward.1} parent=55 // pred_check
          %p1047 = pneg %p490
        $region114: #{llm_forward.1} parent=55 // pred_check_branch
          %1049 = sbr.rel (%p1047) target = $region116
        $region115: #{llm_forward.1} parent=55 // pred_region
          %s1050 = sand.u32 %s64, 1
          %s1051 = scalar_lea.sflag [#allocation22], %s1050
          %s1052 = sand.u32 %s480, 1
          %s1053 = smul.addr %s1052, 128
          %s1054 = scalar_lea.vmem [#allocation23], %s1053
          %1056 = vsyncadd %s1051, 0
          %s1057 = smul.addr %s64, 32
          %s1058 = smul.addr %s1057, 4
          %s1059 = scalar_lea.hbm %s18, %s1058
          %s1060 = sshll.u32 %s1059, 4
          %s1061 = int_to_ptr.hbm [resolvable:$true] %s1060
          %s1062 = sshll.u32 %s1054, 4
          %s1063 = int_to_ptr.vmem [resolvable:$true] %s1062
          %1068 = dma.hbm_to_vmem [thread:$0]  %s1061, 2048, %s1063, %s1051, 64, 64, 4
        $region116: #{llm_forward.1} parent=55 // pred_fallthru
          _
        // Predicated region
        $region117: #{llm_forward.1} parent=55 // pred_check
          %p1069 = pneg %p516
        $region118: #{llm_forward.1} parent=55 // pred_check_branch
          %1071 = sbr.rel (%p1069) target = $region120
        $region119: #{llm_forward.1} parent=55 // pred_region
          %p1072 = scmp.lt.s32.totalorder %s64, 1
          %s1073 = scalar_select %p1072, %s64, 1
          %s1074 = scalar_lea.vmem %s19, %s1073
        $region120: #{llm_forward.1} parent=55 // pred_fallthru
          _
      $region56: #{llm_forward.1} parent=5 // pred_fallthru
        _
      %p1075 = scmp.le.s32.totalorder 1, %s64
      %p1076 = scmp.lt.s32.totalorder %s64, 3
      %p1077 = pnand %p1075, %p1076
      %p1078 = pneg %p1077
      // Predicated region
      $region121: #{llm_forward.1} parent=5 // pred_check
        _
      $region122: #{llm_forward.1} parent=5 // pred_check_branch
        %1080 = sbr.rel (%p1077) target = $region124
      $region123: #{llm_forward.1} parent=5 // pred_region
        %s1081 = ssub.s32 %s64, 1
        // Predicated region
        $region125: #{llm_forward.1} parent=123 // pred_check
          %p1082 = pneg %p85
        $region126: #{llm_forward.1} parent=123 // pred_check_branch
          %1084 = sbr.rel (%p1082) target = $region128
        $region127: #{llm_forward.1} parent=123 // pred_region
          %1086 = dma.done [#allocation7], 4096
        $region128: #{llm_forward.1} parent=123 // pred_fallthru
          _
        %s1087 = sand.u32 %s69, 1
        %s1088 = scalar_lea.sflag [#allocation10], %s1087
        %s1089 = sand.u32 %s119, 1
        %s1090 = smul.addr %s1089, 64
        %s1091 = scalar_lea.vmem [#allocation9], %s1090
        // Predicated region
        $region129: #{llm_forward.1} parent=123 // pred_check
          %p1092 = pneg %p132
        $region130: #{llm_forward.1} parent=123 // pred_check_branch
          %1094 = sbr.rel (%p1092) target = $region132
        $region131: #{llm_forward.1} parent=123 // pred_region
          %1096 = dma.done %s1088, 1024
        $region132: #{llm_forward.1} parent=123 // pred_fallthru
          _
        %s1097 = sand.u32 %s69, 1
        %s1098 = scalar_lea.sflag [#allocation10], %s1097
        %s1099 = sand.u32 %s171, 1
        %s1100 = smul.addr %s1099, 64
        %s1101 = scalar_lea.vmem [#allocation11], %s1100
        // Predicated region
        $region133: #{llm_forward.1} parent=123 // pred_check
          %p1102 = pneg %p184
        $region134: #{llm_forward.1} parent=123 // pred_check_branch
          %1104 = sbr.rel (%p1102) target = $region136
        $region135: #{llm_forward.1} parent=123 // pred_region
          %1106 = dma.done %s1098, 1024
        $region136: #{llm_forward.1} parent=123 // pred_fallthru
          _
        %s1107 = sand.u32 %s69, 1
        %s1108 = scalar_lea.sflag [#allocation13], %s1107
        %s1109 = sand.u32 %s197, 1
        %s1110 = scalar_lea.vmem [#allocation12], %s1109
        // Predicated region
        $region137: #{llm_forward.1} parent=123 // pred_check
          %p1111 = pneg %p210
        $region138: #{llm_forward.1} parent=123 // pred_check_branch
          %1113 = sbr.rel (%p1111) target = $region140
        $region139: #{llm_forward.1} parent=123 // pred_region
          %1115 = dma.done %s1108, 16
        $region140: #{llm_forward.1} parent=123 // pred_fallthru
          _
        %s1116 = sand.u32 %s69, 1
        %s1117 = scalar_lea.sflag [#allocation13], %s1116
        %s1118 = sand.u32 %s223, 1
        %s1119 = smul.addr %s1118, 64
        %s1120 = scalar_lea.vmem [#allocation14], %s1119
        // Predicated region
        $region141: #{llm_forward.1} parent=123 // pred_check
          %p1121 = pneg %p236
        $region142: #{llm_forward.1} parent=123 // pred_check_branch
          %1123 = sbr.rel (%p1121) target = $region144
        $region143: #{llm_forward.1} parent=123 // pred_region
          %1125 = dma.done %s1117, 1024
        $region144: #{llm_forward.1} parent=123 // pred_fallthru
          _
        %s1126 = sand.u32 %s69, 1
        %s1127 = scalar_lea.sflag [#allocation16], %s1126
        %s1128 = sand.u32 %s249, 1
        %s1129 = scalar_lea.vmem [#allocation15], %s1128
        // Predicated region
        $region145: #{llm_forward.1} parent=123 // pred_check
          %p1130 = pneg %p262
        $region146: #{llm_forward.1} parent=123 // pred_check_branch
          %1132 = sbr.rel (%p1130) target = $region148
        $region147: #{llm_forward.1} parent=123 // pred_region
          %1134 = dma.done %s1127, 16
        $region148: #{llm_forward.1} parent=123 // pred_fallthru
          _
        %s1135 = sand.u32 %s69, 1
        %s1136 = scalar_lea.sflag [#allocation16], %s1135
        %s1137 = sand.u32 %s275, 1
        %s1138 = smul.addr %s1137, 64
        %s1139 = scalar_lea.vmem [#allocation17], %s1138
        // Predicated region
        $region149: #{llm_forward.1} parent=123 // pred_check
          %p1140 = pneg %p288
        $region150: #{llm_forward.1} parent=123 // pred_check_branch
          %1142 = sbr.rel (%p1140) target = $region152
        $region151: #{llm_forward.1} parent=123 // pred_region
          %1144 = dma.done %s1136, 1024
        $region152: #{llm_forward.1} parent=123 // pred_fallthru
          _
        %s1145 = sand.u32 %s69, 1
        %s1146 = scalar_lea.sflag [#allocation19], %s1145
        %s1147 = sand.u32 %s353, 1
        %s1148 = scalar_lea.vmem [#allocation18], %s1147
        // Predicated region
        $region153: #{llm_forward.1} parent=123 // pred_check
          %p1149 = pneg %p366
        $region154: #{llm_forward.1} parent=123 // pred_check_branch
          %1151 = sbr.rel (%p1149) target = $region156
        $region155: #{llm_forward.1} parent=123 // pred_region
          %1153 = dma.done %s1146, 16
        $region156: #{llm_forward.1} parent=123 // pred_fallthru
          _
        %s1154 = sand.u32 %s69, 1
        %s1155 = scalar_lea.sflag [#allocation19], %s1154
        %s1156 = sand.u32 %s405, 1
        %s1157 = scalar_lea.vmem [#allocation20], %s1156
        // Predicated region
        $region157: #{llm_forward.1} parent=123 // pred_check
          %p1158 = pneg %p418
        $region158: #{llm_forward.1} parent=123 // pred_check_branch
          %1160 = sbr.rel (%p1158) target = $region160
        $region159: #{llm_forward.1} parent=123 // pred_region
          %1162 = dma.done %s1155, 16
        $region160: #{llm_forward.1} parent=123 // pred_fallthru
          _
        %s1163 = sand.u32 %s69, 1
        %s1164 = scalar_lea.sflag [#allocation22], %s1163
        %s1165 = sand.u32 %s431, 1
        %s1166 = smul.addr %s1165, 128
        %s1167 = scalar_lea.vmem [#allocation21], %s1166
        // Predicated region
        $region161: #{llm_forward.1} parent=123 // pred_check
          %p1168 = pneg %p444
        $region162: #{llm_forward.1} parent=123 // pred_check_branch
          %1170 = sbr.rel (%p1168) target = $region164
        $region163: #{llm_forward.1} parent=123 // pred_region
          %1172 = dma.done %s1164, 2048
        $region164: #{llm_forward.1} parent=123 // pred_fallthru
          _
        %s1173 = sand.u32 %s69, 1
        %s1174 = scalar_lea.sflag [#allocation22], %s1173
        %s1175 = sand.u32 %s483, 1
        %s1176 = smul.addr %s1175, 128
        %s1177 = scalar_lea.vmem [#allocation23], %s1176
        // Predicated region
        $region165: #{llm_forward.1} parent=123 // pred_check
          %p1178 = pneg %p496
        $region166: #{llm_forward.1} parent=123 // pred_check_branch
          %1180 = sbr.rel (%p1178) target = $region168
        $region167: #{llm_forward.1} parent=123 // pred_region
          %1182 = dma.done %s1174, 2048
        $region168: #{llm_forward.1} parent=123 // pred_fallthru
          _
        // Predicated region
        $region169: #{llm_forward.1} parent=123 // pred_check
          %p1183 = pneg %p564
        $region170: #{llm_forward.1} parent=123 // pred_check_branch
          %1185 = sbr.rel (%p1183) target = $region172
        $region171: #{llm_forward.1} parent=123 // pred_region
          %1187 = dma.done [#allocation25], 16
        $region172: #{llm_forward.1} parent=123 // pred_fallthru
          _
        // Predicated region
        $region173: #{llm_forward.1} parent=123 // pred_check
          %p1188 = pneg %p585
        $region174: #{llm_forward.1} parent=123 // pred_check_branch
          %1190 = sbr.rel (%p1188) target = $region176
        $region175: #{llm_forward.1} parent=123 // pred_region
          %1192 = dma.done [#allocation25], 1024
        $region176: #{llm_forward.1} parent=123 // pred_fallthru
          _
        // Predicated region
        $region177: #{llm_forward.1} parent=123 // pred_check
          %p1193 = pneg %p606
        $region178: #{llm_forward.1} parent=123 // pred_check_branch
          %1195 = sbr.rel (%p1193) target = $region180
        $region179: #{llm_forward.1} parent=123 // pred_region
          %1197 = dma.done [#allocation28], 16
        $region180: #{llm_forward.1} parent=123 // pred_fallthru
          _
        // Predicated region
        $region181: #{llm_forward.1} parent=123 // pred_check
          %p1198 = pneg %p627
        $region182: #{llm_forward.1} parent=123 // pred_check_branch
          %1200 = sbr.rel (%p1198) target = $region184
        $region183: #{llm_forward.1} parent=123 // pred_region
          %1202 = dma.done [#allocation28], 16
        $region184: #{llm_forward.1} parent=123 // pred_fallthru
          _
        // Predicated region
        $region185: #{llm_forward.1} parent=123 // pred_check
          %p1203 = pneg %p648
        $region186: #{llm_forward.1} parent=123 // pred_check_branch
          %1205 = sbr.rel (%p1203) target = $region188
        $region187: #{llm_forward.1} parent=123 // pred_region
          %1207 = dma.done [#allocation31], 16
        $region188: #{llm_forward.1} parent=123 // pred_fallthru
          _
        // Predicated region
        $region189: #{llm_forward.1} parent=123 // pred_check
          %p1208 = pneg %p669
        $region190: #{llm_forward.1} parent=123 // pred_check_branch
          %1210 = sbr.rel (%p1208) target = $region192
        $region191: #{llm_forward.1} parent=123 // pred_region
          %1212 = dma.done [#allocation31], 2048
        $region192: #{llm_forward.1} parent=123 // pred_fallthru
          _
        // Predicated region
        $region193: #{llm_forward.1} parent=123 // pred_check
          %p1213 = pneg %p690
        $region194: #{llm_forward.1} parent=123 // pred_check_branch
          %1215 = sbr.rel (%p1213) target = $region196
        $region195: #{llm_forward.1} parent=123 // pred_region
          %1217 = dma.done [#allocation34], 32
        $region196: #{llm_forward.1} parent=123 // pred_fallthru
          _
        %p1218 = pneg %p85
        %p1219 = pneg %p82
        %p1220 = pneg %p106
        %p1221 = pneg %p103
        %s1222 = sand.u32 %s69, 1
        %s1223 = scalar_lea.sflag [#allocation10], %s1222
        %s1224 = sand.u32 %s119, 1
        %s1225 = smul.addr %s1224, 64
        %s1226 = scalar_lea.vmem [#allocation9], %s1225
        %p1227 = pneg %p132
        %p1228 = pneg %p129
        %p1229 = scmp.lt.s32.totalorder %s69, 1
        %s1230 = scalar_select %p1229, %s69, 1
        %s1231 = scalar_lea.vmem %s5, %s1230
        %p1232 = pneg %p158
        %p1233 = pneg %p155
        %s1234 = sand.u32 %s69, 1
        %s1235 = scalar_lea.sflag [#allocation10], %s1234
        %s1236 = sand.u32 %s171, 1
        %s1237 = smul.addr %s1236, 64
        %s1238 = scalar_lea.vmem [#allocation11], %s1237
        %p1239 = pneg %p184
        %p1240 = pneg %p181
        %s1241 = sand.u32 %s69, 1
        %s1242 = scalar_lea.sflag [#allocation13], %s1241
        %s1243 = sand.u32 %s197, 1
        %s1244 = scalar_lea.vmem [#allocation12], %s1243
        %p1245 = pneg %p210
        %p1246 = pneg %p207
        %s1247 = sand.u32 %s69, 1
        %s1248 = scalar_lea.sflag [#allocation13], %s1247
        %s1249 = sand.u32 %s223, 1
        %s1250 = smul.addr %s1249, 64
        %s1251 = scalar_lea.vmem [#allocation14], %s1250
        %p1252 = pneg %p236
        %p1253 = pneg %p233
        %s1254 = sand.u32 %s69, 1
        %s1255 = scalar_lea.sflag [#allocation16], %s1254
        %s1256 = sand.u32 %s249, 1
        %s1257 = scalar_lea.vmem [#allocation15], %s1256
        %p1258 = pneg %p262
        %p1259 = pneg %p259
        %s1260 = sand.u32 %s69, 1
        %s1261 = scalar_lea.sflag [#allocation16], %s1260
        %s1262 = sand.u32 %s275, 1
        %s1263 = smul.addr %s1262, 64
        %s1264 = scalar_lea.vmem [#allocation17], %s1263
        %p1265 = pneg %p288
        %p1266 = pneg %p285
        %p1267 = scmp.lt.s32.totalorder %s69, 1
        %s1268 = scalar_select %p1267, %s69, 1
        %s1269 = scalar_lea.vmem %s11, %s1268
        %p1270 = pneg %p314
        %p1271 = pneg %p311
        %p1272 = scmp.lt.s32.totalorder %s69, 1
        %s1273 = scalar_select %p1272, %s69, 1
        %s1274 = scalar_lea.vmem %s12, %s1273
        %p1275 = pneg %p340
        %p1276 = pneg %p337
        %s1277 = sand.u32 %s69, 1
        %s1278 = scalar_lea.sflag [#allocation19], %s1277
        %s1279 = sand.u32 %s353, 1
        %s1280 = scalar_lea.vmem [#allocation18], %s1279
        %p1281 = pneg %p366
        %p1282 = pneg %p363
        %p1283 = scmp.lt.s32.totalorder %s69, 1
        %s1284 = scalar_select %p1283, %s69, 1
        %s1285 = scalar_lea.vmem %s14, %s1284
        %p1286 = pneg %p392
        %p1287 = pneg %p389
        %s1288 = sand.u32 %s69, 1
        %s1289 = scalar_lea.sflag [#allocation19], %s1288
        %s1290 = sand.u32 %s405, 1
        %s1291 = scalar_lea.vmem [#allocation20], %s1290
        %p1292 = pneg %p418
        %p1293 = pneg %p415
        %s1294 = sand.u32 %s69, 1
        %s1295 = scalar_lea.sflag [#allocation22], %s1294
        %s1296 = sand.u32 %s431, 1
        %s1297 = smul.addr %s1296, 128
        %s1298 = scalar_lea.vmem [#allocation21], %s1297
        %p1299 = pneg %p444
        %p1300 = pneg %p441
        %p1301 = scmp.lt.s32.totalorder %s69, 1
        %s1302 = scalar_select %p1301, %s69, 1
        %s1303 = smul.addr %s1302, 2
        %s1304 = scalar_lea.vmem %s17, %s1303
        %p1305 = pneg %p470
        %p1306 = pneg %p467
        %s1307 = sand.u32 %s69, 1
        %s1308 = scalar_lea.sflag [#allocation22], %s1307
        %s1309 = sand.u32 %s483, 1
        %s1310 = smul.addr %s1309, 128
        %s1311 = scalar_lea.vmem [#allocation23], %s1310
        %p1312 = pneg %p496
        %p1313 = pneg %p493
        %p1314 = scmp.lt.s32.totalorder %s69, 1
        %s1315 = scalar_select %p1314, %s69, 1
        %s1316 = scalar_lea.vmem %s19, %s1315
        %p1317 = pneg %p522
        %p1318 = pneg %p519
        %p1319 = pneg %p543
        %p1320 = pneg %p540
        %p1321 = pneg %p564
        %p1322 = pneg %p561
        %p1323 = pneg %p585
        %p1324 = pneg %p582
        %p1325 = pneg %p606
        %p1326 = pneg %p603
        %p1327 = pneg %p627
        %p1328 = pneg %p624
        %p1329 = pneg %p648
        %p1330 = pneg %p645
        %p1331 = pneg %p669
        %p1332 = pneg %p666
        %p1333 = pneg %p690
        %p1334 = pneg %p687
        %p1335 = pneg %p711
        %p1336 = pneg %p708
        %p1337 = scmp.lt.s32.totalorder %s69, 1
        %s1338 = scalar_select %p1337, %s69, 1
        %s1339 = scalar_lea.vmem %s5, %s1338
        %p1340 = scmp.lt.s32.totalorder %s69, 1
        %s1341 = scalar_select %p1340, %s69, 1
        %s1342 = scalar_lea.vmem %s11, %s1341
        %p1343 = scmp.lt.s32.totalorder %s69, 1
        %s1344 = scalar_select %p1343, %s69, 1
        %s1345 = scalar_lea.vmem %s12, %s1344
        %p1346 = scmp.lt.s32.totalorder %s69, 1
        %s1347 = scalar_select %p1346, %s69, 1
        %s1348 = scalar_lea.vmem %s14, %s1347
        %p1349 = scmp.lt.s32.totalorder %s69, 1
        %s1350 = scalar_select %p1349, %s69, 1
        %s1351 = smul.addr %s1350, 2
        %s1352 = scalar_lea.vmem %s17, %s1351
        %p1353 = scmp.lt.s32.totalorder %s69, 1
        %s1354 = scalar_select %p1353, %s69, 1
        %s1355 = scalar_lea.vmem %s19, %s1354
        %p1357 = scmp.eq.s32.totalorder %s69, 0
        // Predicated region
        $region197: #{llm_forward.1} parent=123 // pred_check
          %p1358 = pneg %p1357
        $region198: #{llm_forward.1} parent=123 // pred_check_branch
          %1360 = sbr.rel (%p1358) target = $region200
        $region199: #{llm_forward.1} parent=123 // pred_region
          %s1361 = sld [smem:[#allocation4]]
          %s1362 = scalar_lea.vmem [#allocation6], %s1361
          %v1363 = vld [vmem:[%s1362] sm:$0x1]
          %v1364 = vld [vmem:[%s3] sm:$0x1]
          %v1365 = vadd.f32 %v1363, %v1364
          %1366 = vst [vmem:[#allocation2] sm:$0x1] %v1365
          %s1367 = sld [smem:[#allocation4 + $0x1]]
          %s1368 = scalar_lea.vmem [#allocation6], %s1367
          %v1369 = vld [vmem:[%s1368] sm:$0x1]
          %v1370 = vld [vmem:[%s3 + $0x1] sm:$0x1]
          %v1371 = vadd.f32 %v1369, %v1370
          %1372 = vst [vmem:[#allocation2 + $0x1] sm:$0x1] %v1371
          %s1373 = sld [smem:[#allocation4 + $0x2]]
          %s1374 = scalar_lea.vmem [#allocation6], %s1373
          %v1375 = vld [vmem:[%s1374] sm:$0x1]
          %v1376 = vld [vmem:[%s3 + $0x2] sm:$0x1]
          %v1377 = vadd.f32 %v1375, %v1376
          %1378 = vst [vmem:[#allocation2 + $0x2] sm:$0x1] %v1377
          %s1379 = sld [smem:[#allocation4 + $0x3]]
          %s1380 = scalar_lea.vmem [#allocation6], %s1379
          %v1381 = vld [vmem:[%s1380] sm:$0x1]
          %v1382 = vld [vmem:[%s3 + $0x3] sm:$0x1]
          %v1383 = vadd.f32 %v1381, %v1382
          %1384 = vst [vmem:[#allocation2 + $0x3] sm:$0x1] %v1383
          %s1385 = sld [smem:[#allocation4 + $0x4]]
          %s1386 = scalar_lea.vmem [#allocation6], %s1385
          %v1387 = vld [vmem:[%s1386] sm:$0x1]
          %v1388 = vld [vmem:[%s3 + $0x4] sm:$0x1]
          %v1389 = vadd.f32 %v1387, %v1388
          %1390 = vst [vmem:[#allocation2 + $0x4] sm:$0x1] %v1389
          %s1391 = sld [smem:[#allocation4 + $0x5]]
          %s1392 = scalar_lea.vmem [#allocation6], %s1391
          %v1393 = vld [vmem:[%s1392] sm:$0x1]
          %v1394 = vld [vmem:[%s3 + $0x5] sm:$0x1]
          %v1395 = vadd.f32 %v1393, %v1394
          %1396 = vst [vmem:[#allocation2 + $0x5] sm:$0x1] %v1395
          %s1397 = sld [smem:[#allocation4 + $0x6]]
          %s1398 = scalar_lea.vmem [#allocation6], %s1397
          %v1399 = vld [vmem:[%s1398] sm:$0x1]
          %v1400 = vld [vmem:[%s3 + $0x6] sm:$0x1]
          %v1401 = vadd.f32 %v1399, %v1400
          %1402 = vst [vmem:[#allocation2 + $0x6] sm:$0x1] %v1401
          %s1403 = sld [smem:[#allocation4 + $0x7]]
          %s1404 = scalar_lea.vmem [#allocation6], %s1403
          %v1405 = vld [vmem:[%s1404] sm:$0x1]
          %v1406 = vld [vmem:[%s3 + $0x7] sm:$0x1]
          %v1407 = vadd.f32 %v1405, %v1406
          %1408 = vst [vmem:[#allocation2 + $0x7] sm:$0x1] %v1407
        $region200: #{llm_forward.1} parent=123 // pred_fallthru
          _
        %v1409 = vld [vmem:[#allocation2] sm:$0xff]
        %v1410 = vld [vmem:[%s1345] sm:$0x1]
        %v1411 = vld [vmem:[%s1148] sm:$0x1]
        %1412 = vadd.xlane.f32.xlu0 %v1409
        %v1413 = vpop.xlane.xlu0 %1412
        %v1414 = vrcp.pop 128.0
        %v1415 = vmul.f32 128.0, %v1414
        %v1416 = vsub.f32 1.0, %v1415
        %v1417 = vmul.f32 %v1414, %v1416
        %v1418 = vadd.f32 %v1414, %v1417
        %vm1419 = vweird.f32 %v1414
        %v1420 = vsel %vm1419, %v1414, %v1418
        %v1421 = vmul.f32 %v1413, %v1420
        %v1422 = vsub.f32 %v1409, %v1421
        %v1423 = vmul.f32 %v1422, %v1422
        %1424 = vadd.xlane.f32.xlu0 %v1423
        %v1425 = vpop.xlane.xlu0 %1424
        %v1426 = vmul.f32 %v1425, %v1420
        %v1427 = vadd.f32 %v1426, 1e-05
        %v1428 = vrsqrt.pop %v1427
        %v1429 = vmul.f32 %v1428, %v1427
        %v1430 = vmul.f32 %v1429, %v1428
        %v1431 = vmul.f32 0.5, %v1430
        %v1432 = vsub.f32 1.5, %v1431
        %v1433 = vmul.f32 %v1428, %v1432
        %vm1434 = vweird.f32 %v1427
        %vm1435 = vweird.f32 %v1428
        %vm1436 = vmor %vm1434, %vm1435
        %v1437 = vsel %vm1436, %v1428, %v1433
        %v1438 = vmul.f32 %v1422, %v1437
        %v1440 = vperm.slane %v1410, 0
        %v1442 = vmul.f32 %v1438, %v1440
        %v1444 = vperm.slane %v1411, 0
        %v1446 = vadd.f32 %v1442, %v1444
        %v1447 = vpack.c.bf16 %v1446, %v1446
        %v1448 = vld [vmem:[%s1091] sm:$0xf]
        %v1449 = vld [vmem:[%s1091 + $0x4] sm:$0xf]
        %v1450 = vld [vmem:[%s1091 + $0x8] sm:$0xf]
        %v1451 = vld [vmem:[%s1091 + $0xc] sm:$0xf]
        %v1452 = vld [vmem:[%s1091 + $0x10] sm:$0xf]
        %v1453 = vld [vmem:[%s1091 + $0x14] sm:$0xf]
        %v1454 = vld [vmem:[%s1091 + $0x18] sm:$0xf]
        %v1455 = vld [vmem:[%s1091 + $0x1c] sm:$0xf]
        %v1456 = vld [vmem:[%s1091 + $0x20] sm:$0xf]
        %v1457 = vld [vmem:[%s1091 + $0x24] sm:$0xf]
        %v1458 = vld [vmem:[%s1091 + $0x28] sm:$0xf]
        %v1459 = vld [vmem:[%s1091 + $0x2c] sm:$0xf]
        %v1460 = vld [vmem:[%s1091 + $0x30] sm:$0xf]
        %v1461 = vld [vmem:[%s1091 + $0x34] sm:$0xf]
        %v1462 = vld [vmem:[%s1091 + $0x38] sm:$0xf]
        %v1463 = vld [vmem:[%s1091 + $0x3c] sm:$0xf]
        %v1464 = vld [vmem:[%s1339] sm:$0x1]
        %v1466 = vperm.slane %v1464, 0
        %v1484 = vunpack.c.l.b16 %v1448
        %v1485 = vunpack.c.l.b16 %v1449
        %v1486 = vunpack.c.l.b16 %v1450
        %v1487 = vunpack.c.l.b16 %v1451
        %v1488 = vunpack.c.l.b16 %v1452
        %v1489 = vunpack.c.l.b16 %v1453
        %v1490 = vunpack.c.l.b16 %v1454
        %v1491 = vunpack.c.l.b16 %v1455
        %v1492 = vunpack.c.l.b16 %v1456
        %v1493 = vunpack.c.l.b16 %v1457
        %v1494 = vunpack.c.l.b16 %v1458
        %v1495 = vunpack.c.l.b16 %v1459
        %v1496 = vunpack.c.l.b16 %v1460
        %v1497 = vunpack.c.l.b16 %v1461
        %v1498 = vunpack.c.l.b16 %v1462
        %v1499 = vunpack.c.l.b16 %v1463
        %v1500 = vpack.c.b16 %v1485, %v1484
        %v1501 = vpack.c.b16 %v1487, %v1486
        %v1502 = vpack.c.b16 %v1489, %v1488
        %v1503 = vpack.c.b16 %v1491, %v1490
        %v1504 = vpack.c.b16 %v1493, %v1492
        %v1505 = vpack.c.b16 %v1495, %v1494
        %v1506 = vpack.c.b16 %v1497, %v1496
        %v1507 = vpack.c.b16 %v1499, %v1498
        %1516 = vmatpush.bf16.msra.mxu0 %v1507
        %1517 = vmatpush.bf16.msra.mxu0 %v1506
        %1518 = vmatpush.bf16.msra.mxu0 %v1505
        %1519 = vmatpush.bf16.msra.mxu0 %v1504
        %1520 = vmatpush.bf16.msra.mxu0 %v1503
        %1521 = vmatpush.bf16.msra.mxu0 %v1502
        %1522 = vmatpush.bf16.msra.mxu0 %v1501
        %1523 = vmatpush.bf16.msra.mxu0 %v1500
        %1524 = vmatmul.bf16.gmra.mxu0 %v1447
        %v1525 = vpop.f32.mrf.mxu0
        %v1526 = vadd.f32 %v1466, %v1525
        %v1527 = vpop.f32.mrf.mxu0
        %1528 = vdwg.mxu0
        %v1529 = vld [vmem:[%s1101] sm:$0xf]
        %v1530 = vld [vmem:[%s1101 + $0x4] sm:$0xf]
        %v1531 = vld [vmem:[%s1101 + $0x8] sm:$0xf]
        %v1532 = vld [vmem:[%s1101 + $0xc] sm:$0xf]
        %v1533 = vld [vmem:[%s1101 + $0x10] sm:$0xf]
        %v1534 = vld [vmem:[%s1101 + $0x14] sm:$0xf]
        %v1535 = vld [vmem:[%s1101 + $0x18] sm:$0xf]
        %v1536 = vld [vmem:[%s1101 + $0x1c] sm:$0xf]
        %v1537 = vld [vmem:[%s1101 + $0x20] sm:$0xf]
        %v1538 = vld [vmem:[%s1101 + $0x24] sm:$0xf]
        %v1539 = vld [vmem:[%s1101 + $0x28] sm:$0xf]
        %v1540 = vld [vmem:[%s1101 + $0x2c] sm:$0xf]
        %v1541 = vld [vmem:[%s1101 + $0x30] sm:$0xf]
        %v1542 = vld [vmem:[%s1101 + $0x34] sm:$0xf]
        %v1543 = vld [vmem:[%s1101 + $0x38] sm:$0xf]
        %v1544 = vld [vmem:[%s1101 + $0x3c] sm:$0xf]
        %v1545 = vld [vmem:[%s1110] sm:$0x1]
        %v1547 = vperm.slane %v1545, 0
        %v1565 = vunpack.c.l.b16 %v1529
        %v1566 = vunpack.c.l.b16 %v1530
        %v1567 = vunpack.c.l.b16 %v1531
        %v1568 = vunpack.c.l.b16 %v1532
        %v1569 = vunpack.c.l.b16 %v1533
        %v1570 = vunpack.c.l.b16 %v1534
        %v1571 = vunpack.c.l.b16 %v1535
        %v1572 = vunpack.c.l.b16 %v1536
        %v1573 = vunpack.c.l.b16 %v1537
        %v1574 = vunpack.c.l.b16 %v1538
        %v1575 = vunpack.c.l.b16 %v1539
        %v1576 = vunpack.c.l.b16 %v1540
        %v1577 = vunpack.c.l.b16 %v1541
        %v1578 = vunpack.c.l.b16 %v1542
        %v1579 = vunpack.c.l.b16 %v1543
        %v1580 = vunpack.c.l.b16 %v1544
        %v1581 = vpack.c.b16 %v1566, %v1565
        %v1582 = vpack.c.b16 %v1568, %v1567
        %v1583 = vpack.c.b16 %v1570, %v1569
        %v1584 = vpack.c.b16 %v1572, %v1571
        %v1585 = vpack.c.b16 %v1574, %v1573
        %v1586 = vpack.c.b16 %v1576, %v1575
        %v1587 = vpack.c.b16 %v1578, %v1577
        %v1588 = vpack.c.b16 %v1580, %v1579
        %1597 = vmatpush.bf16.msra.mxu0 %v1588
        %1598 = vmatpush.bf16.msra.mxu0 %v1587
        %1599 = vmatpush.bf16.msra.mxu0 %v1586
        %1600 = vmatpush.bf16.msra.mxu0 %v1585
        %1601 = vmatpush.bf16.msra.mxu0 %v1584
        %1602 = vmatpush.bf16.msra.mxu0 %v1583
        %1603 = vmatpush.bf16.msra.mxu0 %v1582
        %1604 = vmatpush.bf16.msra.mxu0 %v1581
        %1605 = vmatmul.bf16.gmra.mxu0 %v1447
        %v1606 = vpop.f32.mrf.mxu0
        %v1607 = vadd.f32 %v1547, %v1606
        %v1608 = vpop.f32.mrf.mxu0
        %1609 = vdwg.mxu0
        %v1610 = vld [vmem:[%s1120] sm:$0xf]
        %v1611 = vld [vmem:[%s1120 + $0x4] sm:$0xf]
        %v1612 = vld [vmem:[%s1120 + $0x8] sm:$0xf]
        %v1613 = vld [vmem:[%s1120 + $0xc] sm:$0xf]
        %v1614 = vld [vmem:[%s1120 + $0x10] sm:$0xf]
        %v1615 = vld [vmem:[%s1120 + $0x14] sm:$0xf]
        %v1616 = vld [vmem:[%s1120 + $0x18] sm:$0xf]
        %v1617 = vld [vmem:[%s1120 + $0x1c] sm:$0xf]
        %v1618 = vld [vmem:[%s1120 + $0x20] sm:$0xf]
        %v1619 = vld [vmem:[%s1120 + $0x24] sm:$0xf]
        %v1620 = vld [vmem:[%s1120 + $0x28] sm:$0xf]
        %v1621 = vld [vmem:[%s1120 + $0x2c] sm:$0xf]
        %v1622 = vld [vmem:[%s1120 + $0x30] sm:$0xf]
        %v1623 = vld [vmem:[%s1120 + $0x34] sm:$0xf]
        %v1624 = vld [vmem:[%s1120 + $0x38] sm:$0xf]
        %v1625 = vld [vmem:[%s1120 + $0x3c] sm:$0xf]
        %v1626 = vld [vmem:[%s1129] sm:$0x1]
        %v1628 = vperm.slane %v1626, 0
        %v1646 = vunpack.c.l.b16 %v1610
        %v1647 = vunpack.c.l.b16 %v1611
        %v1648 = vunpack.c.l.b16 %v1612
        %v1649 = vunpack.c.l.b16 %v1613
        %v1650 = vunpack.c.l.b16 %v1614
        %v1651 = vunpack.c.l.b16 %v1615
        %v1652 = vunpack.c.l.b16 %v1616
        %v1653 = vunpack.c.l.b16 %v1617
        %v1654 = vunpack.c.l.b16 %v1618
        %v1655 = vunpack.c.l.b16 %v1619
        %v1656 = vunpack.c.l.b16 %v1620
        %v1657 = vunpack.c.l.b16 %v1621
        %v1658 = vunpack.c.l.b16 %v1622
        %v1659 = vunpack.c.l.b16 %v1623
        %v1660 = vunpack.c.l.b16 %v1624
        %v1661 = vunpack.c.l.b16 %v1625
        %v1662 = vpack.c.b16 %v1647, %v1646
        %v1663 = vpack.c.b16 %v1649, %v1648
        %v1664 = vpack.c.b16 %v1651, %v1650
        %v1665 = vpack.c.b16 %v1653, %v1652
        %v1666 = vpack.c.b16 %v1655, %v1654
        %v1667 = vpack.c.b16 %v1657, %v1656
        %v1668 = vpack.c.b16 %v1659, %v1658
        %v1669 = vpack.c.b16 %v1661, %v1660
        %1678 = vmatpush.bf16.msra.mxu0 %v1669
        %1679 = vmatpush.bf16.msra.mxu0 %v1668
        %1680 = vmatpush.bf16.msra.mxu0 %v1667
        %1681 = vmatpush.bf16.msra.mxu0 %v1666
        %1682 = vmatpush.bf16.msra.mxu0 %v1665
        %1683 = vmatpush.bf16.msra.mxu0 %v1664
        %1684 = vmatpush.bf16.msra.mxu0 %v1663
        %1685 = vmatpush.bf16.msra.mxu0 %v1662
        %1686 = vmatmul.bf16.gmra.mxu0 %v1447
        %v1687 = vpop.f32.mrf.mxu0
        %v1688 = vadd.f32 %v1628, %v1687
        %v1689 = vpop.f32.mrf.mxu0
        %1690 = vdwg.mxu0
        %v1691 = vpack.c.bf16 %v1526, %v1526
        %v1692 = vpack.c.bf16 %v1607, %v1607
        %1693 = vmatpush.bf16.xpose.msra.mxu0 0
        %1694 = vmatpush.bf16.xpose.msra.mxu0 0
        %1695 = vmatpush.bf16.xpose.msra.mxu0 0
        %1696 = vmatpush.bf16.xpose.msra.mxu0 0
        %1697 = vmatpush.bf16.xpose.msra.mxu0 0
        %1698 = vmatpush.bf16.xpose.msra.mxu0 0
        %1699 = vmatpush.bf16.xpose.msra.mxu0 0
        %1700 = vmatpush.bf16.xpose.msra.mxu0 %v1692
        %1701 = vmatmul.bf16.gmra.mxu0 %v1691
        %v1702 = vpop.f32.mrf.mxu0
        %v1703 = vadd.f32 0.0, %v1702
        %v1704 = vpop.f32.mrf.mxu0
        %1705 = vdwg.mxu0
        %vm1706 = vcmask 64512
        %v1707 = vsel %vm1706, %v1703, -inf
        %1708 = vmax.xlane.f32.xlu0 %v1707
        %v1709 = vpop.xlane.xlu0 %1708
        %v1710 = vsub.f32 %v1703, %v1709
        %v1711 = vmul.f32 %v1710, 1.442695
        %v1712 = vpow.pop %v1711
        %v1713 = vsel %vm1706, %v1712, 0.0
        %1714 = vadd.xlane.f32.xlu0 %v1713
        %v1715 = vpop.xlane.xlu0 %1714
        %v1716 = vrcp.pop %v1715
        %v1717 = vmul.f32 %v1712, %v1716
        %v1718 = vpack.c.bf16 %v1717, %v1717
        %v1719 = vpack.c.bf16 %v1688, %v1688
        %v1721 = vsel %vm1706, %v1718, 0
        %vm1723 = vcmask 1043456
        %v1725 = vsel %vm1723, %v1719, 0
        %1727 = vmatpush.bf16.msra.mxu0 0
        %1728 = vmatpush.bf16.msra.mxu0 0
        %1729 = vmatpush.bf16.msra.mxu0 0
        %1730 = vmatpush.bf16.msra.mxu0 0
        %1731 = vmatpush.bf16.msra.mxu0 0
        %1732 = vmatpush.bf16.msra.mxu0 0
        %1733 = vmatpush.bf16.msra.mxu0 0
        %1734 = vmatpush.bf16.msra.mxu0 %v1725
        %1735 = vmatmul.bf16.gmra.mxu0 %v1721
        %v1736 = vpop.f32.mrf.mxu0
        %v1737 = vadd.f32 0.0, %v1736
        %v1738 = vpop.f32.mrf.mxu0
        %1739 = vdwg.mxu0
        %v1740 = vpack.c.bf16 %v1737, %v1737
        %v1741 = vld [vmem:[%s1139] sm:$0xf]
        %v1742 = vld [vmem:[%s1139 + $0x4] sm:$0xf]
        %v1743 = vld [vmem:[%s1139 + $0x8] sm:$0xf]
        %v1744 = vld [vmem:[%s1139 + $0xc] sm:$0xf]
        %v1745 = vld [vmem:[%s1139 + $0x10] sm:$0xf]
        %v1746 = vld [vmem:[%s1139 + $0x14] sm:$0xf]
        %v1747 = vld [vmem:[%s1139 + $0x18] sm:$0xf]
        %v1748 = vld [vmem:[%s1139 + $0x1c] sm:$0xf]
        %v1749 = vld [vmem:[%s1139 + $0x20] sm:$0xf]
        %v1750 = vld [vmem:[%s1139 + $0x24] sm:$0xf]
        %v1751 = vld [vmem:[%s1139 + $0x28] sm:$0xf]
        %v1752 = vld [vmem:[%s1139 + $0x2c] sm:$0xf]
        %v1753 = vld [vmem:[%s1139 + $0x30] sm:$0xf]
        %v1754 = vld [vmem:[%s1139 + $0x34] sm:$0xf]
        %v1755 = vld [vmem:[%s1139 + $0x38] sm:$0xf]
        %v1756 = vld [vmem:[%s1139 + $0x3c] sm:$0xf]
        %v1757 = vld [vmem:[%s1342] sm:$0x1]
        %v1759 = vperm.slane %v1757, 0
        %v1777 = vunpack.c.l.b16 %v1741
        %v1778 = vunpack.c.l.b16 %v1742
        %v1779 = vunpack.c.l.b16 %v1743
        %v1780 = vunpack.c.l.b16 %v1744
        %v1781 = vunpack.c.l.b16 %v1745
        %v1782 = vunpack.c.l.b16 %v1746
        %v1783 = vunpack.c.l.b16 %v1747
        %v1784 = vunpack.c.l.b16 %v1748
        %v1785 = vunpack.c.l.b16 %v1749
        %v1786 = vunpack.c.l.b16 %v1750
        %v1787 = vunpack.c.l.b16 %v1751
        %v1788 = vunpack.c.l.b16 %v1752
        %v1789 = vunpack.c.l.b16 %v1753
        %v1790 = vunpack.c.l.b16 %v1754
        %v1791 = vunpack.c.l.b16 %v1755
        %v1792 = vunpack.c.l.b16 %v1756
        %v1793 = vpack.c.b16 %v1778, %v1777
        %v1794 = vpack.c.b16 %v1780, %v1779
        %v1795 = vpack.c.b16 %v1782, %v1781
        %v1796 = vpack.c.b16 %v1784, %v1783
        %v1797 = vpack.c.b16 %v1786, %v1785
        %v1798 = vpack.c.b16 %v1788, %v1787
        %v1799 = vpack.c.b16 %v1790, %v1789
        %v1800 = vpack.c.b16 %v1792, %v1791
        %1809 = vmatpush.bf16.msra.mxu0 %v1800
        %1810 = vmatpush.bf16.msra.mxu0 %v1799
        %1811 = vmatpush.bf16.msra.mxu0 %v1798
        %1812 = vmatpush.bf16.msra.mxu0 %v1797
        %1813 = vmatpush.bf16.msra.mxu0 %v1796
        %1814 = vmatpush.bf16.msra.mxu0 %v1795
        %1815 = vmatpush.bf16.msra.mxu0 %v1794
        %1816 = vmatpush.bf16.msra.mxu0 %v1793
        %1817 = vmatmul.bf16.gmra.mxu0 %v1740
        %v1818 = vpop.f32.mrf.mxu0
        %v1819 = vadd.f32 %v1759, %v1818
        %v1820 = vpop.f32.mrf.mxu0
        %1821 = vdwg.mxu0
        %v1822 = vadd.f32 %v1409, %v1819
        %v1823 = vld [vmem:[%s1348] sm:$0x1]
        %v1824 = vld [vmem:[%s1157] sm:$0x1]
        %1825 = vadd.xlane.f32.xlu0 %v1822
        %v1826 = vpop.xlane.xlu0 %1825
        %v1827 = vmul.f32 %v1826, %v1420
        %v1828 = vsub.f32 %v1822, %v1827
        %v1829 = vmul.f32 %v1828, %v1828
        %1830 = vadd.xlane.f32.xlu0 %v1829
        %v1831 = vpop.xlane.xlu0 %1830
        %v1832 = vmul.f32 %v1831, %v1420
        %v1833 = vadd.f32 %v1832, 1e-05
        %v1834 = vrsqrt.pop %v1833
        %v1835 = vmul.f32 %v1834, %v1833
        %v1836 = vmul.f32 %v1835, %v1834
        %v1837 = vmul.f32 0.5, %v1836
        %v1838 = vsub.f32 1.5, %v1837
        %v1839 = vmul.f32 %v1834, %v1838
        %vm1840 = vweird.f32 %v1833
        %vm1841 = vweird.f32 %v1834
        %vm1842 = vmor %vm1840, %vm1841
        %v1843 = vsel %vm1842, %v1834, %v1839
        %v1844 = vmul.f32 %v1828, %v1843
        %v1846 = vperm.slane %v1823, 0
        %v1848 = vmul.f32 %v1844, %v1846
        %v1850 = vperm.slane %v1824, 0
        %v1852 = vadd.f32 %v1848, %v1850
        %v1853 = vpack.c.bf16 %v1852, %v1852
        %v1854 = vld [vmem:[%s1167] sm:$0xff]
        %v1855 = vld [vmem:[%s1167 + $0x8] sm:$0xff]
        %v1856 = vld [vmem:[%s1167 + $0x10] sm:$0xff]
        %v1857 = vld [vmem:[%s1167 + $0x18] sm:$0xff]
        %v1858 = vld [vmem:[%s1167 + $0x20] sm:$0xff]
        %v1859 = vld [vmem:[%s1167 + $0x28] sm:$0xff]
        %v1860 = vld [vmem:[%s1167 + $0x30] sm:$0xff]
        %v1861 = vld [vmem:[%s1167 + $0x38] sm:$0xff]
        %v1862 = vld [vmem:[%s1167 + $0x40] sm:$0xff]
        %v1863 = vld [vmem:[%s1167 + $0x48] sm:$0xff]
        %v1864 = vld [vmem:[%s1167 + $0x50] sm:$0xff]
        %v1865 = vld [vmem:[%s1167 + $0x58] sm:$0xff]
        %v1866 = vld [vmem:[%s1167 + $0x60] sm:$0xff]
        %v1867 = vld [vmem:[%s1167 + $0x68] sm:$0xff]
        %v1868 = vld [vmem:[%s1167 + $0x70] sm:$0xff]
        %v1869 = vld [vmem:[%s1167 + $0x78] sm:$0xff]
        %v1870 = vld [vmem:[%s1352] sm:$0x3]
        %v1872 = vperm.slane %v1870, 0
        %v1873 = vperm.slane %v1870, 1
        %v1892 = vunpack.c.l.b16 %v1854
        %v1893 = vunpack.c.h.b16 %v1854
        %v1894 = vunpack.c.l.b16 %v1855
        %v1895 = vunpack.c.h.b16 %v1855
        %v1896 = vunpack.c.l.b16 %v1856
        %v1897 = vunpack.c.h.b16 %v1856
        %v1898 = vunpack.c.l.b16 %v1857
        %v1899 = vunpack.c.h.b16 %v1857
        %v1900 = vunpack.c.l.b16 %v1858
        %v1901 = vunpack.c.h.b16 %v1858
        %v1902 = vunpack.c.l.b16 %v1859
        %v1903 = vunpack.c.h.b16 %v1859
        %v1904 = vunpack.c.l.b16 %v1860
        %v1905 = vunpack.c.h.b16 %v1860
        %v1906 = vunpack.c.l.b16 %v1861
        %v1907 = vunpack.c.h.b16 %v1861
        %v1908 = vunpack.c.l.b16 %v1862
        %v1909 = vunpack.c.h.b16 %v1862
        %v1910 = vunpack.c.l.b16 %v1863
        %v1911 = vunpack.c.h.b16 %v1863
        %v1912 = vunpack.c.l.b16 %v1864
        %v1913 = vunpack.c.h.b16 %v1864
        %v1914 = vunpack.c.l.b16 %v1865
        %v1915 = vunpack.c.h.b16 %v1865
        %v1916 = vunpack.c.l.b16 %v1866
        %v1917 = vunpack.c.h.b16 %v1866
        %v1918 = vunpack.c.l.b16 %v1867
        %v1919 = vunpack.c.h.b16 %v1867
        %v1920 = vunpack.c.l.b16 %v1868
        %v1921 = vunpack.c.h.b16 %v1868
        %v1922 = vunpack.c.l.b16 %v1869
        %v1923 = vunpack.c.h.b16 %v1869
        %v1924 = vpack.c.b16 %v1894, %v1892
        %v1925 = vpack.c.b16 %v1895, %v1893
        %v1926 = vpack.c.b16 %v1898, %v1896
        %v1927 = vpack.c.b16 %v1899, %v1897
        %v1928 = vpack.c.b16 %v1902, %v1900
        %v1929 = vpack.c.b16 %v1903, %v1901
        %v1930 = vpack.c.b16 %v1906, %v1904
        %v1931 = vpack.c.b16 %v1907, %v1905
        %v1932 = vpack.c.b16 %v1910, %v1908
        %v1933 = vpack.c.b16 %v1911, %v1909
        %v1934 = vpack.c.b16 %v1914, %v1912
        %v1935 = vpack.c.b16 %v1915, %v1913
        %v1936 = vpack.c.b16 %v1918, %v1916
        %v1937 = vpack.c.b16 %v1919, %v1917
        %v1938 = vpack.c.b16 %v1922, %v1920
        %v1939 = vpack.c.b16 %v1923, %v1921
        %1956 = vmatpush.bf16.msra.mxu0 %v1938
        %1957 = vmatpush.bf16.msra.mxu0 %v1936
        %1958 = vmatpush.bf16.msra.mxu0 %v1934
        %1959 = vmatpush.bf16.msra.mxu0 %v1932
        %1960 = vmatpush.bf16.msra.mxu0 %v1930
        %1961 = vmatpush.bf16.msra.mxu0 %v1928
        %1962 = vmatpush.bf16.msra.mxu0 %v1926
        %1963 = vmatpush.bf16.msra.mxu0 %v1924
        %1964 = vmatmul.bf16.gmra.mxu0 %v1853
        %v1965 = vpop.f32.mrf.mxu0
        %v1966 = vadd.f32 %v1872, %v1965
        %v1967 = vpop.f32.mrf.mxu0
        %1968 = vdwg.mxu0
        %1969 = vmatpush.bf16.msra.mxu0 %v1939
        %1970 = vmatpush.bf16.msra.mxu0 %v1937
        %1971 = vmatpush.bf16.msra.mxu0 %v1935
        %1972 = vmatpush.bf16.msra.mxu0 %v1933
        %1973 = vmatpush.bf16.msra.mxu0 %v1931
        %1974 = vmatpush.bf16.msra.mxu0 %v1929
        %1975 = vmatpush.bf16.msra.mxu0 %v1927
        %1976 = vmatpush.bf16.msra.mxu0 %v1925
        %1977 = vmatmul.bf16.gmra.mxu0 %v1853
        %v1978 = vpop.f32.mrf.mxu0
        %v1979 = vadd.f32 %v1873, %v1978
        %v1980 = vpop.f32.mrf.mxu0
        %1981 = vdwg.mxu0
        %v1982 = vmul.f32 %v1966, %v1966
        %v1983 = vmul.f32 %v1979, %v1979
        %v1984 = vmul.f32 %v1966, %v1982
        %v1985 = vmul.f32 %v1979, %v1983
        %v1986 = vmul.f32 %v1984, 0.044715
        %v1987 = vmul.f32 %v1985, 0.044715
        %v1988 = vadd.f32 %v1966, %v1986
        %v1989 = vadd.f32 %v1979, %v1987
        %v1990 = vmul.f32 %v1988, 0.7978846
        %v1991 = vmul.f32 %v1989, 0.7978846
        %v1992 = vtanh.pop %v1990
        %v1993 = vtanh.pop %v1991
        %v1994 = vadd.f32 %v1992, 1.0
        %v1995 = vadd.f32 %v1993, 1.0
        %v1996 = vmul.f32 %v1994, 0.5
        %v1997 = vmul.f32 %v1995, 0.5
        %v1998 = vmul.f32 %v1966, %v1996
        %v1999 = vmul.f32 %v1979, %v1997
        %v2000 = vpack.c.bf16 %v1998, %v1998
        %v2001 = vpack.c.bf16 %v1999, %v1999
        %v2002 = vld [vmem:[%s1177] sm:$0xf]
        %v2003 = vld [vmem:[%s1177 + $0x4] sm:$0xf]
        %v2004 = vld [vmem:[%s1177 + $0x8] sm:$0xf]
        %v2005 = vld [vmem:[%s1177 + $0xc] sm:$0xf]
        %v2006 = vld [vmem:[%s1177 + $0x10] sm:$0xf]
        %v2007 = vld [vmem:[%s1177 + $0x14] sm:$0xf]
        %v2008 = vld [vmem:[%s1177 + $0x18] sm:$0xf]
        %v2009 = vld [vmem:[%s1177 + $0x1c] sm:$0xf]
        %v2010 = vld [vmem:[%s1177 + $0x20] sm:$0xf]
        %v2011 = vld [vmem:[%s1177 + $0x24] sm:$0xf]
        %v2012 = vld [vmem:[%s1177 + $0x28] sm:$0xf]
        %v2013 = vld [vmem:[%s1177 + $0x2c] sm:$0xf]
        %v2014 = vld [vmem:[%s1177 + $0x30] sm:$0xf]
        %v2015 = vld [vmem:[%s1177 + $0x34] sm:$0xf]
        %v2016 = vld [vmem:[%s1177 + $0x38] sm:$0xf]
        %v2017 = vld [vmem:[%s1177 + $0x3c] sm:$0xf]
        %v2018 = vld [vmem:[%s1177 + $0x40] sm:$0xf]
        %v2019 = vld [vmem:[%s1177 + $0x44] sm:$0xf]
        %v2020 = vld [vmem:[%s1177 + $0x48] sm:$0xf]
        %v2021 = vld [vmem:[%s1177 + $0x4c] sm:$0xf]
        %v2022 = vld [vmem:[%s1177 + $0x50] sm:$0xf]
        %v2023 = vld [vmem:[%s1177 + $0x54] sm:$0xf]
        %v2024 = vld [vmem:[%s1177 + $0x58] sm:$0xf]
        %v2025 = vld [vmem:[%s1177 + $0x5c] sm:$0xf]
        %v2026 = vld [vmem:[%s1177 + $0x60] sm:$0xf]
        %v2027 = vld [vmem:[%s1177 + $0x64] sm:$0xf]
        %v2028 = vld [vmem:[%s1177 + $0x68] sm:$0xf]
        %v2029 = vld [vmem:[%s1177 + $0x6c] sm:$0xf]
        %v2030 = vld [vmem:[%s1177 + $0x70] sm:$0xf]
        %v2031 = vld [vmem:[%s1177 + $0x74] sm:$0xf]
        %v2032 = vld [vmem:[%s1177 + $0x78] sm:$0xf]
        %v2033 = vld [vmem:[%s1177 + $0x7c] sm:$0xf]
        %v2034 = vld [vmem:[%s1355] sm:$0x1]
        %v2036 = vperm.slane %v2034, 0
        %v2070 = vunpack.c.l.b16 %v2002
        %v2071 = vunpack.c.l.b16 %v2003
        %v2072 = vunpack.c.l.b16 %v2004
        %v2073 = vunpack.c.l.b16 %v2005
        %v2074 = vunpack.c.l.b16 %v2006
        %v2075 = vunpack.c.l.b16 %v2007
        %v2076 = vunpack.c.l.b16 %v2008
        %v2077 = vunpack.c.l.b16 %v2009
        %v2078 = vunpack.c.l.b16 %v2010
        %v2079 = vunpack.c.l.b16 %v2011
        %v2080 = vunpack.c.l.b16 %v2012
        %v2081 = vunpack.c.l.b16 %v2013
        %v2082 = vunpack.c.l.b16 %v2014
        %v2083 = vunpack.c.l.b16 %v2015
        %v2084 = vunpack.c.l.b16 %v2016
        %v2085 = vunpack.c.l.b16 %v2017
        %v2086 = vunpack.c.l.b16 %v2018
        %v2087 = vunpack.c.l.b16 %v2019
        %v2088 = vunpack.c.l.b16 %v2020
        %v2089 = vunpack.c.l.b16 %v2021
        %v2090 = vunpack.c.l.b16 %v2022
        %v2091 = vunpack.c.l.b16 %v2023
        %v2092 = vunpack.c.l.b16 %v2024
        %v2093 = vunpack.c.l.b16 %v2025
        %v2094 = vunpack.c.l.b16 %v2026
        %v2095 = vunpack.c.l.b16 %v2027
        %v2096 = vunpack.c.l.b16 %v2028
        %v2097 = vunpack.c.l.b16 %v2029
        %v2098 = vunpack.c.l.b16 %v2030
        %v2099 = vunpack.c.l.b16 %v2031
        %v2100 = vunpack.c.l.b16 %v2032
        %v2101 = vunpack.c.l.b16 %v2033
        %v2102 = vpack.c.b16 %v2071, %v2070
        %v2103 = vpack.c.b16 %v2073, %v2072
        %v2104 = vpack.c.b16 %v2075, %v2074
        %v2105 = vpack.c.b16 %v2077, %v2076
        %v2106 = vpack.c.b16 %v2079, %v2078
        %v2107 = vpack.c.b16 %v2081, %v2080
        %v2108 = vpack.c.b16 %v2083, %v2082
        %v2109 = vpack.c.b16 %v2085, %v2084
        %v2110 = vpack.c.b16 %v2087, %v2086
        %v2111 = vpack.c.b16 %v2089, %v2088
        %v2112 = vpack.c.b16 %v2091, %v2090
        %v2113 = vpack.c.b16 %v2093, %v2092
        %v2114 = vpack.c.b16 %v2095, %v2094
        %v2115 = vpack.c.b16 %v2097, %v2096
        %v2116 = vpack.c.b16 %v2099, %v2098
        %v2117 = vpack.c.b16 %v2101, %v2100
        %2134 = vmatpush.bf16.msra.mxu0 %v2109
        %2135 = vmatpush.bf16.msra.mxu0 %v2108
        %2136 = vmatpush.bf16.msra.mxu0 %v2107
        %2137 = vmatpush.bf16.msra.mxu0 %v2106
        %2138 = vmatpush.bf16.msra.mxu0 %v2105
        %2139 = vmatpush.bf16.msra.mxu0 %v2104
        %2140 = vmatpush.bf16.msra.mxu0 %v2103
        %2141 = vmatpush.bf16.msra.mxu0 %v2102
        %2142 = vmatmul.bf16.gmra.mxu0 %v2000
        %v2143 = vpop.f32.mrf.mxu0
        %v2144 = vadd.f32 %v2036, %v2143
        %v2145 = vpop.f32.mrf.mxu0
        %2146 = vdwg.mxu0
        %2147 = vmatpush.bf16.msra.mxu0 %v2117
        %2148 = vmatpush.bf16.msra.mxu0 %v2116
        %2149 = vmatpush.bf16.msra.mxu0 %v2115
        %2150 = vmatpush.bf16.msra.mxu0 %v2114
        %2151 = vmatpush.bf16.msra.mxu0 %v2113
        %2152 = vmatpush.bf16.msra.mxu0 %v2112
        %2153 = vmatpush.bf16.msra.mxu0 %v2111
        %2154 = vmatpush.bf16.msra.mxu0 %v2110
        %2155 = vmatmul.bf16.gmra.mxu0 %v2001
        %v2156 = vpop.f32.mrf.mxu0
        %v2157 = vadd.f32 %v2144, %v2156
        %v2158 = vpop.f32.mrf.mxu0
        %2159 = vdwg.mxu0
        %v2160 = vadd.f32 %v1822, %v2157
        %2161 = vst [vmem:[#allocation2] sm:$0xff] %v2160
        %p2162 = scmp.eq.s32.totalorder %s69, 1
        // Predicated region
        $region201: #{llm_forward.1} parent=123 // pred_check
          %p2163 = pneg %p2162
        $region202: #{llm_forward.1} parent=123 // pred_check_branch
          %2165 = sbr.rel (%p2163) target = $region204
        $region203: #{llm_forward.1} parent=123 // pred_region
          %s2166 = sld [smem:[#allocation5]]
          %s2167 = scalar_lea.vmem [#allocation2], %s2166
          %v2168 = vld [vmem:[%s2167] sm:$0x1]
          %v2169 = vld [vmem:[%s20] sm:$0x1]
          %v2170 = vld [vmem:[#allocation24] sm:$0x1]
          %vm2171 = vcmask 1040384
          %v2172 = vsel %vm2171, %v2168, 0.0
          %2173 = vadd.xlane.f32.xlu0 %v2172
          %v2174 = vpop.xlane.xlu0 %2173
          %v2175 = vmul.f32 %v2174, %v1420
          %v2176 = vsub.f32 %v2168, %v2175
          %v2177 = vmul.f32 %v2176, %v2176
          %v2178 = vsel %vm2171, %v2177, 0.0
          %2179 = vadd.xlane.f32.xlu0 %v2178
          %v2180 = vpop.xlane.xlu0 %2179
          %v2181 = vmul.f32 %v2180, %v1420
          %v2182 = vadd.f32 %v2181, 1e-05
          %v2183 = vrsqrt.pop %v2182
          %v2184 = vmul.f32 %v2183, %v2182
          %v2185 = vmul.f32 %v2184, %v2183
          %v2186 = vmul.f32 0.5, %v2185
          %v2187 = vsub.f32 1.5, %v2186
          %v2188 = vmul.f32 %v2183, %v2187
          %vm2189 = vweird.f32 %v2182
          %vm2190 = vweird.f32 %v2183
          %vm2191 = vmor %vm2189, %vm2190
          %v2192 = vsel %vm2191, %v2183, %v2188
          %v2193 = vmul.f32 %v2176, %v2192
          %v2194 = vmul.f32 %v2193, %v2169
          %v2195 = vadd.f32 %v2194, %v2170
          %v2196 = vpack.c.bf16 %v2195, %v2195
          %v2197 = vld [vmem:[#allocation26] sm:$0xf]
          %v2198 = vld [vmem:[#allocation26 + $0x4] sm:$0xf]
          %v2199 = vld [vmem:[#allocation26 + $0x8] sm:$0xf]
          %v2200 = vld [vmem:[#allocation26 + $0xc] sm:$0xf]
          %v2201 = vld [vmem:[#allocation26 + $0x10] sm:$0xf]
          %v2202 = vld [vmem:[#allocation26 + $0x14] sm:$0xf]
          %v2203 = vld [vmem:[#allocation26 + $0x18] sm:$0xf]
          %v2204 = vld [vmem:[#allocation26 + $0x1c] sm:$0xf]
          %v2205 = vld [vmem:[#allocation26 + $0x20] sm:$0xf]
          %v2206 = vld [vmem:[#allocation26 + $0x24] sm:$0xf]
          %v2207 = vld [vmem:[#allocation26 + $0x28] sm:$0xf]
          %v2208 = vld [vmem:[#allocation26 + $0x2c] sm:$0xf]
          %v2209 = vld [vmem:[#allocation26 + $0x30] sm:$0xf]
          %v2210 = vld [vmem:[#allocation26 + $0x34] sm:$0xf]
          %v2211 = vld [vmem:[#allocation26 + $0x38] sm:$0xf]
          %v2212 = vld [vmem:[#allocation26 + $0x3c] sm:$0xf]
          %v2213 = vld [vmem:[#allocation27] sm:$0x1]
          %v2230 = vunpack.c.l.b16 %v2197
          %v2231 = vunpack.c.l.b16 %v2198
          %v2232 = vunpack.c.l.b16 %v2199
          %v2233 = vunpack.c.l.b16 %v2200
          %v2234 = vunpack.c.l.b16 %v2201
          %v2235 = vunpack.c.l.b16 %v2202
          %v2236 = vunpack.c.l.b16 %v2203
          %v2237 = vunpack.c.l.b16 %v2204
          %v2238 = vunpack.c.l.b16 %v2205
          %v2239 = vunpack.c.l.b16 %v2206
          %v2240 = vunpack.c.l.b16 %v2207
          %v2241 = vunpack.c.l.b16 %v2208
          %v2242 = vunpack.c.l.b16 %v2209
          %v2243 = vunpack.c.l.b16 %v2210
          %v2244 = vunpack.c.l.b16 %v2211
          %v2245 = vunpack.c.l.b16 %v2212
          %v2246 = vpack.c.b16 %v2231, %v2230
          %v2247 = vpack.c.b16 %v2233, %v2232
          %v2248 = vpack.c.b16 %v2235, %v2234
          %v2249 = vpack.c.b16 %v2237, %v2236
          %v2250 = vpack.c.b16 %v2239, %v2238
          %v2251 = vpack.c.b16 %v2241, %v2240
          %v2252 = vpack.c.b16 %v2243, %v2242
          %v2253 = vpack.c.b16 %v2245, %v2244
          %2262 = vmatpush.bf16.msra.mxu0 %v2253
          %2263 = vmatpush.bf16.msra.mxu0 %v2252
          %2264 = vmatpush.bf16.msra.mxu0 %v2251
          %2265 = vmatpush.bf16.msra.mxu0 %v2250
          %2266 = vmatpush.bf16.msra.mxu0 %v2249
          %2267 = vmatpush.bf16.msra.mxu0 %v2248
          %2268 = vmatpush.bf16.msra.mxu0 %v2247
          %2269 = vmatpush.bf16.msra.mxu0 %v2246
          %2270 = vmatmul.bf16.gmra.mxu0 %v2196
          %v2271 = vpop.f32.mrf.mxu0
          %v2272 = vadd.f32 %v2213, %v2271
          %v2273 = vpop.f32.mrf.mxu0
          %2274 = vdwg.mxu0
          %v2275 = vmul.f32 %v2272, %v2272
          %v2276 = vmul.f32 %v2272, %v2275
          %v2277 = vmul.f32 %v2276, 0.044715
          %v2278 = vadd.f32 %v2272, %v2277
          %v2279 = vmul.f32 %v2278, 0.7978846
          %v2280 = vtanh.pop %v2279
          %v2281 = vadd.f32 %v2280, 1.0
          %v2282 = vmul.f32 %v2281, 0.5
          %v2283 = vmul.f32 %v2272, %v2282
          %v2284 = vld [vmem:[#allocation29] sm:$0x1]
          %v2285 = vld [vmem:[#allocation30] sm:$0x1]
          %v2286 = vsel %vm2171, %v2283, 0.0
          %2287 = vadd.xlane.f32.xlu0 %v2286
          %v2288 = vpop.xlane.xlu0 %2287
          %v2289 = vmul.f32 %v2288, %v1420
          %v2290 = vsub.f32 %v2283, %v2289
          %v2291 = vmul.f32 %v2290, %v2290
          %v2292 = vsel %vm2171, %v2291, 0.0
          %2293 = vadd.xlane.f32.xlu0 %v2292
          %v2294 = vpop.xlane.xlu0 %2293
          %v2295 = vmul.f32 %v2294, %v1420
          %v2296 = vadd.f32 %v2295, 1e-05
          %v2297 = vrsqrt.pop %v2296
          %v2298 = vmul.f32 %v2297, %v2296
          %v2299 = vmul.f32 %v2298, %v2297
          %v2300 = vmul.f32 0.5, %v2299
          %v2301 = vsub.f32 1.5, %v2300
          %v2302 = vmul.f32 %v2297, %v2301
          %vm2303 = vweird.f32 %v2296
          %vm2304 = vweird.f32 %v2297
          %vm2305 = vmor %vm2303, %vm2304
          %v2306 = vsel %vm2305, %v2297, %v2302
          %v2307 = vmul.f32 %v2290, %v2306
          %v2308 = vmul.f32 %v2307, %v2284
          %v2309 = vadd.f32 %v2308, %v2285
          %v2310 = vpack.c.bf16 %v2309, %v2309
          %v2311 = vld [vmem:[#allocation32] sm:$0xff]
          %v2312 = vld [vmem:[#allocation32 + $0x8] sm:$0xff]
          %v2313 = vld [vmem:[#allocation32 + $0x10] sm:$0xff]
          %v2314 = vld [vmem:[#allocation32 + $0x18] sm:$0xff]
          %v2315 = vld [vmem:[#allocation32 + $0x20] sm:$0xff]
          %v2316 = vld [vmem:[#allocation32 + $0x28] sm:$0xff]
          %v2317 = vld [vmem:[#allocation32 + $0x30] sm:$0xff]
          %v2318 = vld [vmem:[#allocation32 + $0x38] sm:$0xff]
          %v2319 = vld [vmem:[#allocation32 + $0x40] sm:$0xff]
          %v2320 = vld [vmem:[#allocation32 + $0x48] sm:$0xff]
          %v2321 = vld [vmem:[#allocation32 + $0x50] sm:$0xff]
          %v2322 = vld [vmem:[#allocation32 + $0x58] sm:$0xff]
          %v2323 = vld [vmem:[#allocation32 + $0x60] sm:$0xff]
          %v2324 = vld [vmem:[#allocation32 + $0x68] sm:$0xff]
          %v2325 = vld [vmem:[#allocation32 + $0x70] sm:$0xff]
          %v2326 = vld [vmem:[#allocation32 + $0x78] sm:$0xff]
          %v2327 = vld [vmem:[#allocation33] sm:$0x3]
          %v2344 = vunpack.c.l.b16 %v2311
          %v2345 = vunpack.c.h.b16 %v2311
          %v2346 = vunpack.c.l.b16 %v2312
          %v2347 = vunpack.c.h.b16 %v2312
          %v2348 = vunpack.c.l.b16 %v2313
          %v2349 = vunpack.c.h.b16 %v2313
          %v2350 = vunpack.c.l.b16 %v2314
          %v2351 = vunpack.c.h.b16 %v2314
          %v2352 = vunpack.c.l.b16 %v2315
          %v2353 = vunpack.c.h.b16 %v2315
          %v2354 = vunpack.c.l.b16 %v2316
          %v2355 = vunpack.c.h.b16 %v2316
          %v2356 = vunpack.c.l.b16 %v2317
          %v2357 = vunpack.c.h.b16 %v2317
          %v2358 = vunpack.c.l.b16 %v2318
          %v2359 = vunpack.c.h.b16 %v2318
          %v2360 = vunpack.c.l.b16 %v2319
          %v2361 = vunpack.c.h.b16 %v2319
          %v2362 = vunpack.c.l.b16 %v2320
          %v2363 = vunpack.c.h.b16 %v2320
          %v2364 = vunpack.c.l.b16 %v2321
          %v2365 = vunpack.c.h.b16 %v2321
          %v2366 = vunpack.c.l.b16 %v2322
          %v2367 = vunpack.c.h.b16 %v2322
          %v2368 = vunpack.c.l.b16 %v2323
          %v2369 = vunpack.c.h.b16 %v2323
          %v2370 = vunpack.c.l.b16 %v2324
          %v2371 = vunpack.c.h.b16 %v2324
          %v2372 = vunpack.c.l.b16 %v2325
          %v2373 = vunpack.c.h.b16 %v2325
          %v2374 = vunpack.c.l.b16 %v2326
          %v2375 = vunpack.c.h.b16 %v2326
          %v2376 = vpack.c.b16 %v2346, %v2344
          %v2377 = vpack.c.b16 %v2347, %v2345
          %v2378 = vpack.c.b16 %v2350, %v2348
          %v2379 = vpack.c.b16 %v2351, %v2349
          %v2380 = vpack.c.b16 %v2354, %v2352
          %v2381 = vpack.c.b16 %v2355, %v2353
          %v2382 = vpack.c.b16 %v2358, %v2356
          %v2383 = vpack.c.b16 %v2359, %v2357
          %v2384 = vpack.c.b16 %v2362, %v2360
          %v2385 = vpack.c.b16 %v2363, %v2361
          %v2386 = vpack.c.b16 %v2366, %v2364
          %v2387 = vpack.c.b16 %v2367, %v2365
          %v2388 = vpack.c.b16 %v2370, %v2368
          %v2389 = vpack.c.b16 %v2371, %v2369
          %v2390 = vpack.c.b16 %v2374, %v2372
          %v2391 = vpack.c.b16 %v2375, %v2373
          %v2409 = vperm.slane %v2327, 0
          %v2410 = vperm.slane %v2327, 1
          %2413 = vmatpush.bf16.msra.mxu0 %v2390
          %2414 = vmatpush.bf16.msra.mxu0 %v2388
          %2415 = vmatpush.bf16.msra.mxu0 %v2386
          %2416 = vmatpush.bf16.msra.mxu0 %v2384
          %2417 = vmatpush.bf16.msra.mxu0 %v2382
          %2418 = vmatpush.bf16.msra.mxu0 %v2380
          %2419 = vmatpush.bf16.msra.mxu0 %v2378
          %2420 = vmatpush.bf16.msra.mxu0 %v2376
          %2421 = vmatmul.bf16.gmra.mxu0 %v2310
          %v2422 = vpop.f32.mrf.mxu0
          %v2423 = vadd.f32 %v2409, %v2422
          %v2424 = vpop.f32.mrf.mxu0
          %2425 = vdwg.mxu0
          %2426 = vmatpush.bf16.msra.mxu0 %v2391
          %2427 = vmatpush.bf16.msra.mxu0 %v2389
          %2428 = vmatpush.bf16.msra.mxu0 %v2387
          %2429 = vmatpush.bf16.msra.mxu0 %v2385
          %2430 = vmatpush.bf16.msra.mxu0 %v2383
          %2431 = vmatpush.bf16.msra.mxu0 %v2381
          %2432 = vmatpush.bf16.msra.mxu0 %v2379
          %2433 = vmatpush.bf16.msra.mxu0 %v2377
          %2434 = vmatmul.bf16.gmra.mxu0 %v2310
          %v2435 = vpop.f32.mrf.mxu0
          %v2436 = vadd.f32 %v2410, %v2435
          %v2437 = vpop.f32.mrf.mxu0
          %2438 = vdwg.mxu0
          %v2441 = vrot.slane %v2436, 7
          %v2442 = vsel %vm2171, %v2423, %v2441
          %v2444 = vlaneseq
          %vm2445 = vcmp.ge.s32.totalorder %v2444, 0
          %vm2446 = vcmp.lt.s32.totalorder %v2444, 256
          %vm2447 = vmand %vm2445, %vm2446
          %2448 = vst.msk [vmem:[#allocation35] sm:$0x3] %vm2447, %v2442
        $region204: #{llm_forward.1} parent=123 // pred_fallthru
          _
        // Predicated region
        $region205: #{llm_forward.1} parent=123 // pred_check
          %p2449 = pneg %p708
        $region206: #{llm_forward.1} parent=123 // pred_check_branch
          %2451 = sbr.rel (%p2449) target = $region208
        $region207: #{llm_forward.1} parent=123 // pred_region
          %2453 = vsyncadd [#allocation8], 0
          %s2455 = sshll.u32 [#allocation35], 4
          %s2456 = int_to_ptr.vmem [resolvable:$true] %s2455
          %s2457 = sshll.u32 %s28, 4
          %s2458 = int_to_ptr.hbm [resolvable:$true] %s2457
          %2460 = dma.vmem_to_hbm [thread:$0]  %s2456, 32, %s2458, [#allocation8]
        $region208: #{llm_forward.1} parent=123 // pred_fallthru
          _
        // Predicated region
        $region209: #{llm_forward.1} parent=123 // pred_check
          %p2461 = pneg %p708
        $region210: #{llm_forward.1} parent=123 // pred_check_branch
          %2463 = sbr.rel (%p2461) target = $region212
        $region211: #{llm_forward.1} parent=123 // pred_region
          %2465 = dma.done [#allocation8], 32
        $region212: #{llm_forward.1} parent=123 // pred_fallthru
          _
      $region124: #{llm_forward.1} parent=5 // pred_fallthru
        _
      %p2466 = scmp.le.s32.totalorder 2, %s64
      // Predicated region
      $region213: #{llm_forward.1} parent=5 // pred_check
        %p2467 = pneg %p2466
      $region214: #{llm_forward.1} parent=5 // pred_check_branch
        %2469 = sbr.rel (%p2467) target = $region216
      $region215: #{llm_forward.1} parent=5 // pred_region
        %s2470 = ssub.s32 %s64, 2
      $region216: #{llm_forward.1} parent=5 // pred_fallthru
        _
    $region6: #{llm_forward.1} parent=1 // loop_footer
      %s68 = sadd.s32 1, %s64
    $region7: #{llm_forward.1} parent=1 // loop_footer_branch
      %63 = sbr.rel target = $region3
    $region8: #{llm_forward.1} parent=1 // loop_exit
      _
    %2471 = vsyncpa [#allocation7], 1
    %s2472 = scalar_lea.sflag [#allocation7], 1
    %2473 = vsyncpa %s2472, 1
    %2474 = vsyncpa [#allocation10], 1
    %s2475 = scalar_lea.sflag [#allocation10], 1
    %2476 = vsyncpa %s2475, 1
    %2477 = vsyncpa [#allocation13], 1
    %s2478 = scalar_lea.sflag [#allocation13], 1
    %2479 = vsyncpa %s2478, 1
    %2480 = vsyncpa [#allocation16], 1
    %s2481 = scalar_lea.sflag [#allocation16], 1
    %2482 = vsyncpa %s2481, 1
    %2483 = vsyncpa [#allocation19], 1
    %s2484 = scalar_lea.sflag [#allocation19], 1
    %2485 = vsyncpa %s2484, 1
    %2486 = vsyncpa [#allocation22], 1
    %s2487 = scalar_lea.sflag [#allocation22], 1
    %2488 = vsyncpa %s2487, 1
    %2489 = vsyncpa [#allocation25], 1
    %2490 = vsyncpa [#allocation28], 1
    %2491 = vsyncpa [#allocation31], 1
    %2492 = vsyncpa [#allocation34], 1
    %2493 = vsyncpa [#allocation8], 1
    %s2494 = scalar_lea.sflag [#allocation8], 1
    %2495 = vsyncpa %s2494, 1

</llo_original>
